<compile_context>
chip_gen: v7x
topology: tpu7x:2x2x1
jax: 0.10.0
libtpu: 0.0.40
codegen_flags: <defaults>
</compile_context>

<pallas_src>
import functools

import numpy as np
import jax
import jax.numpy as jnp
from jax.experimental import pallas as pl
from jax.experimental.pallas import tpu as pltpu


# --------------------------------------------------------------------------
# Pallas kernel: fused 3x3 conv + per-channel affine (folded BN + bias) + ReLU
# --------------------------------------------------------------------------
def _conv3x3_kernel(x_ref, w_ref, sc_ref, sh_ref, o_ref, *,
                    H, W, apply_relu, row_chunk, b_tile):
    """One batch tile, channel-major layout.

    x_ref : (b_tile, Cin, FLAT)    reflect-padded input, FLAT = (H+3)*(W+2)
    w_ref : (9, Cout, Cin)         bf16 taps, tap index = 3*dy + dx
    sc_ref, sh_ref : (Cout, 1)     folded BN scale / shift (f32)
    o_ref : (b_tile, Cout, H*Wp2)  'wide' output; columns w >= W of each row
                                   are junk and are dropped in the wrapper.
    """
    Wp2 = W + 2
    cout = o_ref.shape[1]

    for bb in range(b_tile):
        for h0 in range(0, H, row_chunk):
            mw = row_chunk * Wp2
            base = h0 * Wp2
            acc = jnp.zeros((cout, mw), jnp.float32)
            # 9 shifted contiguous windows of the flat input -> 9 MXU matmuls,
            # fully reduced in registers (bf16 operands, f32 accumulation,
            # single store per chunk -- no grid reduction axis).
            for tap in range(9):
                dy, dx = divmod(tap, 3)
                off = base + dy * Wp2 + dx            # static offset
                patch = x_ref[bb, :, pl.ds(off, mw)].astype(jnp.bfloat16)
                acc = acc + jnp.dot(w_ref[tap], patch,
                                    preferred_element_type=jnp.float32)
            y = acc * sc_ref[...] + sh_ref[...]       # folded BN + conv bias
            if apply_relu:
                y = jnp.maximum(y, 0.0)
            o_ref[bb, :, pl.ds(base, mw)] = y.astype(o_ref.dtype)


def _pick_row_chunk(H, Wp2, cout):
    # Keep the f32 accumulator (plus one bf16 patch) comfortably inside the
    # vreg file: acc bytes <= 64 KiB  (~16 full vregs).
    best = 1
    for r in range(1, H + 1):
        if H % r == 0 and max(cout, 8) * r * Wp2 * 4 <= 64 * 1024:
            best = r
    return best


def _pick_batch_tile(B, H, Wp2):
    # Fold batch elements into one block when images are tiny, but keep at
    # least 2 grid blocks so both v7x TensorCores get work.
    best = 1
    for bt in range(1, B + 1):
        if B % bt == 0 and (B // bt) >= 2 and bt * H * Wp2 <= 2048:
            best = bt
    return best


def conv3x3_affine_relu(x_flat, w9, scale, shift, *, H, W, apply_relu, out_dtype):
    """x_flat: (B, Cin, (H+3)*(W+2)) reflect-padded NCHW input flattened over
    space (one slack row so every tap window stays in-bounds).
    w9: (9, Cout, Cin) bf16.  scale/shift: (Cout, 1) f32.
    Returns the 'wide' conv output (B, Cout, H, W+2); columns >= W are junk."""
    B, Cin, FLAT = x_flat.shape
    Wp2 = W + 2
    assert FLAT == (H + 3) * Wp2
    Cout = w9.shape[1]

    b_tile = _pick_batch_tile(B, H, Wp2)
    row_chunk = _pick_row_chunk(H, Wp2, Cout)
    wide = H * Wp2

    kernel = functools.partial(_conv3x3_kernel, H=H, W=W, apply_relu=apply_relu,
                               row_chunk=row_chunk, b_tile=b_tile)

    # Per-block VMEM (double-buffered in/out + weights) is tiny at these
    # shapes; scale the limit with the block size but keep it <= 48 MiB so it
    # is safe on v7x (64 MiB physical) as well as v5e/v6e.
    bytes_in = b_tile * Cin * FLAT * np.dtype(x_flat.dtype).itemsize
    bytes_out = b_tile * Cout * wide * np.dtype(out_dtype).itemsize
    bytes_w = 9 * Cout * max(Cin, 16) * 2
    vmem_limit = int(min(max(4 * (bytes_in + bytes_out + bytes_w),
                             32 * 1024 * 1024),
                         48 * 1024 * 1024))

    out = pl.pallas_call(
        kernel,
        out_shape=jax.ShapeDtypeStruct((B, Cout, wide), out_dtype),
        grid_spec=pltpu.PrefetchScalarGridSpec(
            num_scalar_prefetch=0,
            grid=(B // b_tile,),
            in_specs=[
                pl.BlockSpec((b_tile, Cin, FLAT), lambda b: (b, 0, 0)),
                pl.BlockSpec((9, Cout, Cin), lambda b: (0, 0, 0)),
                pl.BlockSpec((Cout, 1), lambda b: (0, 0)),
                pl.BlockSpec((Cout, 1), lambda b: (0, 0)),
            ],
            out_specs=pl.BlockSpec((b_tile, Cout, wide), lambda b: (b, 0, 0)),
        ),
        compiler_params=pltpu.CompilerParams(
            dimension_semantics=("parallel",),        # megacore / v7x sharding
            vmem_limit_bytes=vmem_limit,
        ),
    )(x_flat, w9, scale, shift)
    return out.reshape(B, Cout, H, Wp2)


# --------------------------------------------------------------------------
# Per-block wrappers (Pallas path and pure-JAX reference path)
# --------------------------------------------------------------------------
def conv_block_pallas(x, p, *, apply_relu, out_dtype):
    # x: (B, C, H, W) NCHW
    B, Cin, H, W = x.shape
    # Reflect pad 1 on every spatial edge plus ONE extra slack row at the
    # bottom so the dy=dx=2 flat window never reads past the buffer (VMEM OOB
    # is unchecked); slack values never reach a valid output column.
    x_pad = jnp.pad(x, ((0, 0), (0, 0), (1, 2), (1, 1)), mode="reflect")
    x_flat = x_pad.reshape(B, Cin, (H + 3) * (W + 2))          # free reshape
    wide = conv3x3_affine_relu(x_flat, p["w9"], p["scale"], p["shift"],
                               H=H, W=W, apply_relu=apply_relu,
                               out_dtype=out_dtype)
    # Drop the two junk columns of each row; under jit XLA fuses this slice
    # with the next layer's reflect pad (or the final copy).
    return wide[:, :, :, :W]


def conv_block_ref(x, p, *, apply_relu, out_dtype):
    B, Cin, H, W = x.shape
    Cout = p["w9"].shape[1]
    x_pad = jnp.pad(x, ((0, 0), (0, 0), (1, 1), (1, 1)), mode="reflect")
    w_oihw = jnp.transpose(p["w9"].reshape(3, 3, Cout, Cin), (2, 3, 0, 1))
    y = jax.lax.conv_general_dilated(
        x_pad.astype(jnp.bfloat16), w_oihw, window_strides=(1, 1),
        padding="VALID", dimension_numbers=("NCHW", "OIHW", "NCHW"),
        preferred_element_type=jnp.float32)
    y = y * p["scale"].reshape(1, Cout, 1, 1) + p["shift"].reshape(1, Cout, 1, 1)
    if apply_relu:
        y = jnp.maximum(y, 0.0)
    return y.astype(out_dtype)


# --------------------------------------------------------------------------
# Parameter construction + ConvLayer forward
# --------------------------------------------------------------------------
def _init_params(nkernels, key, norm, eps=1e-5):
    params = []
    for i in range(len(nkernels) - 1):
        cin, cout = nkernels[i], nkernels[i + 1]
        key, kw, kb, kg, kbe, km, kv = jax.random.split(key, 7)
        w = jax.random.normal(kw, (3, 3, cin, cout), jnp.float32) / jnp.sqrt(9.0 * cin)
        bias = 0.1 * jax.random.normal(kb, (cout,), jnp.float32)
        if norm == "batch":
            gamma = 1.0 + 0.1 * jax.random.normal(kg, (cout,), jnp.float32)
            beta = 0.1 * jax.random.normal(kbe, (cout,), jnp.float32)
            r_mean = 0.1 * jax.random.normal(km, (cout,), jnp.float32)
            r_var = jnp.abs(1.0 + 0.1 * jax.random.normal(kv, (cout,), jnp.float32))
            scale = gamma / jnp.sqrt(r_var + eps)
            shift = (bias - r_mean) * scale + beta
        elif norm in ("instance", "group"):
            raise NotImplementedError(
                "TODO(synk): instance/group norm need per-sample statistics")
        else:  # no normalization
            scale = jnp.ones((cout,), jnp.float32)
            shift = bias
        # Kernel-friendly weight layout: (tap = 3*dy + dx, Cout, Cin), bf16.
        w9 = jnp.transpose(w.reshape(9, cin, cout), (0, 2, 1)).astype(jnp.bfloat16)
        params.append({"w9": w9,
                       "scale": scale.reshape(cout, 1),
                       "shift": shift.reshape(cout, 1)})
    return params


class ConvLayer:
    """JAX/Pallas re-implementation of ConvLayer.forward (inference-mode BN)."""

    def __init__(self, nkernels, norm="batch", k=3, s=1, p=1, n_groups=4,
                 last_relu=True, padding_mode="reflect", *, key):
        if (k, s, p) != (3, 1, 1) or padding_mode != "reflect":
            raise NotImplementedError("kernel specialised for k=3, s=1, p=1, reflect pad")
        del n_groups  # only used by group norm (not implemented)
        self.last_relu = last_relu
        self.params = _init_params(nkernels, key, norm)

    def __call__(self, x, use_pallas=True):
        # x: (B, C, H, W) NCHW -- kept channel-major end to end (channels on
        # sublanes, flattened space on lanes) so no NCHW<->NHWC transposes.
        n = len(self.params)
        block = conv_block_pallas if use_pallas else conv_block_ref
        y = x
        for i, p in enumerate(self.params):
            relu_i = self.last_relu or (i < n - 1)
            # bf16 intermediates halve HBM traffic between blocks; the final
            # block emits f32 to match the module's output dtype.
            out_dtype = jnp.float32 if i == n - 1 else jnp.bfloat16
            y = block(y, p, apply_relu=relu_i, out_dtype=out_dtype)
        return y


# --------------------------------------------------------------------------
if __name__ == "__main__":
    key = jax.random.PRNGKey(0)
    B, H, W = 2, 16, 16
    nkernels = [4, 32, 32]                    # in=4 channels, hidden/out=32

    k_p1, k_p2, k_x = jax.random.split(key, 3)
    x = jax.random.normal(k_x, (B, nkernels[0], H, W), jnp.float32)

    configs = [
        dict(norm="batch", last_relu=True, key=k_p1),
        dict(norm=None, last_relu=False, key=k_p2),
    ]
    for cfg in configs:
        layer = ConvLayer(nkernels, **cfg)
        out = jax.jit(lambda a: layer(a))(x)
        jax.block_until_ready(out)
        ref = layer(x, use_pallas=False)
        assert out.shape == (B, nkernels[-1], H, W), (cfg, out.shape)
        err = jnp.max(jnp.abs(out - ref))
        # Both paths use bf16 matmul operands / bf16 intermediates with f32
        # accumulation; residual mismatch comes only from accumulation order
        # and rare divergent bf16 rounding of an intermediate activation.
        assert jnp.allclose(out, ref, atol=5e-3, rtol=5e-3), (cfg, float(err))

    print("KERNEL_OK")
</pallas_src>

<mosaic_0001>
module attributes {stable_mosaic.version = 11 : i64} {
  func.func @_conv3x3_kernel(%arg0: i32, %arg1: memref<1x4x342xf32, #tpu.memory_space<vmem>>, %arg2: memref<9x32x4xbf16, #tpu.memory_space<vmem>>, %arg3: memref<32x1xf32, #tpu.memory_space<vmem>>, %arg4: memref<32x1xf32, #tpu.memory_space<vmem>>, %arg5: memref<1x32x288xbf16, #tpu.memory_space<vmem>>) attributes {dimension_semantics = [#tpu.dimension_semantics<parallel>], iteration_bounds = array<i64: 2>, scalar_prefetch = 0 : i64, scratch_operands = 0 : i64, tpu.core_type = #tpu.core_type<tc>, window_params = [{transform_indices = @transform_0, window_bounds = array<i64: 1, 4, 342>}, {pipeline_mode = #tpu.pipeline_mode<synchronous>, transform_indices = @transform_1, window_bounds = array<i64: 9, 32, 4>}, {pipeline_mode = #tpu.pipeline_mode<synchronous>, transform_indices = @transform_2, window_bounds = array<i64: 32, 1>}, {pipeline_mode = #tpu.pipeline_mode<synchronous>, transform_indices = @transform_3, window_bounds = array<i64: 32, 1>}, {transform_indices = @transform_4, window_bounds = array<i64: 1, 32, 288>}]} {
    %cst = arith.constant 0.000000e+00 : f32
    %0 = vector.broadcast %cst : f32 to vector<32x288xf32>
    %c0 = arith.constant 0 : index
    %c0_0 = arith.constant 0 : index
    %c0_1 = arith.constant 0 : index
    %1 = vector.load %arg1[%c0, %c0_0, %c0_1] : memref<1x4x342xf32, #tpu.memory_space<vmem>>, vector<1x4x288xf32>
    %2 = vector.shape_cast %1 : vector<1x4x288xf32> to vector<4x288xf32>
    %3 = arith.truncf %2 : vector<4x288xf32> to vector<4x288xbf16>
    %c0_2 = arith.constant 0 : index
    %c0_3 = arith.constant 0 : index
    %c0_4 = arith.constant 0 : index
    %4 = vector.load %arg2[%c0_2, %c0_3, %c0_4] : memref<9x32x4xbf16, #tpu.memory_space<vmem>>, vector<1x32x4xbf16>
    %5 = vector.shape_cast %4 : vector<1x32x4xbf16> to vector<32x4xbf16>
    %cst_5 = arith.constant dense<0.000000e+00> : vector<32x288xf32>
    %6 = tpu.matmul %5, %3, %cst_5 {dimension_numbers = #tpu.dot_dimension_numbers<[1], [0], [0], [1], [0, 0, 1, 1], [], []>} : vector<32x4xbf16>, vector<4x288xbf16>, vector<32x288xf32> -> vector<32x288xf32>
    %7 = arith.addf %0, %6 : vector<32x288xf32>
    %c0_6 = arith.constant 0 : index
    %c0_7 = arith.constant 0 : index
    %c1 = arith.constant 1 : index
    %8 = vector.load %arg1[%c0_6, %c0_7, %c1] : memref<1x4x342xf32, #tpu.memory_space<vmem>>, vector<1x4x288xf32>
    %9 = vector.shape_cast %8 : vector<1x4x288xf32> to vector<4x288xf32>
    %10 = arith.truncf %9 : vector<4x288xf32> to vector<4x288xbf16>
    %c1_8 = arith.constant 1 : index
    %c0_9 = arith.constant 0 : index
    %c0_10 = arith.constant 0 : index
    %11 = vector.load %arg2[%c1_8, %c0_9, %c0_10] : memref<9x32x4xbf16, #tpu.memory_space<vmem>>, vector<1x32x4xbf16>
    %12 = vector.shape_cast %11 : vector<1x32x4xbf16> to vector<32x4xbf16>
    %cst_11 = arith.constant dense<0.000000e+00> : vector<32x288xf32>
    %13 = tpu.matmul %12, %10, %cst_11 {dimension_numbers = #tpu.dot_dimension_numbers<[1], [0], [0], [1], [0, 0, 1, 1], [], []>} : vector<32x4xbf16>, vector<4x288xbf16>, vector<32x288xf32> -> vector<32x288xf32>
    %14 = arith.addf %7, %13 : vector<32x288xf32>
    %c0_12 = arith.constant 0 : index
    %c0_13 = arith.constant 0 : index
    %c2 = arith.constant 2 : index
    %15 = vector.load %arg1[%c0_12, %c0_13, %c2] : memref<1x4x342xf32, #tpu.memory_space<vmem>>, vector<1x4x288xf32>
    %16 = vector.shape_cast %15 : vector<1x4x288xf32> to vector<4x288xf32>
    %17 = arith.truncf %16 : vector<4x288xf32> to vector<4x288xbf16>
    %c2_14 = arith.constant 2 : index
    %c0_15 = arith.constant 0 : index
    %c0_16 = arith.constant 0 : index
    %18 = vector.load %arg2[%c2_14, %c0_15, %c0_16] : memref<9x32x4xbf16, #tpu.memory_space<vmem>>, vector<1x32x4xbf16>
    %19 = vector.shape_cast %18 : vector<1x32x4xbf16> to vector<32x4xbf16>
    %cst_17 = arith.constant dense<0.000000e+00> : vector<32x288xf32>
    %20 = tpu.matmul %19, %17, %cst_17 {dimension_numbers = #tpu.dot_dimension_numbers<[1], [0], [0], [1], [0, 0, 1, 1], [], []>} : vector<32x4xbf16>, vector<4x288xbf16>, vector<32x288xf32> -> vector<32x288xf32>
    %21 = arith.addf %14, %20 : vector<32x288xf32>
    %c0_18 = arith.constant 0 : index
    %c0_19 = arith.constant 0 : index
    %c18 = arith.constant 18 : index
    %22 = vector.load %arg1[%c0_18, %c0_19, %c18] : memref<1x4x342xf32, #tpu.memory_space<vmem>>, vector<1x4x288xf32>
    %23 = vector.shape_cast %22 : vector<1x4x288xf32> to vector<4x288xf32>
    %24 = arith.truncf %23 : vector<4x288xf32> to vector<4x288xbf16>
    %c3 = arith.constant 3 : index
    %c0_20 = arith.constant 0 : index
    %c0_21 = arith.constant 0 : index
    %25 = vector.load %arg2[%c3, %c0_20, %c0_21] : memref<9x32x4xbf16, #tpu.memory_space<vmem>>, vector<1x32x4xbf16>
    %26 = vector.shape_cast %25 : vector<1x32x4xbf16> to vector<32x4xbf16>
    %cst_22 = arith.constant dense<0.000000e+00> : vector<32x288xf32>
    %27 = tpu.matmul %26, %24, %cst_22 {dimension_numbers = #tpu.dot_dimension_numbers<[1], [0], [0], [1], [0, 0, 1, 1], [], []>} : vector<32x4xbf16>, vector<4x288xbf16>, vector<32x288xf32> -> vector<32x288xf32>
    %28 = arith.addf %21, %27 : vector<32x288xf32>
    %c0_23 = arith.constant 0 : index
    %c0_24 = arith.constant 0 : index
    %c19 = arith.constant 19 : index
    %29 = vector.load %arg1[%c0_23, %c0_24, %c19] : memref<1x4x342xf32, #tpu.memory_space<vmem>>, vector<1x4x288xf32>
    %30 = vector.shape_cast %29 : vector<1x4x288xf32> to vector<4x288xf32>
    %31 = arith.truncf %30 : vector<4x288xf32> to vector<4x288xbf16>
    %c4 = arith.constant 4 : index
    %c0_25 = arith.constant 0 : index
    %c0_26 = arith.constant 0 : index
    %32 = vector.load %arg2[%c4, %c0_25, %c0_26] : memref<9x32x4xbf16, #tpu.memory_space<vmem>>, vector<1x32x4xbf16>
    %33 = vector.shape_cast %32 : vector<1x32x4xbf16> to vector<32x4xbf16>
    %cst_27 = arith.constant dense<0.000000e+00> : vector<32x288xf32>
    %34 = tpu.matmul %33, %31, %cst_27 {dimension_numbers = #tpu.dot_dimension_numbers<[1], [0], [0], [1], [0, 0, 1, 1], [], []>} : vector<32x4xbf16>, vector<4x288xbf16>, vector<32x288xf32> -> vector<32x288xf32>
    %35 = arith.addf %28, %34 : vector<32x288xf32>
    %c0_28 = arith.constant 0 : index
    %c0_29 = arith.constant 0 : index
    %c20 = arith.constant 20 : index
    %36 = vector.load %arg1[%c0_28, %c0_29, %c20] : memref<1x4x342xf32, #tpu.memory_space<vmem>>, vector<1x4x288xf32>
    %37 = vector.shape_cast %36 : vector<1x4x288xf32> to vector<4x288xf32>
    %38 = arith.truncf %37 : vector<4x288xf32> to vector<4x288xbf16>
    %c5 = arith.constant 5 : index
    %c0_30 = arith.constant 0 : index
    %c0_31 = arith.constant 0 : index
    %39 = vector.load %arg2[%c5, %c0_30, %c0_31] : memref<9x32x4xbf16, #tpu.memory_space<vmem>>, vector<1x32x4xbf16>
    %40 = vector.shape_cast %39 : vector<1x32x4xbf16> to vector<32x4xbf16>
    %cst_32 = arith.constant dense<0.000000e+00> : vector<32x288xf32>
    %41 = tpu.matmul %40, %38, %cst_32 {dimension_numbers = #tpu.dot_dimension_numbers<[1], [0], [0], [1], [0, 0, 1, 1], [], []>} : vector<32x4xbf16>, vector<4x288xbf16>, vector<32x288xf32> -> vector<32x288xf32>
    %42 = arith.addf %35, %41 : vector<32x288xf32>
    %c0_33 = arith.constant 0 : index
    %c0_34 = arith.constant 0 : index
    %c36 = arith.constant 36 : index
    %43 = vector.load %arg1[%c0_33, %c0_34, %c36] : memref<1x4x342xf32, #tpu.memory_space<vmem>>, vector<1x4x288xf32>
    %44 = vector.shape_cast %43 : vector<1x4x288xf32> to vector<4x288xf32>
    %45 = arith.truncf %44 : vector<4x288xf32> to vector<4x288xbf16>
    %c6 = arith.constant 6 : index
    %c0_35 = arith.constant 0 : index
    %c0_36 = arith.constant 0 : index
    %46 = vector.load %arg2[%c6, %c0_35, %c0_36] : memref<9x32x4xbf16, #tpu.memory_space<vmem>>, vector<1x32x4xbf16>
    %47 = vector.shape_cast %46 : vector<1x32x4xbf16> to vector<32x4xbf16>
    %cst_37 = arith.constant dense<0.000000e+00> : vector<32x288xf32>
    %48 = tpu.matmul %47, %45, %cst_37 {dimension_numbers = #tpu.dot_dimension_numbers<[1], [0], [0], [1], [0, 0, 1, 1], [], []>} : vector<32x4xbf16>, vector<4x288xbf16>, vector<32x288xf32> -> vector<32x288xf32>
    %49 = arith.addf %42, %48 : vector<32x288xf32>
    %c0_38 = arith.constant 0 : index
    %c0_39 = arith.constant 0 : index
    %c37 = arith.constant 37 : index
    %50 = vector.load %arg1[%c0_38, %c0_39, %c37] : memref<1x4x342xf32, #tpu.memory_space<vmem>>, vector<1x4x288xf32>
    %51 = vector.shape_cast %50 : vector<1x4x288xf32> to vector<4x288xf32>
    %52 = arith.truncf %51 : vector<4x288xf32> to vector<4x288xbf16>
    %c7 = arith.constant 7 : index
    %c0_40 = arith.constant 0 : index
    %c0_41 = arith.constant 0 : index
    %53 = vector.load %arg2[%c7, %c0_40, %c0_41] : memref<9x32x4xbf16, #tpu.memory_space<vmem>>, vector<1x32x4xbf16>
    %54 = vector.shape_cast %53 : vector<1x32x4xbf16> to vector<32x4xbf16>
    %cst_42 = arith.constant dense<0.000000e+00> : vector<32x288xf32>
    %55 = tpu.matmul %54, %52, %cst_42 {dimension_numbers = #tpu.dot_dimension_numbers<[1], [0], [0], [1], [0, 0, 1, 1], [], []>} : vector<32x4xbf16>, vector<4x288xbf16>, vector<32x288xf32> -> vector<32x288xf32>
    %56 = arith.addf %49, %55 : vector<32x288xf32>
    %c0_43 = arith.constant 0 : index
    %c0_44 = arith.constant 0 : index
    %c38 = arith.constant 38 : index
    %57 = vector.load %arg1[%c0_43, %c0_44, %c38] : memref<1x4x342xf32, #tpu.memory_space<vmem>>, vector<1x4x288xf32>
    %58 = vector.shape_cast %57 : vector<1x4x288xf32> to vector<4x288xf32>
    %59 = arith.truncf %58 : vector<4x288xf32> to vector<4x288xbf16>
    %c8 = arith.constant 8 : index
    %c0_45 = arith.constant 0 : index
    %c0_46 = arith.constant 0 : index
    %60 = vector.load %arg2[%c8, %c0_45, %c0_46] : memref<9x32x4xbf16, #tpu.memory_space<vmem>>, vector<1x32x4xbf16>
    %61 = vector.shape_cast %60 : vector<1x32x4xbf16> to vector<32x4xbf16>
    %cst_47 = arith.constant dense<0.000000e+00> : vector<32x288xf32>
    %62 = tpu.matmul %61, %59, %cst_47 {dimension_numbers = #tpu.dot_dimension_numbers<[1], [0], [0], [1], [0, 0, 1, 1], [], []>} : vector<32x4xbf16>, vector<4x288xbf16>, vector<32x288xf32> -> vector<32x288xf32>
    %63 = arith.addf %56, %62 : vector<32x288xf32>
    %c0_48 = arith.constant 0 : index
    %c0_49 = arith.constant 0 : index
    %64 = vector.load %arg3[%c0_48, %c0_49] : memref<32x1xf32, #tpu.memory_space<vmem>>, vector<32x1xf32>
    %65 = vector.broadcast %64 : vector<32x1xf32> to vector<32x288xf32>
    %66 = arith.mulf %63, %65 : vector<32x288xf32>
    %c0_50 = arith.constant 0 : index
    %c0_51 = arith.constant 0 : index
    %67 = vector.load %arg4[%c0_50, %c0_51] : memref<32x1xf32, #tpu.memory_space<vmem>>, vector<32x1xf32>
    %68 = vector.broadcast %67 : vector<32x1xf32> to vector<32x288xf32>
    %69 = arith.addf %66, %68 : vector<32x288xf32>
    %cst_52 = arith.constant 0.000000e+00 : f32
    %70 = vector.broadcast %cst_52 : f32 to vector<32x288xf32>
    %71 = arith.maximumf %69, %70 : vector<32x288xf32>
    %72 = arith.truncf %71 : vector<32x288xf32> to vector<32x288xbf16>
    %c0_53 = arith.constant 0 : index
    %c0_54 = arith.constant 0 : index
    %c0_55 = arith.constant 0 : index
    %73 = vector.load %arg5[%c0_53, %c0_54, %c0_55] : memref<1x32x288xbf16, #tpu.memory_space<vmem>>, vector<1x32x288xbf16>
    %74 = vector.shape_cast %73 : vector<1x32x288xbf16> to vector<32x288xbf16>
    %75 = vector.shape_cast %72 : vector<32x288xbf16> to vector<1x32x288xbf16>
    tpu.vector_store %arg5[%c0_53, %c0_54, %c0_55], %75 {strides = array<i32>} : memref<1x32x288xbf16, #tpu.memory_space<vmem>>, vector<1x32x288xbf16>,
    return
  }
  func.func @transform_0(%arg0: i32) -> (i32, i32, i32) {
    %c0_i32 = arith.constant 0 : i32
    %c0_i32_0 = arith.constant 0 : i32
    %c0_i32_1 = arith.constant 0 : i32
    return %arg0, %c0_i32, %c0_i32_0 : i32, i32, i32
  }
  func.func @transform_1(%arg0: i32) -> (i32, i32, i32) {
    %c0_i32 = arith.constant 0 : i32
    %c0_i32_0 = arith.constant 0 : i32
    %c0_i32_1 = arith.constant 0 : i32
    %c0_i32_2 = arith.constant 0 : i32
    return %c0_i32, %c0_i32_0, %c0_i32_1 : i32, i32, i32
  }
  func.func @transform_2(%arg0: i32) -> (i32, i32) {
    %c0_i32 = arith.constant 0 : i32
    %c0_i32_0 = arith.constant 0 : i32
    %c0_i32_1 = arith.constant 0 : i32
    return %c0_i32, %c0_i32_0 : i32, i32
  }
  func.func @transform_3(%arg0: i32) -> (i32, i32) {
    %c0_i32 = arith.constant 0 : i32
    %c0_i32_0 = arith.constant 0 : i32
    %c0_i32_1 = arith.constant 0 : i32
    return %c0_i32, %c0_i32_0 : i32, i32
  }
  func.func @transform_4(%arg0: i32) -> (i32, i32, i32) {
    %c0_i32 = arith.constant 0 : i32
    %c0_i32_0 = arith.constant 0 : i32
    %c0_i32_1 = arith.constant 0 : i32
    return %arg0, %c0_i32, %c0_i32_0 : i32, i32, i32
  }
}

module attributes {stable_mosaic.version = 11 : i64} {
  func.func @_conv3x3_kernel(%arg0: i32, %arg1: memref<1x32x342xbf16, #tpu.memory_space<vmem>>, %arg2: memref<9x32x32xbf16, #tpu.memory_space<vmem>>, %arg3: memref<32x1xf32, #tpu.memory_space<vmem>>, %arg4: memref<32x1xf32, #tpu.memory_space<vmem>>, %arg5: memref<1x32x288xf32, #tpu.memory_space<vmem>>) attributes {dimension_semantics = [#tpu.dimension_semantics<parallel>], iteration_bounds = array<i64: 2>, scalar_prefetch = 0 : i64, scratch_operands = 0 : i64, tpu.core_type = #tpu.core_type<tc>, window_params = [{transform_indices = @transform_0, window_bounds = array<i64: 1, 32, 342>}, {pipeline_mode = #tpu.pipeline_mode<synchronous>, transform_indices = @transform_1, window_bounds = array<i64: 9, 32, 32>}, {pipeline_mode = #tpu.pipeline_mode<synchronous>, transform_indices = @transform_2, window_bounds = array<i64: 32, 1>}, {pipeline_mode = #tpu.pipeline_mode<synchronous>, transform_indices = @transform_3, window_bounds = array<i64: 32, 1>}, {transform_indices = @transform_4, window_bounds = array<i64: 1, 32, 288>}]} {
    %cst = arith.constant 0.000000e+00 : f32
    %0 = vector.broadcast %cst : f32 to vector<32x288xf32>
    %c0 = arith.constant 0 : index
    %c0_0 = arith.constant 0 : index
    %c0_1 = arith.constant 0 : index
    %1 = vector.load %arg1[%c0, %c0_0, %c0_1] : memref<1x32x342xbf16, #tpu.memory_space<vmem>>, vector<1x32x288xbf16>
    %2 = vector.shape_cast %1 : vector<1x32x288xbf16> to vector<32x288xbf16>
    %c0_2 = arith.constant 0 : index
    %c0_3 = arith.constant 0 : index
    %c0_4 = arith.constant 0 : index
    %3 = vector.load %arg2[%c0_2, %c0_3, %c0_4] : memref<9x32x32xbf16, #tpu.memory_space<vmem>>, vector<1x32x32xbf16>
    %4 = vector.shape_cast %3 : vector<1x32x32xbf16> to vector<32x32xbf16>
    %cst_5 = arith.constant dense<0.000000e+00> : vector<32x288xf32>
    %5 = tpu.matmul %4, %2, %cst_5 {dimension_numbers = #tpu.dot_dimension_numbers<[1], [0], [0], [1], [0, 0, 1, 1], [], []>} : vector<32x32xbf16>, vector<32x288xbf16>, vector<32x288xf32> -> vector<32x288xf32>
    %6 = arith.addf %0, %5 : vector<32x288xf32>
    %c0_6 = arith.constant 0 : index
    %c0_7 = arith.constant 0 : index
    %c1 = arith.constant 1 : index
    %7 = vector.load %arg1[%c0_6, %c0_7, %c1] : memref<1x32x342xbf16, #tpu.memory_space<vmem>>, vector<1x32x288xbf16>
    %8 = vector.shape_cast %7 : vector<1x32x288xbf16> to vector<32x288xbf16>
    %c1_8 = arith.constant 1 : index
    %c0_9 = arith.constant 0 : index
    %c0_10 = arith.constant 0 : index
    %9 = vector.load %arg2[%c1_8, %c0_9, %c0_10] : memref<9x32x32xbf16, #tpu.memory_space<vmem>>, vector<1x32x32xbf16>
    %10 = vector.shape_cast %9 : vector<1x32x32xbf16> to vector<32x32xbf16>
    %cst_11 = arith.constant dense<0.000000e+00> : vector<32x288xf32>
    %11 = tpu.matmul %10, %8, %cst_11 {dimension_numbers = #tpu.dot_dimension_numbers<[1], [0], [0], [1], [0, 0, 1, 1], [], []>} : vector<32x32xbf16>, vector<32x288xbf16>, vector<32x288xf32> -> vector<32x288xf32>
    %12 = arith.addf %6, %11 : vector<32x288xf32>
    %c0_12 = arith.constant 0 : index
    %c0_13 = arith.constant 0 : index
    %c2 = arith.constant 2 : index
    %13 = vector.load %arg1[%c0_12, %c0_13, %c2] : memref<1x32x342xbf16, #tpu.memory_space<vmem>>, vector<1x32x288xbf16>
    %14 = vector.shape_cast %13 : vector<1x32x288xbf16> to vector<32x288xbf16>
    %c2_14 = arith.constant 2 : index
    %c0_15 = arith.constant 0 : index
    %c0_16 = arith.constant 0 : index
    %15 = vector.load %arg2[%c2_14, %c0_15, %c0_16] : memref<9x32x32xbf16, #tpu.memory_space<vmem>>, vector<1x32x32xbf16>
    %16 = vector.shape_cast %15 : vector<1x32x32xbf16> to vector<32x32xbf16>
    %cst_17 = arith.constant dense<0.000000e+00> : vector<32x288xf32>
    %17 = tpu.matmul %16, %14, %cst_17 {dimension_numbers = #tpu.dot_dimension_numbers<[1], [0], [0], [1], [0, 0, 1, 1], [], []>} : vector<32x32xbf16>, vector<32x288xbf16>, vector<32x288xf32> -> vector<32x288xf32>
    %18 = arith.addf %12, %17 : vector<32x288xf32>
    %c0_18 = arith.constant 0 : index
    %c0_19 = arith.constant 0 : index
    %c18 = arith.constant 18 : index
    %19 = vector.load %arg1[%c0_18, %c0_19, %c18] : memref<1x32x342xbf16, #tpu.memory_space<vmem>>, vector<1x32x288xbf16>
    %20 = vector.shape_cast %19 : vector<1x32x288xbf16> to vector<32x288xbf16>
    %c3 = arith.constant 3 : index
    %c0_20 = arith.constant 0 : index
    %c0_21 = arith.constant 0 : index
    %21 = vector.load %arg2[%c3, %c0_20, %c0_21] : memref<9x32x32xbf16, #tpu.memory_space<vmem>>, vector<1x32x32xbf16>
    %22 = vector.shape_cast %21 : vector<1x32x32xbf16> to vector<32x32xbf16>
    %cst_22 = arith.constant dense<0.000000e+00> : vector<32x288xf32>
    %23 = tpu.matmul %22, %20, %cst_22 {dimension_numbers = #tpu.dot_dimension_numbers<[1], [0], [0], [1], [0, 0, 1, 1], [], []>} : vector<32x32xbf16>, vector<32x288xbf16>, vector<32x288xf32> -> vector<32x288xf32>
    %24 = arith.addf %18, %23 : vector<32x288xf32>
    %c0_23 = arith.constant 0 : index
    %c0_24 = arith.constant 0 : index
    %c19 = arith.constant 19 : index
    %25 = vector.load %arg1[%c0_23, %c0_24, %c19] : memref<1x32x342xbf16, #tpu.memory_space<vmem>>, vector<1x32x288xbf16>
    %26 = vector.shape_cast %25 : vector<1x32x288xbf16> to vector<32x288xbf16>
    %c4 = arith.constant 4 : index
    %c0_25 = arith.constant 0 : index
    %c0_26 = arith.constant 0 : index
    %27 = vector.load %arg2[%c4, %c0_25, %c0_26] : memref<9x32x32xbf16, #tpu.memory_space<vmem>>, vector<1x32x32xbf16>
    %28 = vector.shape_cast %27 : vector<1x32x32xbf16> to vector<32x32xbf16>
    %cst_27 = arith.constant dense<0.000000e+00> : vector<32x288xf32>
    %29 = tpu.matmul %28, %26, %cst_27 {dimension_numbers = #tpu.dot_dimension_numbers<[1], [0], [0], [1], [0, 0, 1, 1], [], []>} : vector<32x32xbf16>, vector<32x288xbf16>, vector<32x288xf32> -> vector<32x288xf32>
    %30 = arith.addf %24, %29 : vector<32x288xf32>
    %c0_28 = arith.constant 0 : index
    %c0_29 = arith.constant 0 : index
    %c20 = arith.constant 20 : index
    %31 = vector.load %arg1[%c0_28, %c0_29, %c20] : memref<1x32x342xbf16, #tpu.memory_space<vmem>>, vector<1x32x288xbf16>
    %32 = vector.shape_cast %31 : vector<1x32x288xbf16> to vector<32x288xbf16>
    %c5 = arith.constant 5 : index
    %c0_30 = arith.constant 0 : index
    %c0_31 = arith.constant 0 : index
    %33 = vector.load %arg2[%c5, %c0_30, %c0_31] : memref<9x32x32xbf16, #tpu.memory_space<vmem>>, vector<1x32x32xbf16>
    %34 = vector.shape_cast %33 : vector<1x32x32xbf16> to vector<32x32xbf16>
    %cst_32 = arith.constant dense<0.000000e+00> : vector<32x288xf32>
    %35 = tpu.matmul %34, %32, %cst_32 {dimension_numbers = #tpu.dot_dimension_numbers<[1], [0], [0], [1], [0, 0, 1, 1], [], []>} : vector<32x32xbf16>, vector<32x288xbf16>, vector<32x288xf32> -> vector<32x288xf32>
    %36 = arith.addf %30, %35 : vector<32x288xf32>
    %c0_33 = arith.constant 0 : index
    %c0_34 = arith.constant 0 : index
    %c36 = arith.constant 36 : index
    %37 = vector.load %arg1[%c0_33, %c0_34, %c36] : memref<1x32x342xbf16, #tpu.memory_space<vmem>>, vector<1x32x288xbf16>
    %38 = vector.shape_cast %37 : vector<1x32x288xbf16> to vector<32x288xbf16>
    %c6 = arith.constant 6 : index
    %c0_35 = arith.constant 0 : index
    %c0_36 = arith.constant 0 : index
    %39 = vector.load %arg2[%c6, %c0_35, %c0_36] : memref<9x32x32xbf16, #tpu.memory_space<vmem>>, vector<1x32x32xbf16>
    %40 = vector.shape_cast %39 : vector<1x32x32xbf16> to vector<32x32xbf16>
    %cst_37 = arith.constant dense<0.000000e+00> : vector<32x288xf32>
    %41 = tpu.matmul %40, %38, %cst_37 {dimension_numbers = #tpu.dot_dimension_numbers<[1], [0], [0], [1], [0, 0, 1, 1], [], []>} : vector<32x32xbf16>, vector<32x288xbf16>, vector<32x288xf32> -> vector<32x288xf32>
    %42 = arith.addf %36, %41 : vector<32x288xf32>
    %c0_38 = arith.constant 0 : index
    %c0_39 = arith.constant 0 : index
    %c37 = arith.constant 37 : index
    %43 = vector.load %arg1[%c0_38, %c0_39, %c37] : memref<1x32x342xbf16, #tpu.memory_space<vmem>>, vector<1x32x288xbf16>
    %44 = vector.shape_cast %43 : vector<1x32x288xbf16> to vector<32x288xbf16>
    %c7 = arith.constant 7 : index
    %c0_40 = arith.constant 0 : index
    %c0_41 = arith.constant 0 : index
    %45 = vector.load %arg2[%c7, %c0_40, %c0_41] : memref<9x32x32xbf16, #tpu.memory_space<vmem>>, vector<1x32x32xbf16>
    %46 = vector.shape_cast %45 : vector<1x32x32xbf16> to vector<32x32xbf16>
    %cst_42 = arith.constant dense<0.000000e+00> : vector<32x288xf32>
    %47 = tpu.matmul %46, %44, %cst_42 {dimension_numbers = #tpu.dot_dimension_numbers<[1], [0], [0], [1], [0, 0, 1, 1], [], []>} : vector<32x32xbf16>, vector<32x288xbf16>, vector<32x288xf32> -> vector<32x288xf32>
    %48 = arith.addf %42, %47 : vector<32x288xf32>
    %c0_43 = arith.constant 0 : index
    %c0_44 = arith.constant 0 : index
    %c38 = arith.constant 38 : index
    %49 = vector.load %arg1[%c0_43, %c0_44, %c38] : memref<1x32x342xbf16, #tpu.memory_space<vmem>>, vector<1x32x288xbf16>
    %50 = vector.shape_cast %49 : vector<1x32x288xbf16> to vector<32x288xbf16>
    %c8 = arith.constant 8 : index
    %c0_45 = arith.constant 0 : index
    %c0_46 = arith.constant 0 : index
    %51 = vector.load %arg2[%c8, %c0_45, %c0_46] : memref<9x32x32xbf16, #tpu.memory_space<vmem>>, vector<1x32x32xbf16>
    %52 = vector.shape_cast %51 : vector<1x32x32xbf16> to vector<32x32xbf16>
    %cst_47 = arith.constant dense<0.000000e+00> : vector<32x288xf32>
    %53 = tpu.matmul %52, %50, %cst_47 {dimension_numbers = #tpu.dot_dimension_numbers<[1], [0], [0], [1], [0, 0, 1, 1], [], []>} : vector<32x32xbf16>, vector<32x288xbf16>, vector<32x288xf32> -> vector<32x288xf32>
    %54 = arith.addf %48, %53 : vector<32x288xf32>
    %c0_48 = arith.constant 0 : index
    %c0_49 = arith.constant 0 : index
    %55 = vector.load %arg3[%c0_48, %c0_49] : memref<32x1xf32, #tpu.memory_space<vmem>>, vector<32x1xf32>
    %56 = vector.broadcast %55 : vector<32x1xf32> to vector<32x288xf32>
    %57 = arith.mulf %54, %56 : vector<32x288xf32>
    %c0_50 = arith.constant 0 : index
    %c0_51 = arith.constant 0 : index
    %58 = vector.load %arg4[%c0_50, %c0_51] : memref<32x1xf32, #tpu.memory_space<vmem>>, vector<32x1xf32>
    %59 = vector.broadcast %58 : vector<32x1xf32> to vector<32x288xf32>
    %60 = arith.addf %57, %59 : vector<32x288xf32>
    %cst_52 = arith.constant 0.000000e+00 : f32
    %61 = vector.broadcast %cst_52 : f32 to vector<32x288xf32>
    %62 = arith.maximumf %60, %61 : vector<32x288xf32>
    %c0_53 = arith.constant 0 : index
    %c0_54 = arith.constant 0 : index
    %c0_55 = arith.constant 0 : index
    %63 = vector.load %arg5[%c0_53, %c0_54, %c0_55] : memref<1x32x288xf32, #tpu.memory_space<vmem>>, vector<1x32x288xf32>
    %64 = vector.shape_cast %63 : vector<1x32x288xf32> to vector<32x288xf32>
    %65 = vector.shape_cast %62 : vector<32x288xf32> to vector<1x32x288xf32>
    tpu.vector_store %arg5[%c0_53, %c0_54, %c0_55], %65 {strides = array<i32>} : memref<1x32x288xf32, #tpu.memory_space<vmem>>, vector<1x32x288xf32>,
    return
  }
  func.func @transform_0(%arg0: i32) -> (i32, i32, i32) {
    %c0_i32 = arith.constant 0 : i32
    %c0_i32_0 = arith.constant 0 : i32
    %c0_i32_1 = arith.constant 0 : i32
    return %arg0, %c0_i32, %c0_i32_0 : i32, i32, i32
  }
  func.func @transform_1(%arg0: i32) -> (i32, i32, i32) {
    %c0_i32 = arith.constant 0 : i32
    %c0_i32_0 = arith.constant 0 : i32
    %c0_i32_1 = arith.constant 0 : i32
    %c0_i32_2 = arith.constant 0 : i32
    return %c0_i32, %c0_i32_0, %c0_i32_1 : i32, i32, i32
  }
  func.func @transform_2(%arg0: i32) -> (i32, i32) {
    %c0_i32 = arith.constant 0 : i32
    %c0_i32_0 = arith.constant 0 : i32
    %c0_i32_1 = arith.constant 0 : i32
    return %c0_i32, %c0_i32_0 : i32, i32
  }
  func.func @transform_3(%arg0: i32) -> (i32, i32) {
    %c0_i32 = arith.constant 0 : i32
    %c0_i32_0 = arith.constant 0 : i32
    %c0_i32_1 = arith.constant 0 : i32
    return %c0_i32, %c0_i32_0 : i32, i32
  }
  func.func @transform_4(%arg0: i32) -> (i32, i32, i32) {
    %c0_i32 = arith.constant 0 : i32
    %c0_i32_0 = arith.constant 0 : i32
    %c0_i32_1 = arith.constant 0 : i32
    return %arg0, %c0_i32, %c0_i32_0 : i32, i32, i32
  }
}

</mosaic_0001>

<llo_original>
// kernel: _lambda_.2
$region0: #{_lambda_.2}
  #allocation0 [shape = 'u32[]', space=smem, size = 0x4, offset = 0x4, fixed_abs, tag = 'smem constant byte address 0x4 - core index']
  #allocation1 [shape = 'u32[144,128]{1,0:T(1,128)}', space=vmem, size = 0x12000, scoped, tag = 'internal scratch']
  %s0 = inlined_call_operand.vmem [shape: f32[2,4,342], index: 0, kind: input, shape index: {}]
  %s1 = inlined_call_operand.vmem [shape: bf16[9,32,4], index: 1, kind: input, shape index: {}]
  %s2 = inlined_call_operand.vmem [shape: f32[32,1], index: 2, kind: input, shape index: {}]
  %s3 = inlined_call_operand.vmem [shape: f32[32,1], index: 3, kind: input, shape index: {}]
  %s4 = inlined_call_operand.vmem [shape: bf16[2,32,288], index: 4, kind: output, shape index: {}]
  %s5 = sld [smem:[#allocation0]]
  $region49: #{_lambda_.2} parent=0
    _
  %s7 = ssub.s32 1, %s5
  %s8 = scalar_select 0, %s7, %s5
  loop: start=0, step=1, limit=4
  $region2: #{_lambda_.2} parent=0 // loop_pre_header
    _
  $region3: #{_lambda_.2} parent=0 // loop_header
    %s10 = sphi 0, %s14
    %p11 = scmp.ge.s32.totalorder %s10, 4
    %s20 = sphi 0, %s22
    %s23 = sphi 0, %s20
    %s24 = sphi 0, %s23
    %s40 = sphi 0, %s24
    %s44 = sphi 0, %s44
    %s46 = sphi 0, %s44
    %s47 = sphi 0, %s46
    %s61 = sphi 0, %s47
    %s65 = sphi 0, %s65
    %s67 = sphi 0, %s65
    %s68 = sphi 0, %s67
    %s82 = sphi 0, %s68
    %s86 = sphi 0, %s86
    %s88 = sphi 0, %s86
    %s89 = sphi 0, %s88
    %s103 = sphi 0, %s89
    %s109 = sphi 0, %s111
    %s112 = sphi 0, %s109
    %s113 = sphi 0, %s112
    %s129 = sphi 0, %s113
  $region4: #{_lambda_.2} parent=0 // loop_header_branch
    %13 = sbr.rel (%p11) target = $region8
  $region5: #{_lambda_.2} parent=0 // loop_body
    %s15 = ssub.s32 %s10, 1
    %s16 = ssub.s32 %s10, 2
    %s17 = sadd.s32 %s10, 1
    %s18 = ssub.s32 %s10, %s17
    %p19 = scmp.eq.s32.totalorder %s18, 0
    %s21 = sadd.s32 %s20, 1
    %s22 = scalar_select %p19, %s20, %s21
    %p25 = pneg %p19
    %p26 = scmp.eq.s32.totalorder %s10, 1
    %p27 = por %p25, %p26
    %p28 = scmp.ne.s32.totalorder %s20, %s23
    %p29 = scmp.eq.s32.totalorder %s10, 0
    %p30 = por %p28, %p29
    %p31 = scmp.ne.s32.totalorder %s20, %s23
    %p32 = scmp.eq.s32.totalorder %s15, 1
    %p33 = por %p31, %p32
    %p34 = scmp.ne.s32.totalorder %s23, %s24
    %p35 = scmp.eq.s32.totalorder %s15, 0
    %p36 = por %p34, %p35
    %p37 = scmp.ne.s32.totalorder %s23, %s24
    %p38 = scmp.eq.s32.totalorder %s16, 1
    %p39 = por %p37, %p38
    %p41 = scmp.ne.s32.totalorder %s24, %s40
    %p42 = scmp.eq.s32.totalorder %s16, 0
    %p43 = por %p41, %p42
    %s45 = sadd.s32 %s44, 1
    %p48 = scmp.eq.s32.totalorder %s10, 1
    %p49 = scmp.ne.s32.totalorder %s44, %s46
    %p50 = scmp.eq.s32.totalorder %s10, 0
    %p51 = por %p49, %p50
    %p52 = scmp.ne.s32.totalorder %s44, %s46
    %p53 = scmp.eq.s32.totalorder %s15, 1
    %p54 = por %p52, %p53
    %p55 = scmp.ne.s32.totalorder %s46, %s47
    %p56 = scmp.eq.s32.totalorder %s15, 0
    %p57 = por %p55, %p56
    %p58 = scmp.ne.s32.totalorder %s46, %s47
    %p59 = scmp.eq.s32.totalorder %s16, 1
    %p60 = por %p58, %p59
    %p62 = scmp.ne.s32.totalorder %s47, %s61
    %p63 = scmp.eq.s32.totalorder %s16, 0
    %p64 = por %p62, %p63
    %s66 = sadd.s32 %s65, 1
    %p69 = scmp.eq.s32.totalorder %s10, 1
    %p70 = scmp.ne.s32.totalorder %s65, %s67
    %p71 = scmp.eq.s32.totalorder %s10, 0
    %p72 = por %p70, %p71
    %p73 = scmp.ne.s32.totalorder %s65, %s67
    %p74 = scmp.eq.s32.totalorder %s15, 1
    %p75 = por %p73, %p74
    %p76 = scmp.ne.s32.totalorder %s67, %s68
    %p77 = scmp.eq.s32.totalorder %s15, 0
    %p78 = por %p76, %p77
    %p79 = scmp.ne.s32.totalorder %s67, %s68
    %p80 = scmp.eq.s32.totalorder %s16, 1
    %p81 = por %p79, %p80
    %p83 = scmp.ne.s32.totalorder %s68, %s82
    %p84 = scmp.eq.s32.totalorder %s16, 0
    %p85 = por %p83, %p84
    %s87 = sadd.s32 %s86, 1
    %p90 = scmp.eq.s32.totalorder %s10, 1
    %p91 = scmp.ne.s32.totalorder %s86, %s88
    %p92 = scmp.eq.s32.totalorder %s10, 0
    %p93 = por %p91, %p92
    %p94 = scmp.ne.s32.totalorder %s86, %s88
    %p95 = scmp.eq.s32.totalorder %s15, 1
    %p96 = por %p94, %p95
    %p97 = scmp.ne.s32.totalorder %s88, %s89
    %p98 = scmp.eq.s32.totalorder %s15, 0
    %p99 = por %p97, %p98
    %p100 = scmp.ne.s32.totalorder %s88, %s89
    %p101 = scmp.eq.s32.totalorder %s16, 1
    %p102 = por %p100, %p101
    %p104 = scmp.ne.s32.totalorder %s89, %s103
    %p105 = scmp.eq.s32.totalorder %s16, 0
    %p106 = por %p104, %p105
    %s107 = ssub.s32 %s10, %s17
    %p108 = scmp.eq.s32.totalorder %s107, 0
    %s110 = sadd.s32 %s109, 1
    %s111 = scalar_select %p108, %s109, %s110
    %p114 = pneg %p108
    %p115 = scmp.eq.s32.totalorder %s10, 1
    %p116 = por %p114, %p115
    %p117 = scmp.ne.s32.totalorder %s109, %s112
    %p118 = scmp.eq.s32.totalorder %s10, 0
    %p119 = por %p117, %p118
    %p120 = scmp.ne.s32.totalorder %s109, %s112
    %p121 = scmp.eq.s32.totalorder %s15, 1
    %p122 = por %p120, %p121
    %p123 = scmp.ne.s32.totalorder %s112, %s113
    %p124 = scmp.eq.s32.totalorder %s15, 0
    %p125 = por %p123, %p124
    %p126 = scmp.ne.s32.totalorder %s112, %s113
    %p127 = scmp.eq.s32.totalorder %s16, 1
    %p128 = por %p126, %p127
    %p130 = scmp.ne.s32.totalorder %s113, %s129
    %p131 = scmp.eq.s32.totalorder %s16, 0
    %p132 = por %p130, %p131
    %p133 = scmp.le.s32.totalorder 1, %s10
    %p134 = scmp.lt.s32.totalorder %s10, 3
    %p135 = pnand %p133, %p134
    %p136 = pneg %p135
    // Predicated region
    $region9: #{_lambda_.2} parent=5 // pred_check
      _
    $region10: #{_lambda_.2} parent=5 // pred_check_branch
      %138 = sbr.rel (%p135) target = $region12
    $region11: #{_lambda_.2} parent=5 // pred_region
      %s139 = ssub.s32 %s10, 1
      // Predicated region
      $region13: #{_lambda_.2} parent=11 // pred_check
        %p140 = pneg %p57
      $region14: #{_lambda_.2} parent=11 // pred_check_branch
        %142 = sbr.rel (%p140) target = $region16
      $region15: #{_lambda_.2} parent=11 // pred_region
        _
      $region16: #{_lambda_.2} parent=11 // pred_fallthru
        _
      // Predicated region
      $region17: #{_lambda_.2} parent=11 // pred_check
        %p143 = pneg %p78
      $region18: #{_lambda_.2} parent=11 // pred_check_branch
        %145 = sbr.rel (%p143) target = $region20
      $region19: #{_lambda_.2} parent=11 // pred_region
        _
      $region20: #{_lambda_.2} parent=11 // pred_fallthru
        _
      // Predicated region
      $region21: #{_lambda_.2} parent=11 // pred_check
        %p146 = pneg %p99
      $region22: #{_lambda_.2} parent=11 // pred_check_branch
        %148 = sbr.rel (%p146) target = $region24
      $region23: #{_lambda_.2} parent=11 // pred_region
        _
      $region24: #{_lambda_.2} parent=11 // pred_fallthru
        _
    $region12: #{_lambda_.2} parent=5 // pred_fallthru
      _
    %p149 = scmp.lt.s32.totalorder %s10, 2
    // Predicated region
    $region25: #{_lambda_.2} parent=5 // pred_check
      %p150 = pneg %p149
    $region26: #{_lambda_.2} parent=5 // pred_check_branch
      %152 = sbr.rel (%p150) target = $region28
    $region27: #{_lambda_.2} parent=5 // pred_region
      // Predicated region
      $region29: #{_lambda_.2} parent=27 // pred_check
        %p153 = pneg %p30
      $region30: #{_lambda_.2} parent=27 // pred_check_branch
        %155 = sbr.rel (%p153) target = $region32
      $region31: #{_lambda_.2} parent=27 // pred_region
        %p156 = scmp.lt.s32.totalorder %s10, 1
        %s157 = scalar_select %p156, %s10, 1
        %s158 = smul.addr %s157, 3
        %s159 = smul.addr %s158, 4
        %s160 = scalar_lea.vmem %s0, %s159
      $region32: #{_lambda_.2} parent=27 // pred_fallthru
        _
    $region28: #{_lambda_.2} parent=5 // pred_fallthru
      _
    %p161 = scmp.le.s32.totalorder 1, %s10
    %p162 = scmp.lt.s32.totalorder %s10, 3
    %p163 = pnand %p161, %p162
    %p164 = pneg %p163
    // Predicated region
    $region33: #{_lambda_.2} parent=5 // pred_check
      _
    $region34: #{_lambda_.2} parent=5 // pred_check_branch
      %166 = sbr.rel (%p163) target = $region36
    $region35: #{_lambda_.2} parent=5 // pred_region
      %s167 = ssub.s32 %s10, 1
      %p168 = scmp.lt.s32.totalorder %s15, 1
      %s169 = scalar_select %p168, %s15, 1
      %s170 = smul.addr %s169, 3
      %s171 = smul.addr %s170, 4
      %s172 = scalar_lea.vmem %s0, %s171
      %p173 = pneg %p36
      %p174 = pneg %p33
      %p175 = pneg %p57
      %p176 = pneg %p54
      %p177 = pneg %p78
      %p178 = pneg %p75
      %p179 = pneg %p99
      %p180 = pneg %p96
      %p181 = pneg %p125
      %p182 = pneg %p122
      %p183 = scmp.lt.s32.totalorder %s15, 1
      %s184 = scalar_select %p183, %s15, 1
      %s185 = smul.addr %s184, 12
      %s186 = smul.addr %s185, 4
      %s187 = scalar_lea.vmem %s4, %s186
      %p188 = scmp.lt.s32.totalorder %s15, 1
      %s189 = scalar_select %p188, %s15, 1
      %s190 = smul.addr %s189, 3
      %s191 = smul.addr %s190, 4
      %s192 = scalar_lea.vmem %s0, %s191
      %p193 = scmp.lt.s32.totalorder %s15, 1
      %s194 = scalar_select %p193, %s15, 1
      %s195 = smul.addr %s194, 12
      %s196 = smul.addr %s195, 4
      %s197 = scalar_lea.vmem %s4, %s196
      %v199 = vld [vmem:[%s192] sm:$0xff]
      %v200 = vld [vmem:[%s192 + $0x8] sm:$0xf]
      %v202 = vcombine.high %v199, %v199
      %v204 = vpack.c.bf16 %v199, %v199
      %v205 = vpack.c.bf16 %v202, %v202
      %v206 = vpack.c.bf16 %v200, %v200
      %v207 = vld [vmem:[%s1] sm:$0xf]
      %v208 = vld [vmem:[%s1 + $0x4] sm:$0xf]
      %v209 = vld [vmem:[%s1 + $0x8] sm:$0xf]
      %v210 = vld [vmem:[%s1 + $0xc] sm:$0xf]
      %s211 = scalar_lea.vmem %s1, 16
      %v212 = vld [vmem:[%s211] sm:$0xf]
      %v213 = vld [vmem:[%s211 + $0x4] sm:$0xf]
      %v214 = vld [vmem:[%s211 + $0x8] sm:$0xf]
      %v215 = vld [vmem:[%s211 + $0xc] sm:$0xf]
      %v220 = vunpack.c.l.b16 %v212
      %v221 = vunpack.c.l.b16 %v213
      %v222 = vunpack.c.l.b16 %v214
      %v223 = vunpack.c.l.b16 %v215
      %v224 = vpack.c.b16 %v221, %v220
      %v225 = vpack.c.b16 %v223, %v222
      %229 = vrot.lane.b32.xlu0 %v204, 127
      %v230 = vpop.permute.xlu0 %229
      %231 = vrot.lane.b32.xlu0 %v205, 127
      %v232 = vpop.permute.xlu0 %231
      %233 = vrot.lane.b32.xlu0 %v206, 127
      %v234 = vpop.permute.xlu0 %233
      %vm235 = vcmask 1039360
      %v236 = vsel %vm235, %v230, %v232
      %v237 = vsel %vm235, %v232, %v234
      %vm238 = vcmask 31744
      %v240 = vsel %vm238, %v224, 0
      %v243 = vsel %vm238, %v225, 0
      %vm245 = vcmask 1041408
      %v247 = vsel %vm245, %v236, 0
      %v250 = vsel %vm245, %v237, 0
      %v253 = vsel %vm245, %v234, 0
      %255 = vmatprep.subr.bf16.mxu0 %v250
      %256 = vmatpush1.bf16.msra.mxu0 %v247
      %257 = vmatprep.subr.bf16.mxu0 0
      %258 = vmatpush1.bf16.msra.mxu0 0
      %259 = vmatprep.subr.bf16.mxu0 0
      %260 = vmatpush1.bf16.msra.mxu0 0
      %261 = vmatprep.subr.bf16.mxu0 0
      %262 = vmatpush1.bf16.msra.mxu0 0
      %263 = vmatprep.subr.bf16.mxu0 0
      %264 = vmatpush1.bf16.msra.mxu0 0
      %265 = vmatprep.subr.bf16.mxu0 0
      %266 = vmatpush1.bf16.msra.mxu0 0
      %267 = vmatprep.subr.bf16.mxu0 0
      %268 = vmatpush1.bf16.msra.mxu0 0
      %269 = vmatprep.subr.bf16.mxu0 0
      %270 = vmatpush1.bf16.msra.mxu0 0
      %271 = vmatprep.subr.bf16.mxu0 0
      %272 = vmatpush1.bf16.msra.mxu0 0
      %273 = vmatprep.subr.bf16.mxu0 0
      %274 = vmatpush1.bf16.msra.mxu0 0
      %275 = vmatprep.subr.bf16.mxu0 0
      %276 = vmatpush1.bf16.msra.mxu0 0
      %277 = vmatprep.subr.bf16.mxu0 0
      %278 = vmatpush1.bf16.msra.mxu0 0
      %279 = vmatprep.subr.bf16.mxu0 0
      %280 = vmatpush1.bf16.msra.mxu0 0
      %281 = vmatprep.subr.bf16.mxu0 0
      %282 = vmatpush1.bf16.msra.mxu0 0
      %283 = vmatprep.subr.bf16.mxu0 0
      %284 = vmatpush1.bf16.msra.mxu0 0
      %285 = vmatprep.subr.bf16.mxu0 0
      %286 = vmatpush1.bf16.msra.mxu0 0
      %287 = vmatprep.mubr.bf16.mxu0 0
      %288 = vmatmul.mubr.bf16.gmra.mrb[0].mxu0 %v240
      %v289 = vpop.f32.mrb[0].mxu0
      %v290 = vadd.f32 0.0, %v289
      %v291 = vpop.f32.mrb[0].mxu0
      %v292 = vadd.f32 0.0, %v291
      %v293 = vpop.f32.mrb[0].mxu0
      %v294 = vadd.f32 0.0, %v293
      %v295 = vpop.f32.mrb[0].mxu0
      %v296 = vadd.f32 0.0, %v295
      %297 = vmatprep.mubr.bf16.mxu0 0
      %298 = vmatmul.mubr.bf16.gmra.mrb[0].mxu0 %v243
      %v299 = vpop.f32.mrb[0].mxu0
      %v300 = vadd.f32 0.0, %v299
      %v301 = vpop.f32.mrb[0].mxu0
      %v302 = vadd.f32 0.0, %v301
      %v303 = vpop.f32.mrb[0].mxu0
      %v304 = vadd.f32 0.0, %v303
      %v305 = vpop.f32.mrb[0].mxu0
      %v306 = vadd.f32 0.0, %v305
      %307 = vdwg.mxu0
      %308 = vmatprep.subr.bf16.mxu0 0
      %309 = vmatpush1.bf16.msra.mxu0 %v253
      %310 = vmatprep.subr.bf16.mxu0 0
      %311 = vmatpush1.bf16.msra.mxu0 0
      %312 = vmatprep.subr.bf16.mxu0 0
      %313 = vmatpush1.bf16.msra.mxu0 0
      %314 = vmatprep.subr.bf16.mxu0 0
      %315 = vmatpush1.bf16.msra.mxu0 0
      %316 = vmatprep.subr.bf16.mxu0 0
      %317 = vmatpush1.bf16.msra.mxu0 0
      %318 = vmatprep.subr.bf16.mxu0 0
      %319 = vmatpush1.bf16.msra.mxu0 0
      %320 = vmatprep.subr.bf16.mxu0 0
      %321 = vmatpush1.bf16.msra.mxu0 0
      %322 = vmatprep.subr.bf16.mxu0 0
      %323 = vmatpush1.bf16.msra.mxu0 0
      %324 = vmatprep.subr.bf16.mxu0 0
      %325 = vmatpush1.bf16.msra.mxu0 0
      %326 = vmatprep.subr.bf16.mxu0 0
      %327 = vmatpush1.bf16.msra.mxu0 0
      %328 = vmatprep.subr.bf16.mxu0 0
      %329 = vmatpush1.bf16.msra.mxu0 0
      %330 = vmatprep.subr.bf16.mxu0 0
      %331 = vmatpush1.bf16.msra.mxu0 0
      %332 = vmatprep.subr.bf16.mxu0 0
      %333 = vmatpush1.bf16.msra.mxu0 0
      %334 = vmatprep.subr.bf16.mxu0 0
      %335 = vmatpush1.bf16.msra.mxu0 0
      %336 = vmatprep.subr.bf16.mxu0 0
      %337 = vmatpush1.bf16.msra.mxu0 0
      %338 = vmatprep.subr.bf16.mxu0 0
      %339 = vmatpush1.bf16.msra.mxu0 0
      %340 = vmatprep.mubr.bf16.mxu0 0
      %341 = vmatmul.mubr.bf16.gmra.mrb[0].mxu0 %v240
      %v342 = vpop.f32.mrb[0].mxu0
      %v343 = vadd.f32 0.0, %v342
      %v344 = vpop.f32.mrb[0].mxu0
      %v345 = vpop.f32.mrb[0].mxu0
      %v346 = vadd.f32 0.0, %v345
      %v347 = vpop.f32.mrb[0].mxu0
      %348 = vmatprep.mubr.bf16.mxu0 0
      %349 = vmatmul.mubr.bf16.gmra.mrb[0].mxu0 %v243
      %v350 = vpop.f32.mrb[0].mxu0
      %v351 = vadd.f32 0.0, %v350
      %v352 = vpop.f32.mrb[0].mxu0
      %v353 = vpop.f32.mrb[0].mxu0
      %v354 = vadd.f32 0.0, %v353
      %v355 = vpop.f32.mrb[0].mxu0
      %356 = vdwg.mxu0
      %v361 = vunpack.c.l.b16 %v207
      %v362 = vunpack.c.l.b16 %v208
      %v363 = vunpack.c.l.b16 %v209
      %v364 = vunpack.c.l.b16 %v210
      %v365 = vpack.c.b16 %v362, %v361
      %v366 = vpack.c.b16 %v364, %v363
      %v368 = vsel %vm238, %v365, 0
      %v371 = vsel %vm238, %v366, 0
      %v374 = vsel %vm245, %v204, 0
      %v377 = vsel %vm245, %v205, 0
      %v380 = vsel %vm245, %v206, 0
      %382 = vmatprep.subr.bf16.mxu0 %v377
      %383 = vmatpush1.bf16.msra.mxu0 %v374
      %384 = vmatprep.subr.bf16.mxu0 0
      %385 = vmatpush1.bf16.msra.mxu0 0
      %386 = vmatprep.subr.bf16.mxu0 0
      %387 = vmatpush1.bf16.msra.mxu0 0
      %388 = vmatprep.subr.bf16.mxu0 0
      %389 = vmatpush1.bf16.msra.mxu0 0
      %390 = vmatprep.subr.bf16.mxu0 0
      %391 = vmatpush1.bf16.msra.mxu0 0
      %392 = vmatprep.subr.bf16.mxu0 0
      %393 = vmatpush1.bf16.msra.mxu0 0
      %394 = vmatprep.subr.bf16.mxu0 0
      %395 = vmatpush1.bf16.msra.mxu0 0
      %396 = vmatprep.subr.bf16.mxu0 0
      %397 = vmatpush1.bf16.msra.mxu0 0
      %398 = vmatprep.subr.bf16.mxu0 0
      %399 = vmatpush1.bf16.msra.mxu0 0
      %400 = vmatprep.subr.bf16.mxu0 0
      %401 = vmatpush1.bf16.msra.mxu0 0
      %402 = vmatprep.subr.bf16.mxu0 0
      %403 = vmatpush1.bf16.msra.mxu0 0
      %404 = vmatprep.subr.bf16.mxu0 0
      %405 = vmatpush1.bf16.msra.mxu0 0
      %406 = vmatprep.subr.bf16.mxu0 0
      %407 = vmatpush1.bf16.msra.mxu0 0
      %408 = vmatprep.subr.bf16.mxu0 0
      %409 = vmatpush1.bf16.msra.mxu0 0
      %410 = vmatprep.subr.bf16.mxu0 0
      %411 = vmatpush1.bf16.msra.mxu0 0
      %412 = vmatprep.subr.bf16.mxu0 0
      %413 = vmatpush1.bf16.msra.mxu0 0
      %414 = vmatprep.mubr.bf16.mxu0 0
      %415 = vmatmul.mubr.bf16.gmra.mrb[0].mxu0 %v368
      %v416 = vpop.f32.mrb[0].mxu0
      %v417 = vadd.f32 %v290, %v416
      %v418 = vpop.f32.mrb[0].mxu0
      %v419 = vadd.f32 %v292, %v418
      %v420 = vpop.f32.mrb[0].mxu0
      %v421 = vadd.f32 %v294, %v420
      %v422 = vpop.f32.mrb[0].mxu0
      %v423 = vadd.f32 %v296, %v422
      %424 = vmatprep.mubr.bf16.mxu0 0
      %425 = vmatmul.mubr.bf16.gmra.mrb[0].mxu0 %v371
      %v426 = vpop.f32.mrb[0].mxu0
      %v427 = vadd.f32 %v300, %v426
      %v428 = vpop.f32.mrb[0].mxu0
      %v429 = vadd.f32 %v302, %v428
      %v430 = vpop.f32.mrb[0].mxu0
      %v431 = vadd.f32 %v304, %v430
      %v432 = vpop.f32.mrb[0].mxu0
      %v433 = vadd.f32 %v306, %v432
      %434 = vdwg.mxu0
      %435 = vmatprep.subr.bf16.mxu0 0
      %436 = vmatpush1.bf16.msra.mxu0 %v380
      %437 = vmatprep.subr.bf16.mxu0 0
      %438 = vmatpush1.bf16.msra.mxu0 0
      %439 = vmatprep.subr.bf16.mxu0 0
      %440 = vmatpush1.bf16.msra.mxu0 0
      %441 = vmatprep.subr.bf16.mxu0 0
      %442 = vmatpush1.bf16.msra.mxu0 0
      %443 = vmatprep.subr.bf16.mxu0 0
      %444 = vmatpush1.bf16.msra.mxu0 0
      %445 = vmatprep.subr.bf16.mxu0 0
      %446 = vmatpush1.bf16.msra.mxu0 0
      %447 = vmatprep.subr.bf16.mxu0 0
      %448 = vmatpush1.bf16.msra.mxu0 0
      %449 = vmatprep.subr.bf16.mxu0 0
      %450 = vmatpush1.bf16.msra.mxu0 0
      %451 = vmatprep.subr.bf16.mxu0 0
      %452 = vmatpush1.bf16.msra.mxu0 0
      %453 = vmatprep.subr.bf16.mxu0 0
      %454 = vmatpush1.bf16.msra.mxu0 0
      %455 = vmatprep.subr.bf16.mxu0 0
      %456 = vmatpush1.bf16.msra.mxu0 0
      %457 = vmatprep.subr.bf16.mxu0 0
      %458 = vmatpush1.bf16.msra.mxu0 0
      %459 = vmatprep.subr.bf16.mxu0 0
      %460 = vmatpush1.bf16.msra.mxu0 0
      %461 = vmatprep.subr.bf16.mxu0 0
      %462 = vmatpush1.bf16.msra.mxu0 0
      %463 = vmatprep.subr.bf16.mxu0 0
      %464 = vmatpush1.bf16.msra.mxu0 0
      %465 = vmatprep.subr.bf16.mxu0 0
      %466 = vmatpush1.bf16.msra.mxu0 0
      %467 = vmatprep.mubr.bf16.mxu0 0
      %468 = vmatmul.mubr.bf16.gmra.mrb[0].mxu0 %v368
      %v469 = vpop.f32.mrb[0].mxu0
      %v470 = vadd.f32 %v343, %v469
      %v471 = vpop.f32.mrb[0].mxu0
      %v472 = vpop.f32.mrb[0].mxu0
      %v473 = vadd.f32 %v346, %v472
      %v474 = vpop.f32.mrb[0].mxu0
      %475 = vmatprep.mubr.bf16.mxu0 0
      %476 = vmatmul.mubr.bf16.gmra.mrb[0].mxu0 %v371
      %v477 = vpop.f32.mrb[0].mxu0
      %v478 = vadd.f32 %v351, %v477
      %v479 = vpop.f32.mrb[0].mxu0
      %v480 = vpop.f32.mrb[0].mxu0
      %v481 = vadd.f32 %v354, %v480
      %v482 = vpop.f32.mrb[0].mxu0
      %483 = vdwg.mxu0
      %v484 = vld [vmem:[%s192] sm:$0xff]
      %v485 = vld [vmem:[%s192 + $0x8] sm:$0xf]
      %v487 = vcombine.high %v484, %v484
      %v489 = vpack.c.bf16 %v484, %v484
      %v490 = vpack.c.bf16 %v487, %v487
      %v491 = vpack.c.bf16 %v485, %v485
      %s492 = scalar_lea.vmem %s1, 32
      %v493 = vld [vmem:[%s492] sm:$0xf]
      %v494 = vld [vmem:[%s492 + $0x4] sm:$0xf]
      %v495 = vld [vmem:[%s492 + $0x8] sm:$0xf]
      %v496 = vld [vmem:[%s492 + $0xc] sm:$0xf]
      %v501 = vunpack.c.l.b16 %v493
      %v502 = vunpack.c.l.b16 %v494
      %v503 = vunpack.c.l.b16 %v495
      %v504 = vunpack.c.l.b16 %v496
      %v505 = vpack.c.b16 %v502, %v501
      %v506 = vpack.c.b16 %v504, %v503
      %510 = vrot.lane.b32.xlu0 %v489, 126
      %v511 = vpop.permute.xlu0 %510
      %512 = vrot.lane.b32.xlu0 %v490, 126
      %v513 = vpop.permute.xlu0 %512
      %514 = vrot.lane.b32.xlu0 %v491, 126
      %v515 = vpop.permute.xlu0 %514
      %vm516 = vcmask 1031168
      %v517 = vsel %vm516, %v511, %v513
      %v518 = vsel %vm516, %v513, %v515
      %v520 = vsel %vm238, %v505, 0
      %v523 = vsel %vm238, %v506, 0
      %v526 = vsel %vm245, %v517, 0
      %v529 = vsel %vm245, %v518, 0
      %v532 = vsel %vm245, %v515, 0
      %534 = vmatprep.subr.bf16.mxu0 %v529
      %535 = vmatpush1.bf16.msra.mxu0 %v526
      %536 = vmatprep.subr.bf16.mxu0 0
      %537 = vmatpush1.bf16.msra.mxu0 0
      %538 = vmatprep.subr.bf16.mxu0 0
      %539 = vmatpush1.bf16.msra.mxu0 0
      %540 = vmatprep.subr.bf16.mxu0 0
      %541 = vmatpush1.bf16.msra.mxu0 0
      %542 = vmatprep.subr.bf16.mxu0 0
      %543 = vmatpush1.bf16.msra.mxu0 0
      %544 = vmatprep.subr.bf16.mxu0 0
      %545 = vmatpush1.bf16.msra.mxu0 0
      %546 = vmatprep.subr.bf16.mxu0 0
      %547 = vmatpush1.bf16.msra.mxu0 0
      %548 = vmatprep.subr.bf16.mxu0 0
      %549 = vmatpush1.bf16.msra.mxu0 0
      %550 = vmatprep.subr.bf16.mxu0 0
      %551 = vmatpush1.bf16.msra.mxu0 0
      %552 = vmatprep.subr.bf16.mxu0 0
      %553 = vmatpush1.bf16.msra.mxu0 0
      %554 = vmatprep.subr.bf16.mxu0 0
      %555 = vmatpush1.bf16.msra.mxu0 0
      %556 = vmatprep.subr.bf16.mxu0 0
      %557 = vmatpush1.bf16.msra.mxu0 0
      %558 = vmatprep.subr.bf16.mxu0 0
      %559 = vmatpush1.bf16.msra.mxu0 0
      %560 = vmatprep.subr.bf16.mxu0 0
      %561 = vmatpush1.bf16.msra.mxu0 0
      %562 = vmatprep.subr.bf16.mxu0 0
      %563 = vmatpush1.bf16.msra.mxu0 0
      %564 = vmatprep.subr.bf16.mxu0 0
      %565 = vmatpush1.bf16.msra.mxu0 0
      %566 = vmatprep.mubr.bf16.mxu0 0
      %567 = vmatmul.mubr.bf16.gmra.mrb[0].mxu0 %v520
      %v568 = vpop.f32.mrb[0].mxu0
      %v569 = vadd.f32 0.0, %v568
      %v570 = vpop.f32.mrb[0].mxu0
      %v571 = vadd.f32 0.0, %v570
      %v572 = vpop.f32.mrb[0].mxu0
      %v573 = vadd.f32 0.0, %v572
      %v574 = vpop.f32.mrb[0].mxu0
      %v575 = vadd.f32 0.0, %v574
      %576 = vmatprep.mubr.bf16.mxu0 0
      %577 = vmatmul.mubr.bf16.gmra.mrb[0].mxu0 %v523
      %v578 = vpop.f32.mrb[0].mxu0
      %v579 = vadd.f32 0.0, %v578
      %v580 = vpop.f32.mrb[0].mxu0
      %v581 = vadd.f32 0.0, %v580
      %v582 = vpop.f32.mrb[0].mxu0
      %v583 = vadd.f32 0.0, %v582
      %v584 = vpop.f32.mrb[0].mxu0
      %v585 = vadd.f32 0.0, %v584
      %586 = vdwg.mxu0
      %587 = vmatprep.subr.bf16.mxu0 0
      %588 = vmatpush1.bf16.msra.mxu0 %v532
      %589 = vmatprep.subr.bf16.mxu0 0
      %590 = vmatpush1.bf16.msra.mxu0 0
      %591 = vmatprep.subr.bf16.mxu0 0
      %592 = vmatpush1.bf16.msra.mxu0 0
      %593 = vmatprep.subr.bf16.mxu0 0
      %594 = vmatpush1.bf16.msra.mxu0 0
      %595 = vmatprep.subr.bf16.mxu0 0
      %596 = vmatpush1.bf16.msra.mxu0 0
      %597 = vmatprep.subr.bf16.mxu0 0
      %598 = vmatpush1.bf16.msra.mxu0 0
      %599 = vmatprep.subr.bf16.mxu0 0
      %600 = vmatpush1.bf16.msra.mxu0 0
      %601 = vmatprep.subr.bf16.mxu0 0
      %602 = vmatpush1.bf16.msra.mxu0 0
      %603 = vmatprep.subr.bf16.mxu0 0
      %604 = vmatpush1.bf16.msra.mxu0 0
      %605 = vmatprep.subr.bf16.mxu0 0
      %606 = vmatpush1.bf16.msra.mxu0 0
      %607 = vmatprep.subr.bf16.mxu0 0
      %608 = vmatpush1.bf16.msra.mxu0 0
      %609 = vmatprep.subr.bf16.mxu0 0
      %610 = vmatpush1.bf16.msra.mxu0 0
      %611 = vmatprep.subr.bf16.mxu0 0
      %612 = vmatpush1.bf16.msra.mxu0 0
      %613 = vmatprep.subr.bf16.mxu0 0
      %614 = vmatpush1.bf16.msra.mxu0 0
      %615 = vmatprep.subr.bf16.mxu0 0
      %616 = vmatpush1.bf16.msra.mxu0 0
      %617 = vmatprep.subr.bf16.mxu0 0
      %618 = vmatpush1.bf16.msra.mxu0 0
      %619 = vmatprep.mubr.bf16.mxu0 0
      %620 = vmatmul.mubr.bf16.gmra.mrb[0].mxu0 %v520
      %v621 = vpop.f32.mrb[0].mxu0
      %v622 = vadd.f32 0.0, %v621
      %v623 = vpop.f32.mrb[0].mxu0
      %v624 = vpop.f32.mrb[0].mxu0
      %v625 = vadd.f32 0.0, %v624
      %v626 = vpop.f32.mrb[0].mxu0
      %627 = vmatprep.mubr.bf16.mxu0 0
      %628 = vmatmul.mubr.bf16.gmra.mrb[0].mxu0 %v523
      %v629 = vpop.f32.mrb[0].mxu0
      %v630 = vadd.f32 0.0, %v629
      %v631 = vpop.f32.mrb[0].mxu0
      %v632 = vpop.f32.mrb[0].mxu0
      %v633 = vadd.f32 0.0, %v632
      %v634 = vpop.f32.mrb[0].mxu0
      %635 = vdwg.mxu0
      %v636 = vadd.f32 %v417, %v569
      %v637 = vadd.f32 %v419, %v571
      %v638 = vadd.f32 %v470, %v622
      %v639 = vadd.f32 %v421, %v573
      %v640 = vadd.f32 %v423, %v575
      %v641 = vadd.f32 %v473, %v625
      %v642 = vadd.f32 %v427, %v579
      %v643 = vadd.f32 %v429, %v581
      %v644 = vadd.f32 %v478, %v630
      %v645 = vadd.f32 %v431, %v583
      %v646 = vadd.f32 %v433, %v585
      %v647 = vadd.f32 %v481, %v633
      %v648 = vld [vmem:[%s192] sm:$0xff]
      %v649 = vld [vmem:[%s192 + $0x8] sm:$0xf]
      %v651 = vcombine.high %v648, %v648
      %v653 = vpack.c.bf16 %v648, %v648
      %v654 = vpack.c.bf16 %v651, %v651
      %v655 = vpack.c.bf16 %v649, %v649
      %s656 = scalar_lea.vmem %s1, 48
      %v657 = vld [vmem:[%s656] sm:$0xf]
      %v658 = vld [vmem:[%s656 + $0x4] sm:$0xf]
      %v659 = vld [vmem:[%s656 + $0x8] sm:$0xf]
      %v660 = vld [vmem:[%s656 + $0xc] sm:$0xf]
      %v665 = vunpack.c.l.b16 %v657
      %v666 = vunpack.c.l.b16 %v658
      %v667 = vunpack.c.l.b16 %v659
      %v668 = vunpack.c.l.b16 %v660
      %v669 = vpack.c.b16 %v666, %v665
      %v670 = vpack.c.b16 %v668, %v667
      %674 = vrot.lane.b32.xlu0 %v653, 110
      %v675 = vpop.permute.xlu0 %674
      %676 = vrot.lane.b32.xlu0 %v654, 110
      %v677 = vpop.permute.xlu0 %676
      %678 = vrot.lane.b32.xlu0 %v655, 110
      %v679 = vpop.permute.xlu0 %678
      %vm680 = vcmask 900096
      %v681 = vsel %vm680, %v675, %v677
      %v682 = vsel %vm680, %v677, %v679
      %v684 = vsel %vm238, %v669, 0
      %v687 = vsel %vm238, %v670, 0
      %v690 = vsel %vm245, %v681, 0
      %v693 = vsel %vm245, %v682, 0
      %v696 = vsel %vm245, %v679, 0
      %698 = vmatprep.subr.bf16.mxu0 %v693
      %699 = vmatpush1.bf16.msra.mxu0 %v690
      %700 = vmatprep.subr.bf16.mxu0 0
      %701 = vmatpush1.bf16.msra.mxu0 0
      %702 = vmatprep.subr.bf16.mxu0 0
      %703 = vmatpush1.bf16.msra.mxu0 0
      %704 = vmatprep.subr.bf16.mxu0 0
      %705 = vmatpush1.bf16.msra.mxu0 0
      %706 = vmatprep.subr.bf16.mxu0 0
      %707 = vmatpush1.bf16.msra.mxu0 0
      %708 = vmatprep.subr.bf16.mxu0 0
      %709 = vmatpush1.bf16.msra.mxu0 0
      %710 = vmatprep.subr.bf16.mxu0 0
      %711 = vmatpush1.bf16.msra.mxu0 0
      %712 = vmatprep.subr.bf16.mxu0 0
      %713 = vmatpush1.bf16.msra.mxu0 0
      %714 = vmatprep.subr.bf16.mxu0 0
      %715 = vmatpush1.bf16.msra.mxu0 0
      %716 = vmatprep.subr.bf16.mxu0 0
      %717 = vmatpush1.bf16.msra.mxu0 0
      %718 = vmatprep.subr.bf16.mxu0 0
      %719 = vmatpush1.bf16.msra.mxu0 0
      %720 = vmatprep.subr.bf16.mxu0 0
      %721 = vmatpush1.bf16.msra.mxu0 0
      %722 = vmatprep.subr.bf16.mxu0 0
      %723 = vmatpush1.bf16.msra.mxu0 0
      %724 = vmatprep.subr.bf16.mxu0 0
      %725 = vmatpush1.bf16.msra.mxu0 0
      %726 = vmatprep.subr.bf16.mxu0 0
      %727 = vmatpush1.bf16.msra.mxu0 0
      %728 = vmatprep.subr.bf16.mxu0 0
      %729 = vmatpush1.bf16.msra.mxu0 0
      %730 = vmatprep.mubr.bf16.mxu0 0
      %731 = vmatmul.mubr.bf16.gmra.mrb[0].mxu0 %v684
      %v732 = vpop.f32.mrb[0].mxu0
      %v733 = vadd.f32 0.0, %v732
      %v734 = vpop.f32.mrb[0].mxu0
      %v735 = vadd.f32 0.0, %v734
      %v736 = vpop.f32.mrb[0].mxu0
      %v737 = vadd.f32 0.0, %v736
      %v738 = vpop.f32.mrb[0].mxu0
      %v739 = vadd.f32 0.0, %v738
      %740 = vmatprep.mubr.bf16.mxu0 0
      %741 = vmatmul.mubr.bf16.gmra.mrb[0].mxu0 %v687
      %v742 = vpop.f32.mrb[0].mxu0
      %v743 = vadd.f32 0.0, %v742
      %v744 = vpop.f32.mrb[0].mxu0
      %v745 = vadd.f32 0.0, %v744
      %v746 = vpop.f32.mrb[0].mxu0
      %v747 = vadd.f32 0.0, %v746
      %v748 = vpop.f32.mrb[0].mxu0
      %v749 = vadd.f32 0.0, %v748
      %750 = vdwg.mxu0
      %751 = vmatprep.subr.bf16.mxu0 0
      %752 = vmatpush1.bf16.msra.mxu0 %v696
      %753 = vmatprep.subr.bf16.mxu0 0
      %754 = vmatpush1.bf16.msra.mxu0 0
      %755 = vmatprep.subr.bf16.mxu0 0
      %756 = vmatpush1.bf16.msra.mxu0 0
      %757 = vmatprep.subr.bf16.mxu0 0
      %758 = vmatpush1.bf16.msra.mxu0 0
      %759 = vmatprep.subr.bf16.mxu0 0
      %760 = vmatpush1.bf16.msra.mxu0 0
      %761 = vmatprep.subr.bf16.mxu0 0
      %762 = vmatpush1.bf16.msra.mxu0 0
      %763 = vmatprep.subr.bf16.mxu0 0
      %764 = vmatpush1.bf16.msra.mxu0 0
      %765 = vmatprep.subr.bf16.mxu0 0
      %766 = vmatpush1.bf16.msra.mxu0 0
      %767 = vmatprep.subr.bf16.mxu0 0
      %768 = vmatpush1.bf16.msra.mxu0 0
      %769 = vmatprep.subr.bf16.mxu0 0
      %770 = vmatpush1.bf16.msra.mxu0 0
      %771 = vmatprep.subr.bf16.mxu0 0
      %772 = vmatpush1.bf16.msra.mxu0 0
      %773 = vmatprep.subr.bf16.mxu0 0
      %774 = vmatpush1.bf16.msra.mxu0 0
      %775 = vmatprep.subr.bf16.mxu0 0
      %776 = vmatpush1.bf16.msra.mxu0 0
      %777 = vmatprep.subr.bf16.mxu0 0
      %778 = vmatpush1.bf16.msra.mxu0 0
      %779 = vmatprep.subr.bf16.mxu0 0
      %780 = vmatpush1.bf16.msra.mxu0 0
      %781 = vmatprep.subr.bf16.mxu0 0
      %782 = vmatpush1.bf16.msra.mxu0 0
      %783 = vmatprep.mubr.bf16.mxu0 0
      %784 = vmatmul.mubr.bf16.gmra.mrb[0].mxu0 %v684
      %v785 = vpop.f32.mrb[0].mxu0
      %v786 = vadd.f32 0.0, %v785
      %v787 = vpop.f32.mrb[0].mxu0
      %v788 = vpop.f32.mrb[0].mxu0
      %v789 = vadd.f32 0.0, %v788
      %v790 = vpop.f32.mrb[0].mxu0
      %791 = vmatprep.mubr.bf16.mxu0 0
      %792 = vmatmul.mubr.bf16.gmra.mrb[0].mxu0 %v687
      %v793 = vpop.f32.mrb[0].mxu0
      %v794 = vadd.f32 0.0, %v793
      %v795 = vpop.f32.mrb[0].mxu0
      %v796 = vpop.f32.mrb[0].mxu0
      %v797 = vadd.f32 0.0, %v796
      %v798 = vpop.f32.mrb[0].mxu0
      %799 = vdwg.mxu0
      %v800 = vadd.f32 %v636, %v733
      %v801 = vadd.f32 %v637, %v735
      %v802 = vadd.f32 %v638, %v786
      %v803 = vadd.f32 %v639, %v737
      %v804 = vadd.f32 %v640, %v739
      %v805 = vadd.f32 %v641, %v789
      %v806 = vadd.f32 %v642, %v743
      %v807 = vadd.f32 %v643, %v745
      %v808 = vadd.f32 %v644, %v794
      %v809 = vadd.f32 %v645, %v747
      %v810 = vadd.f32 %v646, %v749
      %v811 = vadd.f32 %v647, %v797
      %v812 = vld [vmem:[%s192] sm:$0xff]
      %v813 = vld [vmem:[%s192 + $0x8] sm:$0xf]
      %v815 = vcombine.high %v812, %v812
      %v817 = vpack.c.bf16 %v812, %v812
      %v818 = vpack.c.bf16 %v815, %v815
      %v819 = vpack.c.bf16 %v813, %v813
      %s820 = scalar_lea.vmem %s1, 64
      %v821 = vld [vmem:[%s820] sm:$0xf]
      %v822 = vld [vmem:[%s820 + $0x4] sm:$0xf]
      %v823 = vld [vmem:[%s820 + $0x8] sm:$0xf]
      %v824 = vld [vmem:[%s820 + $0xc] sm:$0xf]
      %v829 = vunpack.c.l.b16 %v821
      %v830 = vunpack.c.l.b16 %v822
      %v831 = vunpack.c.l.b16 %v823
      %v832 = vunpack.c.l.b16 %v824
      %v833 = vpack.c.b16 %v830, %v829
      %v834 = vpack.c.b16 %v832, %v831
      %838 = vrot.lane.b32.xlu0 %v817, 109
      %v839 = vpop.permute.xlu0 %838
      %840 = vrot.lane.b32.xlu0 %v818, 109
      %v841 = vpop.permute.xlu0 %840
      %842 = vrot.lane.b32.xlu0 %v819, 109
      %v843 = vpop.permute.xlu0 %842
      %vm844 = vcmask 891904
      %v845 = vsel %vm844, %v839, %v841
      %v846 = vsel %vm844, %v841, %v843
      %v848 = vsel %vm238, %v833, 0
      %v851 = vsel %vm238, %v834, 0
      %v854 = vsel %vm245, %v845, 0
      %v857 = vsel %vm245, %v846, 0
      %v860 = vsel %vm245, %v843, 0
      %862 = vmatprep.subr.bf16.mxu0 %v857
      %863 = vmatpush1.bf16.msra.mxu0 %v854
      %864 = vmatprep.subr.bf16.mxu0 0
      %865 = vmatpush1.bf16.msra.mxu0 0
      %866 = vmatprep.subr.bf16.mxu0 0
      %867 = vmatpush1.bf16.msra.mxu0 0
      %868 = vmatprep.subr.bf16.mxu0 0
      %869 = vmatpush1.bf16.msra.mxu0 0
      %870 = vmatprep.subr.bf16.mxu0 0
      %871 = vmatpush1.bf16.msra.mxu0 0
      %872 = vmatprep.subr.bf16.mxu0 0
      %873 = vmatpush1.bf16.msra.mxu0 0
      %874 = vmatprep.subr.bf16.mxu0 0
      %875 = vmatpush1.bf16.msra.mxu0 0
      %876 = vmatprep.subr.bf16.mxu0 0
      %877 = vmatpush1.bf16.msra.mxu0 0
      %878 = vmatprep.subr.bf16.mxu0 0
      %879 = vmatpush1.bf16.msra.mxu0 0
      %880 = vmatprep.subr.bf16.mxu0 0
      %881 = vmatpush1.bf16.msra.mxu0 0
      %882 = vmatprep.subr.bf16.mxu0 0
      %883 = vmatpush1.bf16.msra.mxu0 0
      %884 = vmatprep.subr.bf16.mxu0 0
      %885 = vmatpush1.bf16.msra.mxu0 0
      %886 = vmatprep.subr.bf16.mxu0 0
      %887 = vmatpush1.bf16.msra.mxu0 0
      %888 = vmatprep.subr.bf16.mxu0 0
      %889 = vmatpush1.bf16.msra.mxu0 0
      %890 = vmatprep.subr.bf16.mxu0 0
      %891 = vmatpush1.bf16.msra.mxu0 0
      %892 = vmatprep.subr.bf16.mxu0 0
      %893 = vmatpush1.bf16.msra.mxu0 0
      %894 = vmatprep.mubr.bf16.mxu0 0
      %895 = vmatmul.mubr.bf16.gmra.mrb[0].mxu0 %v848
      %v896 = vpop.f32.mrb[0].mxu0
      %v897 = vadd.f32 0.0, %v896
      %v898 = vpop.f32.mrb[0].mxu0
      %v899 = vadd.f32 0.0, %v898
      %v900 = vpop.f32.mrb[0].mxu0
      %v901 = vadd.f32 0.0, %v900
      %v902 = vpop.f32.mrb[0].mxu0
      %v903 = vadd.f32 0.0, %v902
      %904 = vmatprep.mubr.bf16.mxu0 0
      %905 = vmatmul.mubr.bf16.gmra.mrb[0].mxu0 %v851
      %v906 = vpop.f32.mrb[0].mxu0
      %v907 = vadd.f32 0.0, %v906
      %v908 = vpop.f32.mrb[0].mxu0
      %v909 = vadd.f32 0.0, %v908
      %v910 = vpop.f32.mrb[0].mxu0
      %v911 = vadd.f32 0.0, %v910
      %v912 = vpop.f32.mrb[0].mxu0
      %v913 = vadd.f32 0.0, %v912
      %914 = vdwg.mxu0
      %915 = vmatprep.subr.bf16.mxu0 0
      %916 = vmatpush1.bf16.msra.mxu0 %v860
      %917 = vmatprep.subr.bf16.mxu0 0
      %918 = vmatpush1.bf16.msra.mxu0 0
      %919 = vmatprep.subr.bf16.mxu0 0
      %920 = vmatpush1.bf16.msra.mxu0 0
      %921 = vmatprep.subr.bf16.mxu0 0
      %922 = vmatpush1.bf16.msra.mxu0 0
      %923 = vmatprep.subr.bf16.mxu0 0
      %924 = vmatpush1.bf16.msra.mxu0 0
      %925 = vmatprep.subr.bf16.mxu0 0
      %926 = vmatpush1.bf16.msra.mxu0 0
      %927 = vmatprep.subr.bf16.mxu0 0
      %928 = vmatpush1.bf16.msra.mxu0 0
      %929 = vmatprep.subr.bf16.mxu0 0
      %930 = vmatpush1.bf16.msra.mxu0 0
      %931 = vmatprep.subr.bf16.mxu0 0
      %932 = vmatpush1.bf16.msra.mxu0 0
      %933 = vmatprep.subr.bf16.mxu0 0
      %934 = vmatpush1.bf16.msra.mxu0 0
      %935 = vmatprep.subr.bf16.mxu0 0
      %936 = vmatpush1.bf16.msra.mxu0 0
      %937 = vmatprep.subr.bf16.mxu0 0
      %938 = vmatpush1.bf16.msra.mxu0 0
      %939 = vmatprep.subr.bf16.mxu0 0
      %940 = vmatpush1.bf16.msra.mxu0 0
      %941 = vmatprep.subr.bf16.mxu0 0
      %942 = vmatpush1.bf16.msra.mxu0 0
      %943 = vmatprep.subr.bf16.mxu0 0
      %944 = vmatpush1.bf16.msra.mxu0 0
      %945 = vmatprep.subr.bf16.mxu0 0
      %946 = vmatpush1.bf16.msra.mxu0 0
      %947 = vmatprep.mubr.bf16.mxu0 0
      %948 = vmatmul.mubr.bf16.gmra.mrb[0].mxu0 %v848
      %v949 = vpop.f32.mrb[0].mxu0
      %v950 = vadd.f32 0.0, %v949
      %v951 = vpop.f32.mrb[0].mxu0
      %v952 = vpop.f32.mrb[0].mxu0
      %v953 = vadd.f32 0.0, %v952
      %v954 = vpop.f32.mrb[0].mxu0
      %955 = vmatprep.mubr.bf16.mxu0 0
      %956 = vmatmul.mubr.bf16.gmra.mrb[0].mxu0 %v851
      %v957 = vpop.f32.mrb[0].mxu0
      %v958 = vadd.f32 0.0, %v957
      %v959 = vpop.f32.mrb[0].mxu0
      %v960 = vpop.f32.mrb[0].mxu0
      %v961 = vadd.f32 0.0, %v960
      %v962 = vpop.f32.mrb[0].mxu0
      %963 = vdwg.mxu0
      %v964 = vadd.f32 %v800, %v897
      %v965 = vadd.f32 %v801, %v899
      %v966 = vadd.f32 %v802, %v950
      %v967 = vadd.f32 %v803, %v901
      %v968 = vadd.f32 %v804, %v903
      %v969 = vadd.f32 %v805, %v953
      %v970 = vadd.f32 %v806, %v907
      %v971 = vadd.f32 %v807, %v909
      %v972 = vadd.f32 %v808, %v958
      %v973 = vadd.f32 %v809, %v911
      %v974 = vadd.f32 %v810, %v913
      %v975 = vadd.f32 %v811, %v961
      %v976 = vld [vmem:[%s192] sm:$0xff]
      %v977 = vld [vmem:[%s192 + $0x8] sm:$0xf]
      %v979 = vcombine.high %v976, %v976
      %v981 = vpack.c.bf16 %v976, %v976
      %v982 = vpack.c.bf16 %v979, %v979
      %v983 = vpack.c.bf16 %v977, %v977
      %s984 = scalar_lea.vmem %s1, 80
      %v985 = vld [vmem:[%s984] sm:$0xf]
      %v986 = vld [vmem:[%s984 + $0x4] sm:$0xf]
      %v987 = vld [vmem:[%s984 + $0x8] sm:$0xf]
      %v988 = vld [vmem:[%s984 + $0xc] sm:$0xf]
      %v993 = vunpack.c.l.b16 %v985
      %v994 = vunpack.c.l.b16 %v986
      %v995 = vunpack.c.l.b16 %v987
      %v996 = vunpack.c.l.b16 %v988
      %v997 = vpack.c.b16 %v994, %v993
      %v998 = vpack.c.b16 %v996, %v995
      %1002 = vrot.lane.b32.xlu0 %v981, 108
      %v1003 = vpop.permute.xlu0 %1002
      %1004 = vrot.lane.b32.xlu0 %v982, 108
      %v1005 = vpop.permute.xlu0 %1004
      %1006 = vrot.lane.b32.xlu0 %v983, 108
      %v1007 = vpop.permute.xlu0 %1006
      %vm1008 = vcmask 883712
      %v1009 = vsel %vm1008, %v1003, %v1005
      %v1010 = vsel %vm1008, %v1005, %v1007
      %v1012 = vsel %vm238, %v997, 0
      %v1015 = vsel %vm238, %v998, 0
      %v1018 = vsel %vm245, %v1009, 0
      %v1021 = vsel %vm245, %v1010, 0
      %v1024 = vsel %vm245, %v1007, 0
      %1026 = vmatprep.subr.bf16.mxu0 %v1021
      %1027 = vmatpush1.bf16.msra.mxu0 %v1018
      %1028 = vmatprep.subr.bf16.mxu0 0
      %1029 = vmatpush1.bf16.msra.mxu0 0
      %1030 = vmatprep.subr.bf16.mxu0 0
      %1031 = vmatpush1.bf16.msra.mxu0 0
      %1032 = vmatprep.subr.bf16.mxu0 0
      %1033 = vmatpush1.bf16.msra.mxu0 0
      %1034 = vmatprep.subr.bf16.mxu0 0
      %1035 = vmatpush1.bf16.msra.mxu0 0
      %1036 = vmatprep.subr.bf16.mxu0 0
      %1037 = vmatpush1.bf16.msra.mxu0 0
      %1038 = vmatprep.subr.bf16.mxu0 0
      %1039 = vmatpush1.bf16.msra.mxu0 0
      %1040 = vmatprep.subr.bf16.mxu0 0
      %1041 = vmatpush1.bf16.msra.mxu0 0
      %1042 = vmatprep.subr.bf16.mxu0 0
      %1043 = vmatpush1.bf16.msra.mxu0 0
      %1044 = vmatprep.subr.bf16.mxu0 0
      %1045 = vmatpush1.bf16.msra.mxu0 0
      %1046 = vmatprep.subr.bf16.mxu0 0
      %1047 = vmatpush1.bf16.msra.mxu0 0
      %1048 = vmatprep.subr.bf16.mxu0 0
      %1049 = vmatpush1.bf16.msra.mxu0 0
      %1050 = vmatprep.subr.bf16.mxu0 0
      %1051 = vmatpush1.bf16.msra.mxu0 0
      %1052 = vmatprep.subr.bf16.mxu0 0
      %1053 = vmatpush1.bf16.msra.mxu0 0
      %1054 = vmatprep.subr.bf16.mxu0 0
      %1055 = vmatpush1.bf16.msra.mxu0 0
      %1056 = vmatprep.subr.bf16.mxu0 0
      %1057 = vmatpush1.bf16.msra.mxu0 0
      %1058 = vmatprep.mubr.bf16.mxu0 0
      %1059 = vmatmul.mubr.bf16.gmra.mrb[0].mxu0 %v1012
      %v1060 = vpop.f32.mrb[0].mxu0
      %v1061 = vadd.f32 0.0, %v1060
      %v1062 = vpop.f32.mrb[0].mxu0
      %v1063 = vadd.f32 0.0, %v1062
      %v1064 = vpop.f32.mrb[0].mxu0
      %v1065 = vadd.f32 0.0, %v1064
      %v1066 = vpop.f32.mrb[0].mxu0
      %v1067 = vadd.f32 0.0, %v1066
      %1068 = vmatprep.mubr.bf16.mxu0 0
      %1069 = vmatmul.mubr.bf16.gmra.mrb[0].mxu0 %v1015
      %v1070 = vpop.f32.mrb[0].mxu0
      %v1071 = vadd.f32 0.0, %v1070
      %v1072 = vpop.f32.mrb[0].mxu0
      %v1073 = vadd.f32 0.0, %v1072
      %v1074 = vpop.f32.mrb[0].mxu0
      %v1075 = vadd.f32 0.0, %v1074
      %v1076 = vpop.f32.mrb[0].mxu0
      %v1077 = vadd.f32 0.0, %v1076
      %1078 = vdwg.mxu0
      %1079 = vmatprep.subr.bf16.mxu0 0
      %1080 = vmatpush1.bf16.msra.mxu0 %v1024
      %1081 = vmatprep.subr.bf16.mxu0 0
      %1082 = vmatpush1.bf16.msra.mxu0 0
      %1083 = vmatprep.subr.bf16.mxu0 0
      %1084 = vmatpush1.bf16.msra.mxu0 0
      %1085 = vmatprep.subr.bf16.mxu0 0
      %1086 = vmatpush1.bf16.msra.mxu0 0
      %1087 = vmatprep.subr.bf16.mxu0 0
      %1088 = vmatpush1.bf16.msra.mxu0 0
      %1089 = vmatprep.subr.bf16.mxu0 0
      %1090 = vmatpush1.bf16.msra.mxu0 0
      %1091 = vmatprep.subr.bf16.mxu0 0
      %1092 = vmatpush1.bf16.msra.mxu0 0
      %1093 = vmatprep.subr.bf16.mxu0 0
      %1094 = vmatpush1.bf16.msra.mxu0 0
      %1095 = vmatprep.subr.bf16.mxu0 0
      %1096 = vmatpush1.bf16.msra.mxu0 0
      %1097 = vmatprep.subr.bf16.mxu0 0
      %1098 = vmatpush1.bf16.msra.mxu0 0
      %1099 = vmatprep.subr.bf16.mxu0 0
      %1100 = vmatpush1.bf16.msra.mxu0 0
      %1101 = vmatprep.subr.bf16.mxu0 0
      %1102 = vmatpush1.bf16.msra.mxu0 0
      %1103 = vmatprep.subr.bf16.mxu0 0
      %1104 = vmatpush1.bf16.msra.mxu0 0
      %1105 = vmatprep.subr.bf16.mxu0 0
      %1106 = vmatpush1.bf16.msra.mxu0 0
      %1107 = vmatprep.subr.bf16.mxu0 0
      %1108 = vmatpush1.bf16.msra.mxu0 0
      %1109 = vmatprep.subr.bf16.mxu0 0
      %1110 = vmatpush1.bf16.msra.mxu0 0
      %1111 = vmatprep.mubr.bf16.mxu0 0
      %1112 = vmatmul.mubr.bf16.gmra.mrb[0].mxu0 %v1012
      %v1113 = vpop.f32.mrb[0].mxu0
      %v1114 = vadd.f32 0.0, %v1113
      %v1115 = vpop.f32.mrb[0].mxu0
      %v1116 = vpop.f32.mrb[0].mxu0
      %v1117 = vadd.f32 0.0, %v1116
      %v1118 = vpop.f32.mrb[0].mxu0
      %1119 = vmatprep.mubr.bf16.mxu0 0
      %1120 = vmatmul.mubr.bf16.gmra.mrb[0].mxu0 %v1015
      %v1121 = vpop.f32.mrb[0].mxu0
      %v1122 = vadd.f32 0.0, %v1121
      %v1123 = vpop.f32.mrb[0].mxu0
      %v1124 = vpop.f32.mrb[0].mxu0
      %v1125 = vadd.f32 0.0, %v1124
      %v1126 = vpop.f32.mrb[0].mxu0
      %1127 = vdwg.mxu0
      %v1128 = vadd.f32 %v964, %v1061
      %v1129 = vadd.f32 %v965, %v1063
      %v1130 = vadd.f32 %v966, %v1114
      %v1131 = vadd.f32 %v967, %v1065
      %v1132 = vadd.f32 %v968, %v1067
      %v1133 = vadd.f32 %v969, %v1117
      %v1134 = vadd.f32 %v970, %v1071
      %v1135 = vadd.f32 %v971, %v1073
      %v1136 = vadd.f32 %v972, %v1122
      %v1137 = vadd.f32 %v973, %v1075
      %v1138 = vadd.f32 %v974, %v1077
      %v1139 = vadd.f32 %v975, %v1125
      %v1140 = vld [vmem:[%s192] sm:$0xff]
      %v1141 = vld [vmem:[%s192 + $0x8] sm:$0xf]
      %v1143 = vcombine.high %v1140, %v1140
      %v1145 = vpack.c.bf16 %v1140, %v1140
      %v1146 = vpack.c.bf16 %v1143, %v1143
      %v1147 = vpack.c.bf16 %v1141, %v1141
      %s1148 = scalar_lea.vmem %s1, 96
      %v1149 = vld [vmem:[%s1148] sm:$0xf]
      %v1150 = vld [vmem:[%s1148 + $0x4] sm:$0xf]
      %v1151 = vld [vmem:[%s1148 + $0x8] sm:$0xf]
      %v1152 = vld [vmem:[%s1148 + $0xc] sm:$0xf]
      %v1157 = vunpack.c.l.b16 %v1149
      %v1158 = vunpack.c.l.b16 %v1150
      %v1159 = vunpack.c.l.b16 %v1151
      %v1160 = vunpack.c.l.b16 %v1152
      %v1161 = vpack.c.b16 %v1158, %v1157
      %v1162 = vpack.c.b16 %v1160, %v1159
      %1166 = vrot.lane.b32.xlu0 %v1145, 92
      %v1167 = vpop.permute.xlu0 %1166
      %1168 = vrot.lane.b32.xlu0 %v1146, 92
      %v1169 = vpop.permute.xlu0 %1168
      %1170 = vrot.lane.b32.xlu0 %v1147, 92
      %v1171 = vpop.permute.xlu0 %1170
      %vm1172 = vcmask 752640
      %v1173 = vsel %vm1172, %v1167, %v1169
      %v1174 = vsel %vm1172, %v1169, %v1171
      %v1176 = vsel %vm238, %v1161, 0
      %v1179 = vsel %vm238, %v1162, 0
      %v1182 = vsel %vm245, %v1173, 0
      %v1185 = vsel %vm245, %v1174, 0
      %v1188 = vsel %vm245, %v1171, 0
      %1190 = vmatprep.subr.bf16.mxu0 %v1185
      %1191 = vmatpush1.bf16.msra.mxu0 %v1182
      %1192 = vmatprep.subr.bf16.mxu0 0
      %1193 = vmatpush1.bf16.msra.mxu0 0
      %1194 = vmatprep.subr.bf16.mxu0 0
      %1195 = vmatpush1.bf16.msra.mxu0 0
      %1196 = vmatprep.subr.bf16.mxu0 0
      %1197 = vmatpush1.bf16.msra.mxu0 0
      %1198 = vmatprep.subr.bf16.mxu0 0
      %1199 = vmatpush1.bf16.msra.mxu0 0
      %1200 = vmatprep.subr.bf16.mxu0 0
      %1201 = vmatpush1.bf16.msra.mxu0 0
      %1202 = vmatprep.subr.bf16.mxu0 0
      %1203 = vmatpush1.bf16.msra.mxu0 0
      %1204 = vmatprep.subr.bf16.mxu0 0
      %1205 = vmatpush1.bf16.msra.mxu0 0
      %1206 = vmatprep.subr.bf16.mxu0 0
      %1207 = vmatpush1.bf16.msra.mxu0 0
      %1208 = vmatprep.subr.bf16.mxu0 0
      %1209 = vmatpush1.bf16.msra.mxu0 0
      %1210 = vmatprep.subr.bf16.mxu0 0
      %1211 = vmatpush1.bf16.msra.mxu0 0
      %1212 = vmatprep.subr.bf16.mxu0 0
      %1213 = vmatpush1.bf16.msra.mxu0 0
      %1214 = vmatprep.subr.bf16.mxu0 0
      %1215 = vmatpush1.bf16.msra.mxu0 0
      %1216 = vmatprep.subr.bf16.mxu0 0
      %1217 = vmatpush1.bf16.msra.mxu0 0
      %1218 = vmatprep.subr.bf16.mxu0 0
      %1219 = vmatpush1.bf16.msra.mxu0 0
      %1220 = vmatprep.subr.bf16.mxu0 0
      %1221 = vmatpush1.bf16.msra.mxu0 0
      %1222 = vmatprep.mubr.bf16.mxu0 0
      %1223 = vmatmul.mubr.bf16.gmra.mrb[0].mxu0 %v1176
      %v1224 = vpop.f32.mrb[0].mxu0
      %v1225 = vadd.f32 0.0, %v1224
      %v1226 = vpop.f32.mrb[0].mxu0
      %v1227 = vadd.f32 0.0, %v1226
      %v1228 = vpop.f32.mrb[0].mxu0
      %v1229 = vadd.f32 0.0, %v1228
      %v1230 = vpop.f32.mrb[0].mxu0
      %v1231 = vadd.f32 0.0, %v1230
      %1232 = vmatprep.mubr.bf16.mxu0 0
      %1233 = vmatmul.mubr.bf16.gmra.mrb[0].mxu0 %v1179
      %v1234 = vpop.f32.mrb[0].mxu0
      %v1235 = vadd.f32 0.0, %v1234
      %v1236 = vpop.f32.mrb[0].mxu0
      %v1237 = vadd.f32 0.0, %v1236
      %v1238 = vpop.f32.mrb[0].mxu0
      %v1239 = vadd.f32 0.0, %v1238
      %v1240 = vpop.f32.mrb[0].mxu0
      %v1241 = vadd.f32 0.0, %v1240
      %1242 = vdwg.mxu0
      %1243 = vmatprep.subr.bf16.mxu0 0
      %1244 = vmatpush1.bf16.msra.mxu0 %v1188
      %1245 = vmatprep.subr.bf16.mxu0 0
      %1246 = vmatpush1.bf16.msra.mxu0 0
      %1247 = vmatprep.subr.bf16.mxu0 0
      %1248 = vmatpush1.bf16.msra.mxu0 0
      %1249 = vmatprep.subr.bf16.mxu0 0
      %1250 = vmatpush1.bf16.msra.mxu0 0
      %1251 = vmatprep.subr.bf16.mxu0 0
      %1252 = vmatpush1.bf16.msra.mxu0 0
      %1253 = vmatprep.subr.bf16.mxu0 0
      %1254 = vmatpush1.bf16.msra.mxu0 0
      %1255 = vmatprep.subr.bf16.mxu0 0
      %1256 = vmatpush1.bf16.msra.mxu0 0
      %1257 = vmatprep.subr.bf16.mxu0 0
      %1258 = vmatpush1.bf16.msra.mxu0 0
      %1259 = vmatprep.subr.bf16.mxu0 0
      %1260 = vmatpush1.bf16.msra.mxu0 0
      %1261 = vmatprep.subr.bf16.mxu0 0
      %1262 = vmatpush1.bf16.msra.mxu0 0
      %1263 = vmatprep.subr.bf16.mxu0 0
      %1264 = vmatpush1.bf16.msra.mxu0 0
      %1265 = vmatprep.subr.bf16.mxu0 0
      %1266 = vmatpush1.bf16.msra.mxu0 0
      %1267 = vmatprep.subr.bf16.mxu0 0
      %1268 = vmatpush1.bf16.msra.mxu0 0
      %1269 = vmatprep.subr.bf16.mxu0 0
      %1270 = vmatpush1.bf16.msra.mxu0 0
      %1271 = vmatprep.subr.bf16.mxu0 0
      %1272 = vmatpush1.bf16.msra.mxu0 0
      %1273 = vmatprep.subr.bf16.mxu0 0
      %1274 = vmatpush1.bf16.msra.mxu0 0
      %1275 = vmatprep.mubr.bf16.mxu0 0
      %1276 = vmatmul.mubr.bf16.gmra.mrb[0].mxu0 %v1176
      %v1277 = vpop.f32.mrb[0].mxu0
      %v1278 = vadd.f32 0.0, %v1277
      %v1279 = vpop.f32.mrb[0].mxu0
      %v1280 = vpop.f32.mrb[0].mxu0
      %v1281 = vadd.f32 0.0, %v1280
      %v1282 = vpop.f32.mrb[0].mxu0
      %1283 = vmatprep.mubr.bf16.mxu0 0
      %1284 = vmatmul.mubr.bf16.gmra.mrb[0].mxu0 %v1179
      %v1285 = vpop.f32.mrb[0].mxu0
      %v1286 = vadd.f32 0.0, %v1285
      %v1287 = vpop.f32.mrb[0].mxu0
      %v1288 = vpop.f32.mrb[0].mxu0
      %v1289 = vadd.f32 0.0, %v1288
      %v1290 = vpop.f32.mrb[0].mxu0
      %1291 = vdwg.mxu0
      %v1292 = vadd.f32 %v1128, %v1225
      %v1293 = vadd.f32 %v1129, %v1227
      %v1294 = vadd.f32 %v1130, %v1278
      %v1295 = vadd.f32 %v1131, %v1229
      %v1296 = vadd.f32 %v1132, %v1231
      %v1297 = vadd.f32 %v1133, %v1281
      %v1298 = vadd.f32 %v1134, %v1235
      %v1299 = vadd.f32 %v1135, %v1237
      %v1300 = vadd.f32 %v1136, %v1286
      %v1301 = vadd.f32 %v1137, %v1239
      %v1302 = vadd.f32 %v1138, %v1241
      %v1303 = vadd.f32 %v1139, %v1289
      %v1304 = vld [vmem:[%s192] sm:$0xff]
      %v1305 = vld [vmem:[%s192 + $0x8] sm:$0xf]
      %v1307 = vcombine.high %v1304, %v1304
      %v1309 = vpack.c.bf16 %v1304, %v1304
      %v1310 = vpack.c.bf16 %v1307, %v1307
      %v1311 = vpack.c.bf16 %v1305, %v1305
      %s1312 = scalar_lea.vmem %s1, 112
      %v1313 = vld [vmem:[%s1312] sm:$0xf]
      %v1314 = vld [vmem:[%s1312 + $0x4] sm:$0xf]
      %v1315 = vld [vmem:[%s1312 + $0x8] sm:$0xf]
      %v1316 = vld [vmem:[%s1312 + $0xc] sm:$0xf]
      %v1321 = vunpack.c.l.b16 %v1313
      %v1322 = vunpack.c.l.b16 %v1314
      %v1323 = vunpack.c.l.b16 %v1315
      %v1324 = vunpack.c.l.b16 %v1316
      %v1325 = vpack.c.b16 %v1322, %v1321
      %v1326 = vpack.c.b16 %v1324, %v1323
      %1330 = vrot.lane.b32.xlu0 %v1309, 91
      %v1331 = vpop.permute.xlu0 %1330
      %1332 = vrot.lane.b32.xlu0 %v1310, 91
      %v1333 = vpop.permute.xlu0 %1332
      %1334 = vrot.lane.b32.xlu0 %v1311, 91
      %v1335 = vpop.permute.xlu0 %1334
      %vm1336 = vcmask 744448
      %v1337 = vsel %vm1336, %v1331, %v1333
      %v1338 = vsel %vm1336, %v1333, %v1335
      %v1340 = vsel %vm238, %v1325, 0
      %v1343 = vsel %vm238, %v1326, 0
      %v1346 = vsel %vm245, %v1337, 0
      %v1349 = vsel %vm245, %v1338, 0
      %v1352 = vsel %vm245, %v1335, 0
      %1354 = vmatprep.subr.bf16.mxu0 %v1349
      %1355 = vmatpush1.bf16.msra.mxu0 %v1346
      %1356 = vmatprep.subr.bf16.mxu0 0
      %1357 = vmatpush1.bf16.msra.mxu0 0
      %1358 = vmatprep.subr.bf16.mxu0 0
      %1359 = vmatpush1.bf16.msra.mxu0 0
      %1360 = vmatprep.subr.bf16.mxu0 0
      %1361 = vmatpush1.bf16.msra.mxu0 0
      %1362 = vmatprep.subr.bf16.mxu0 0
      %1363 = vmatpush1.bf16.msra.mxu0 0
      %1364 = vmatprep.subr.bf16.mxu0 0
      %1365 = vmatpush1.bf16.msra.mxu0 0
      %1366 = vmatprep.subr.bf16.mxu0 0
      %1367 = vmatpush1.bf16.msra.mxu0 0
      %1368 = vmatprep.subr.bf16.mxu0 0
      %1369 = vmatpush1.bf16.msra.mxu0 0
      %1370 = vmatprep.subr.bf16.mxu0 0
      %1371 = vmatpush1.bf16.msra.mxu0 0
      %1372 = vmatprep.subr.bf16.mxu0 0
      %1373 = vmatpush1.bf16.msra.mxu0 0
      %1374 = vmatprep.subr.bf16.mxu0 0
      %1375 = vmatpush1.bf16.msra.mxu0 0
      %1376 = vmatprep.subr.bf16.mxu0 0
      %1377 = vmatpush1.bf16.msra.mxu0 0
      %1378 = vmatprep.subr.bf16.mxu0 0
      %1379 = vmatpush1.bf16.msra.mxu0 0
      %1380 = vmatprep.subr.bf16.mxu0 0
      %1381 = vmatpush1.bf16.msra.mxu0 0
      %1382 = vmatprep.subr.bf16.mxu0 0
      %1383 = vmatpush1.bf16.msra.mxu0 0
      %1384 = vmatprep.subr.bf16.mxu0 0
      %1385 = vmatpush1.bf16.msra.mxu0 0
      %1386 = vmatprep.mubr.bf16.mxu0 0
      %1387 = vmatmul.mubr.bf16.gmra.mrb[0].mxu0 %v1340
      %v1388 = vpop.f32.mrb[0].mxu0
      %v1389 = vadd.f32 0.0, %v1388
      %v1390 = vpop.f32.mrb[0].mxu0
      %v1391 = vadd.f32 0.0, %v1390
      %v1392 = vpop.f32.mrb[0].mxu0
      %v1393 = vadd.f32 0.0, %v1392
      %v1394 = vpop.f32.mrb[0].mxu0
      %v1395 = vadd.f32 0.0, %v1394
      %1396 = vmatprep.mubr.bf16.mxu0 0
      %1397 = vmatmul.mubr.bf16.gmra.mrb[0].mxu0 %v1343
      %v1398 = vpop.f32.mrb[0].mxu0
      %v1399 = vadd.f32 0.0, %v1398
      %v1400 = vpop.f32.mrb[0].mxu0
      %v1401 = vadd.f32 0.0, %v1400
      %v1402 = vpop.f32.mrb[0].mxu0
      %v1403 = vadd.f32 0.0, %v1402
      %v1404 = vpop.f32.mrb[0].mxu0
      %v1405 = vadd.f32 0.0, %v1404
      %1406 = vdwg.mxu0
      %1407 = vmatprep.subr.bf16.mxu0 0
      %1408 = vmatpush1.bf16.msra.mxu0 %v1352
      %1409 = vmatprep.subr.bf16.mxu0 0
      %1410 = vmatpush1.bf16.msra.mxu0 0
      %1411 = vmatprep.subr.bf16.mxu0 0
      %1412 = vmatpush1.bf16.msra.mxu0 0
      %1413 = vmatprep.subr.bf16.mxu0 0
      %1414 = vmatpush1.bf16.msra.mxu0 0
      %1415 = vmatprep.subr.bf16.mxu0 0
      %1416 = vmatpush1.bf16.msra.mxu0 0
      %1417 = vmatprep.subr.bf16.mxu0 0
      %1418 = vmatpush1.bf16.msra.mxu0 0
      %1419 = vmatprep.subr.bf16.mxu0 0
      %1420 = vmatpush1.bf16.msra.mxu0 0
      %1421 = vmatprep.subr.bf16.mxu0 0
      %1422 = vmatpush1.bf16.msra.mxu0 0
      %1423 = vmatprep.subr.bf16.mxu0 0
      %1424 = vmatpush1.bf16.msra.mxu0 0
      %1425 = vmatprep.subr.bf16.mxu0 0
      %1426 = vmatpush1.bf16.msra.mxu0 0
      %1427 = vmatprep.subr.bf16.mxu0 0
      %1428 = vmatpush1.bf16.msra.mxu0 0
      %1429 = vmatprep.subr.bf16.mxu0 0
      %1430 = vmatpush1.bf16.msra.mxu0 0
      %1431 = vmatprep.subr.bf16.mxu0 0
      %1432 = vmatpush1.bf16.msra.mxu0 0
      %1433 = vmatprep.subr.bf16.mxu0 0
      %1434 = vmatpush1.bf16.msra.mxu0 0
      %1435 = vmatprep.subr.bf16.mxu0 0
      %1436 = vmatpush1.bf16.msra.mxu0 0
      %1437 = vmatprep.subr.bf16.mxu0 0
      %1438 = vmatpush1.bf16.msra.mxu0 0
      %1439 = vmatprep.mubr.bf16.mxu0 0
      %1440 = vmatmul.mubr.bf16.gmra.mrb[0].mxu0 %v1340
      %v1441 = vpop.f32.mrb[0].mxu0
      %v1442 = vadd.f32 0.0, %v1441
      %v1443 = vpop.f32.mrb[0].mxu0
      %v1444 = vpop.f32.mrb[0].mxu0
      %v1445 = vadd.f32 0.0, %v1444
      %v1446 = vpop.f32.mrb[0].mxu0
      %1447 = vmatprep.mubr.bf16.mxu0 0
      %1448 = vmatmul.mubr.bf16.gmra.mrb[0].mxu0 %v1343
      %v1449 = vpop.f32.mrb[0].mxu0
      %v1450 = vadd.f32 0.0, %v1449
      %v1451 = vpop.f32.mrb[0].mxu0
      %v1452 = vpop.f32.mrb[0].mxu0
      %v1453 = vadd.f32 0.0, %v1452
      %v1454 = vpop.f32.mrb[0].mxu0
      %1455 = vdwg.mxu0
      %v1456 = vadd.f32 %v1292, %v1389
      %v1457 = vadd.f32 %v1293, %v1391
      %v1458 = vadd.f32 %v1294, %v1442
      %v1459 = vadd.f32 %v1295, %v1393
      %v1460 = vadd.f32 %v1296, %v1395
      %v1461 = vadd.f32 %v1297, %v1445
      %v1462 = vadd.f32 %v1298, %v1399
      %v1463 = vadd.f32 %v1299, %v1401
      %v1464 = vadd.f32 %v1300, %v1450
      %v1465 = vadd.f32 %v1301, %v1403
      %v1466 = vadd.f32 %v1302, %v1405
      %v1467 = vadd.f32 %v1303, %v1453
      %v1468 = vld [vmem:[%s192] sm:$0xff]
      %v1469 = vld [vmem:[%s192 + $0x8] sm:$0xf]
      %v1471 = vcombine.high %v1468, %v1468
      %v1473 = vpack.c.bf16 %v1468, %v1468
      %v1474 = vpack.c.bf16 %v1471, %v1471
      %v1475 = vpack.c.bf16 %v1469, %v1469
      %s1476 = scalar_lea.vmem %s1, 128
      %v1477 = vld [vmem:[%s1476] sm:$0xf]
      %v1478 = vld [vmem:[%s1476 + $0x4] sm:$0xf]
      %v1479 = vld [vmem:[%s1476 + $0x8] sm:$0xf]
      %v1480 = vld [vmem:[%s1476 + $0xc] sm:$0xf]
      %v1485 = vunpack.c.l.b16 %v1477
      %v1486 = vunpack.c.l.b16 %v1478
      %v1487 = vunpack.c.l.b16 %v1479
      %v1488 = vunpack.c.l.b16 %v1480
      %v1489 = vpack.c.b16 %v1486, %v1485
      %v1490 = vpack.c.b16 %v1488, %v1487
      %1494 = vrot.lane.b32.xlu0 %v1473, 90
      %v1495 = vpop.permute.xlu0 %1494
      %1496 = vrot.lane.b32.xlu0 %v1474, 90
      %v1497 = vpop.permute.xlu0 %1496
      %1498 = vrot.lane.b32.xlu0 %v1475, 90
      %v1499 = vpop.permute.xlu0 %1498
      %vm1500 = vcmask 736256
      %v1501 = vsel %vm1500, %v1495, %v1497
      %v1502 = vsel %vm1500, %v1497, %v1499
      %v1504 = vsel %vm238, %v1489, 0
      %v1507 = vsel %vm238, %v1490, 0
      %v1510 = vsel %vm245, %v1501, 0
      %v1513 = vsel %vm245, %v1502, 0
      %v1516 = vsel %vm245, %v1499, 0
      %1518 = vmatprep.subr.bf16.mxu0 %v1513
      %1519 = vmatpush1.bf16.msra.mxu0 %v1510
      %1520 = vmatprep.subr.bf16.mxu0 0
      %1521 = vmatpush1.bf16.msra.mxu0 0
      %1522 = vmatprep.subr.bf16.mxu0 0
      %1523 = vmatpush1.bf16.msra.mxu0 0
      %1524 = vmatprep.subr.bf16.mxu0 0
      %1525 = vmatpush1.bf16.msra.mxu0 0
      %1526 = vmatprep.subr.bf16.mxu0 0
      %1527 = vmatpush1.bf16.msra.mxu0 0
      %1528 = vmatprep.subr.bf16.mxu0 0
      %1529 = vmatpush1.bf16.msra.mxu0 0
      %1530 = vmatprep.subr.bf16.mxu0 0
      %1531 = vmatpush1.bf16.msra.mxu0 0
      %1532 = vmatprep.subr.bf16.mxu0 0
      %1533 = vmatpush1.bf16.msra.mxu0 0
      %1534 = vmatprep.subr.bf16.mxu0 0
      %1535 = vmatpush1.bf16.msra.mxu0 0
      %1536 = vmatprep.subr.bf16.mxu0 0
      %1537 = vmatpush1.bf16.msra.mxu0 0
      %1538 = vmatprep.subr.bf16.mxu0 0
      %1539 = vmatpush1.bf16.msra.mxu0 0
      %1540 = vmatprep.subr.bf16.mxu0 0
      %1541 = vmatpush1.bf16.msra.mxu0 0
      %1542 = vmatprep.subr.bf16.mxu0 0
      %1543 = vmatpush1.bf16.msra.mxu0 0
      %1544 = vmatprep.subr.bf16.mxu0 0
      %1545 = vmatpush1.bf16.msra.mxu0 0
      %1546 = vmatprep.subr.bf16.mxu0 0
      %1547 = vmatpush1.bf16.msra.mxu0 0
      %1548 = vmatprep.subr.bf16.mxu0 0
      %1549 = vmatpush1.bf16.msra.mxu0 0
      %1550 = vmatprep.mubr.bf16.mxu0 0
      %1551 = vmatmul.mubr.bf16.gmra.mrb[0].mxu0 %v1504
      %v1552 = vpop.f32.mrb[0].mxu0
      %v1553 = vadd.f32 0.0, %v1552
      %v1554 = vpop.f32.mrb[0].mxu0
      %v1555 = vadd.f32 0.0, %v1554
      %v1556 = vpop.f32.mrb[0].mxu0
      %v1557 = vadd.f32 0.0, %v1556
      %v1558 = vpop.f32.mrb[0].mxu0
      %v1559 = vadd.f32 0.0, %v1558
      %1560 = vmatprep.mubr.bf16.mxu0 0
      %1561 = vmatmul.mubr.bf16.gmra.mrb[0].mxu0 %v1507
      %v1562 = vpop.f32.mrb[0].mxu0
      %v1563 = vadd.f32 0.0, %v1562
      %v1564 = vpop.f32.mrb[0].mxu0
      %v1565 = vadd.f32 0.0, %v1564
      %v1566 = vpop.f32.mrb[0].mxu0
      %v1567 = vadd.f32 0.0, %v1566
      %v1568 = vpop.f32.mrb[0].mxu0
      %v1569 = vadd.f32 0.0, %v1568
      %1570 = vdwg.mxu0
      %1571 = vmatprep.subr.bf16.mxu0 0
      %1572 = vmatpush1.bf16.msra.mxu0 %v1516
      %1573 = vmatprep.subr.bf16.mxu0 0
      %1574 = vmatpush1.bf16.msra.mxu0 0
      %1575 = vmatprep.subr.bf16.mxu0 0
      %1576 = vmatpush1.bf16.msra.mxu0 0
      %1577 = vmatprep.subr.bf16.mxu0 0
      %1578 = vmatpush1.bf16.msra.mxu0 0
      %1579 = vmatprep.subr.bf16.mxu0 0
      %1580 = vmatpush1.bf16.msra.mxu0 0
      %1581 = vmatprep.subr.bf16.mxu0 0
      %1582 = vmatpush1.bf16.msra.mxu0 0
      %1583 = vmatprep.subr.bf16.mxu0 0
      %1584 = vmatpush1.bf16.msra.mxu0 0
      %1585 = vmatprep.subr.bf16.mxu0 0
      %1586 = vmatpush1.bf16.msra.mxu0 0
      %1587 = vmatprep.subr.bf16.mxu0 0
      %1588 = vmatpush1.bf16.msra.mxu0 0
      %1589 = vmatprep.subr.bf16.mxu0 0
      %1590 = vmatpush1.bf16.msra.mxu0 0
      %1591 = vmatprep.subr.bf16.mxu0 0
      %1592 = vmatpush1.bf16.msra.mxu0 0
      %1593 = vmatprep.subr.bf16.mxu0 0
      %1594 = vmatpush1.bf16.msra.mxu0 0
      %1595 = vmatprep.subr.bf16.mxu0 0
      %1596 = vmatpush1.bf16.msra.mxu0 0
      %1597 = vmatprep.subr.bf16.mxu0 0
      %1598 = vmatpush1.bf16.msra.mxu0 0
      %1599 = vmatprep.subr.bf16.mxu0 0
      %1600 = vmatpush1.bf16.msra.mxu0 0
      %1601 = vmatprep.subr.bf16.mxu0 0
      %1602 = vmatpush1.bf16.msra.mxu0 0
      %1603 = vmatprep.mubr.bf16.mxu0 0
      %1604 = vmatmul.mubr.bf16.gmra.mrb[0].mxu0 %v1504
      %v1605 = vpop.f32.mrb[0].mxu0
      %v1606 = vadd.f32 0.0, %v1605
      %v1607 = vpop.f32.mrb[0].mxu0
      %v1608 = vpop.f32.mrb[0].mxu0
      %v1609 = vadd.f32 0.0, %v1608
      %v1610 = vpop.f32.mrb[0].mxu0
      %1611 = vmatprep.mubr.bf16.mxu0 0
      %1612 = vmatmul.mubr.bf16.gmra.mrb[0].mxu0 %v1507
      %v1613 = vpop.f32.mrb[0].mxu0
      %v1614 = vadd.f32 0.0, %v1613
      %v1615 = vpop.f32.mrb[0].mxu0
      %v1616 = vpop.f32.mrb[0].mxu0
      %v1617 = vadd.f32 0.0, %v1616
      %v1618 = vpop.f32.mrb[0].mxu0
      %1619 = vdwg.mxu0
      %v1620 = vadd.f32 %v1456, %v1553
      %v1621 = vadd.f32 %v1457, %v1555
      %v1622 = vadd.f32 %v1458, %v1606
      %v1623 = vadd.f32 %v1459, %v1557
      %v1624 = vadd.f32 %v1460, %v1559
      %v1625 = vadd.f32 %v1461, %v1609
      %v1626 = vadd.f32 %v1462, %v1563
      %v1627 = vadd.f32 %v1463, %v1565
      %v1628 = vadd.f32 %v1464, %v1614
      %v1629 = vadd.f32 %v1465, %v1567
      %v1630 = vadd.f32 %v1466, %v1569
      %v1631 = vadd.f32 %v1467, %v1617
      %v1632 = vld [vmem:[%s2] sm:$0xff]
      %v1633 = vld [vmem:[%s2 + $0x8] sm:$0xff]
      %v1634 = vld [vmem:[%s2 + $0x10] sm:$0xff]
      %v1635 = vld [vmem:[%s2 + $0x18] sm:$0xff]
      %1637 = vset.pattern.permute.xlu0 0
      %1638 = vperm.xlu0 %1637, %v1632
      %v1639 = vpop.permute.xlu0 %1638
      %1642 = vset.pattern.permute.xlu0 0
      %1643 = vperm.xlu0 %1642, %v1633
      %v1644 = vpop.permute.xlu0 %1643
      %1647 = vset.pattern.permute.xlu0 0
      %1648 = vperm.xlu0 %1647, %v1634
      %v1649 = vpop.permute.xlu0 %1648
      %1652 = vset.pattern.permute.xlu0 0
      %1653 = vperm.xlu0 %1652, %v1635
      %v1654 = vpop.permute.xlu0 %1653
      %v1656 = vmul.f32 %v1620, %v1639
      %v1657 = vmul.f32 %v1621, %v1639
      %v1658 = vmul.f32 %v1622, %v1639
      %v1659 = vmul.f32 %v1623, %v1644
      %v1660 = vmul.f32 %v1624, %v1644
      %v1661 = vmul.f32 %v1625, %v1644
      %v1662 = vmul.f32 %v1626, %v1649
      %v1663 = vmul.f32 %v1627, %v1649
      %v1664 = vmul.f32 %v1628, %v1649
      %v1665 = vmul.f32 %v1629, %v1654
      %v1666 = vmul.f32 %v1630, %v1654
      %v1667 = vmul.f32 %v1631, %v1654
      %v1668 = vld [vmem:[%s3] sm:$0xff]
      %v1669 = vld [vmem:[%s3 + $0x8] sm:$0xff]
      %v1670 = vld [vmem:[%s3 + $0x10] sm:$0xff]
      %v1671 = vld [vmem:[%s3 + $0x18] sm:$0xff]
      %1673 = vset.pattern.permute.xlu0 0
      %1674 = vperm.xlu0 %1673, %v1668
      %v1675 = vpop.permute.xlu0 %1674
      %1678 = vset.pattern.permute.xlu0 0
      %1679 = vperm.xlu0 %1678, %v1669
      %v1680 = vpop.permute.xlu0 %1679
      %1683 = vset.pattern.permute.xlu0 0
      %1684 = vperm.xlu0 %1683, %v1670
      %v1685 = vpop.permute.xlu0 %1684
      %1688 = vset.pattern.permute.xlu0 0
      %1689 = vperm.xlu0 %1688, %v1671
      %v1690 = vpop.permute.xlu0 %1689
      %v1692 = vadd.f32 %v1656, %v1675
      %v1693 = vadd.f32 %v1657, %v1675
      %v1694 = vadd.f32 %v1658, %v1675
      %v1695 = vadd.f32 %v1659, %v1680
      %v1696 = vadd.f32 %v1660, %v1680
      %v1697 = vadd.f32 %v1661, %v1680
      %v1698 = vadd.f32 %v1662, %v1685
      %v1699 = vadd.f32 %v1663, %v1685
      %v1700 = vadd.f32 %v1664, %v1685
      %v1701 = vadd.f32 %v1665, %v1690
      %v1702 = vadd.f32 %v1666, %v1690
      %v1703 = vadd.f32 %v1667, %v1690
      %v1704 = vmax.f32 %v1692, 0.0
      %v1705 = vmax.f32 %v1693, 0.0
      %v1706 = vmax.f32 %v1694, 0.0
      %v1707 = vmax.f32 %v1695, 0.0
      %v1708 = vmax.f32 %v1696, 0.0
      %v1709 = vmax.f32 %v1697, 0.0
      %v1710 = vmax.f32 %v1698, 0.0
      %v1711 = vmax.f32 %v1699, 0.0
      %v1712 = vmax.f32 %v1700, 0.0
      %v1713 = vmax.f32 %v1701, 0.0
      %v1714 = vmax.f32 %v1702, 0.0
      %v1715 = vmax.f32 %v1703, 0.0
      %v1716 = vpack.c.bf16 %v1707, %v1704
      %v1717 = vpack.c.bf16 %v1708, %v1705
      %v1718 = vpack.c.bf16 %v1709, %v1706
      %v1719 = vpack.c.bf16 %v1713, %v1710
      %v1720 = vpack.c.bf16 %v1714, %v1711
      %v1721 = vpack.c.bf16 %v1715, %v1712
      %v1728 = vunpack.c.l.b16 %v1716
      %v1729 = vunpack.c.l.b16 %v1717
      %v1730 = vunpack.c.l.b16 %v1718
      %v1731 = vunpack.c.h.b16 %v1716
      %v1732 = vunpack.c.h.b16 %v1717
      %v1733 = vunpack.c.h.b16 %v1718
      %v1734 = vunpack.c.l.b16 %v1719
      %v1735 = vunpack.c.l.b16 %v1720
      %v1736 = vunpack.c.l.b16 %v1721
      %v1737 = vunpack.c.h.b16 %v1719
      %v1738 = vunpack.c.h.b16 %v1720
      %v1739 = vunpack.c.h.b16 %v1721
      %v1740 = vpack.c.b16 %v1729, %v1728
      %v1741 = vpack.c.b16 %v1730, %v1730
      %v1742 = vpack.c.b16 %v1732, %v1731
      %v1743 = vpack.c.b16 %v1733, %v1733
      %v1744 = vpack.c.b16 %v1735, %v1734
      %v1745 = vpack.c.b16 %v1736, %v1736
      %v1746 = vpack.c.b16 %v1738, %v1737
      %v1747 = vpack.c.b16 %v1739, %v1739
      %1756 = vst [vmem:[%s197] sm:$0xff] %v1740
      %vm1757 = vcmask 257024
      %1758 = vst.msk [vmem:[%s197 + $0x8] sm:$0xf] %vm1757, %v1741
      %1759 = vst [vmem:[%s197 + $0xc] sm:$0xff] %v1742
      %1760 = vst.msk [vmem:[%s197 + $0x14] sm:$0xf] %vm1757, %v1743
      %1761 = vst [vmem:[%s197 + $0x18] sm:$0xff] %v1744
      %1762 = vst.msk [vmem:[%s197 + $0x20] sm:$0xf] %vm1757, %v1745
      %1763 = vst [vmem:[%s197 + $0x24] sm:$0xff] %v1746
      %1764 = vst.msk [vmem:[%s197 + $0x2c] sm:$0xf] %vm1757, %v1747
      %p1765 = scmp.lt.s32.totalorder %s15, 1
      %s1766 = scalar_select %p1765, %s15, 1
      %s1767 = smul.addr %s1766, 12
      %s1768 = smul.addr %s1767, 4
      %s1769 = scalar_lea.vmem %s4, %s1768
      // Predicated region
      $region37: #{_lambda_.2} parent=35 // pred_check
        %p1770 = pneg %p122
      $region38: #{_lambda_.2} parent=35 // pred_check_branch
        %1772 = sbr.rel (%p1770) target = $region40
      $region39: #{_lambda_.2} parent=35 // pred_region
        _
      $region40: #{_lambda_.2} parent=35 // pred_fallthru
        _
    $region36: #{_lambda_.2} parent=5 // pred_fallthru
      _
    %p1773 = scmp.le.s32.totalorder 2, %s10
    // Predicated region
    $region41: #{_lambda_.2} parent=5 // pred_check
      %p1774 = pneg %p1773
    $region42: #{_lambda_.2} parent=5 // pred_check_branch
      %1776 = sbr.rel (%p1774) target = $region44
    $region43: #{_lambda_.2} parent=5 // pred_region
      %s1777 = ssub.s32 %s10, 2
      // Predicated region
      $region45: #{_lambda_.2} parent=43 // pred_check
        %p1778 = pneg %p128
      $region46: #{_lambda_.2} parent=43 // pred_check_branch
        %1780 = sbr.rel (%p1778) target = $region48
      $region47: #{_lambda_.2} parent=43 // pred_region
        %p1781 = scmp.lt.s32.totalorder %s16, 1
        %s1782 = scalar_select %p1781, %s16, 1
        %s1783 = smul.addr %s1782, 12
        %s1784 = smul.addr %s1783, 4
        %s1785 = scalar_lea.vmem %s4, %s1784
      $region48: #{_lambda_.2} parent=43 // pred_fallthru
        _
    $region44: #{_lambda_.2} parent=5 // pred_fallthru
      _
  $region6: #{_lambda_.2} parent=0 // loop_footer
    %s14 = sadd.s32 1, %s10
  $region7: #{_lambda_.2} parent=0 // loop_footer_branch
    %9 = sbr.rel target = $region3
  $region8: #{_lambda_.2} parent=0 // loop_exit
    _

// kernel: _lambda_.3
$region0: #{_lambda_.3}
  #allocation0 [shape = 'u32[]', space=smem, size = 0x4, offset = 0x4, fixed_abs, tag = 'smem constant byte address 0x4 - core index']
  #allocation1 [shape = 'u32[144,128]{1,0:T(1,128)}', space=vmem, size = 0x12000, scoped, tag = 'internal scratch']
  %s0 = inlined_call_operand.vmem [shape: bf16[2,32,342], index: 0, kind: input, shape index: {}]
  %s1 = inlined_call_operand.vmem [shape: bf16[9,32,32], index: 1, kind: input, shape index: {}]
  %s2 = inlined_call_operand.vmem [shape: f32[32,1], index: 2, kind: input, shape index: {}]
  %s3 = inlined_call_operand.vmem [shape: f32[32,1], index: 3, kind: input, shape index: {}]
  %s4 = inlined_call_operand.vmem [shape: f32[2,32,288], index: 4, kind: output, shape index: {}]
  %s5 = sld [smem:[#allocation0]]
  $region49: #{_lambda_.3} parent=0
    _
  %s7 = ssub.s32 1, %s5
  %s8 = scalar_select 0, %s7, %s5
  loop: start=0, step=1, limit=4
  $region2: #{_lambda_.3} parent=0 // loop_pre_header
    _
  $region3: #{_lambda_.3} parent=0 // loop_header
    %s10 = sphi 0, %s14
    %p11 = scmp.ge.s32.totalorder %s10, 4
    %s20 = sphi 0, %s22
    %s23 = sphi 0, %s20
    %s24 = sphi 0, %s23
    %s40 = sphi 0, %s24
    %s44 = sphi 0, %s44
    %s46 = sphi 0, %s44
    %s47 = sphi 0, %s46
    %s61 = sphi 0, %s47
    %s65 = sphi 0, %s65
    %s67 = sphi 0, %s65
    %s68 = sphi 0, %s67
    %s82 = sphi 0, %s68
    %s86 = sphi 0, %s86
    %s88 = sphi 0, %s86
    %s89 = sphi 0, %s88
    %s103 = sphi 0, %s89
    %s109 = sphi 0, %s111
    %s112 = sphi 0, %s109
    %s113 = sphi 0, %s112
    %s129 = sphi 0, %s113
  $region4: #{_lambda_.3} parent=0 // loop_header_branch
    %13 = sbr.rel (%p11) target = $region8
  $region5: #{_lambda_.3} parent=0 // loop_body
    %s15 = ssub.s32 %s10, 1
    %s16 = ssub.s32 %s10, 2
    %s17 = sadd.s32 %s10, 1
    %s18 = ssub.s32 %s10, %s17
    %p19 = scmp.eq.s32.totalorder %s18, 0
    %s21 = sadd.s32 %s20, 1
    %s22 = scalar_select %p19, %s20, %s21
    %p25 = pneg %p19
    %p26 = scmp.eq.s32.totalorder %s10, 1
    %p27 = por %p25, %p26
    %p28 = scmp.ne.s32.totalorder %s20, %s23
    %p29 = scmp.eq.s32.totalorder %s10, 0
    %p30 = por %p28, %p29
    %p31 = scmp.ne.s32.totalorder %s20, %s23
    %p32 = scmp.eq.s32.totalorder %s15, 1
    %p33 = por %p31, %p32
    %p34 = scmp.ne.s32.totalorder %s23, %s24
    %p35 = scmp.eq.s32.totalorder %s15, 0
    %p36 = por %p34, %p35
    %p37 = scmp.ne.s32.totalorder %s23, %s24
    %p38 = scmp.eq.s32.totalorder %s16, 1
    %p39 = por %p37, %p38
    %p41 = scmp.ne.s32.totalorder %s24, %s40
    %p42 = scmp.eq.s32.totalorder %s16, 0
    %p43 = por %p41, %p42
    %s45 = sadd.s32 %s44, 1
    %p48 = scmp.eq.s32.totalorder %s10, 1
    %p49 = scmp.ne.s32.totalorder %s44, %s46
    %p50 = scmp.eq.s32.totalorder %s10, 0
    %p51 = por %p49, %p50
    %p52 = scmp.ne.s32.totalorder %s44, %s46
    %p53 = scmp.eq.s32.totalorder %s15, 1
    %p54 = por %p52, %p53
    %p55 = scmp.ne.s32.totalorder %s46, %s47
    %p56 = scmp.eq.s32.totalorder %s15, 0
    %p57 = por %p55, %p56
    %p58 = scmp.ne.s32.totalorder %s46, %s47
    %p59 = scmp.eq.s32.totalorder %s16, 1
    %p60 = por %p58, %p59
    %p62 = scmp.ne.s32.totalorder %s47, %s61
    %p63 = scmp.eq.s32.totalorder %s16, 0
    %p64 = por %p62, %p63
    %s66 = sadd.s32 %s65, 1
    %p69 = scmp.eq.s32.totalorder %s10, 1
    %p70 = scmp.ne.s32.totalorder %s65, %s67
    %p71 = scmp.eq.s32.totalorder %s10, 0
    %p72 = por %p70, %p71
    %p73 = scmp.ne.s32.totalorder %s65, %s67
    %p74 = scmp.eq.s32.totalorder %s15, 1
    %p75 = por %p73, %p74
    %p76 = scmp.ne.s32.totalorder %s67, %s68
    %p77 = scmp.eq.s32.totalorder %s15, 0
    %p78 = por %p76, %p77
    %p79 = scmp.ne.s32.totalorder %s67, %s68
    %p80 = scmp.eq.s32.totalorder %s16, 1
    %p81 = por %p79, %p80
    %p83 = scmp.ne.s32.totalorder %s68, %s82
    %p84 = scmp.eq.s32.totalorder %s16, 0
    %p85 = por %p83, %p84
    %s87 = sadd.s32 %s86, 1
    %p90 = scmp.eq.s32.totalorder %s10, 1
    %p91 = scmp.ne.s32.totalorder %s86, %s88
    %p92 = scmp.eq.s32.totalorder %s10, 0
    %p93 = por %p91, %p92
    %p94 = scmp.ne.s32.totalorder %s86, %s88
    %p95 = scmp.eq.s32.totalorder %s15, 1
    %p96 = por %p94, %p95
    %p97 = scmp.ne.s32.totalorder %s88, %s89
    %p98 = scmp.eq.s32.totalorder %s15, 0
    %p99 = por %p97, %p98
    %p100 = scmp.ne.s32.totalorder %s88, %s89
    %p101 = scmp.eq.s32.totalorder %s16, 1
    %p102 = por %p100, %p101
    %p104 = scmp.ne.s32.totalorder %s89, %s103
    %p105 = scmp.eq.s32.totalorder %s16, 0
    %p106 = por %p104, %p105
    %s107 = ssub.s32 %s10, %s17
    %p108 = scmp.eq.s32.totalorder %s107, 0
    %s110 = sadd.s32 %s109, 1
    %s111 = scalar_select %p108, %s109, %s110
    %p114 = pneg %p108
    %p115 = scmp.eq.s32.totalorder %s10, 1
    %p116 = por %p114, %p115
    %p117 = scmp.ne.s32.totalorder %s109, %s112
    %p118 = scmp.eq.s32.totalorder %s10, 0
    %p119 = por %p117, %p118
    %p120 = scmp.ne.s32.totalorder %s109, %s112
    %p121 = scmp.eq.s32.totalorder %s15, 1
    %p122 = por %p120, %p121
    %p123 = scmp.ne.s32.totalorder %s112, %s113
    %p124 = scmp.eq.s32.totalorder %s15, 0
    %p125 = por %p123, %p124
    %p126 = scmp.ne.s32.totalorder %s112, %s113
    %p127 = scmp.eq.s32.totalorder %s16, 1
    %p128 = por %p126, %p127
    %p130 = scmp.ne.s32.totalorder %s113, %s129
    %p131 = scmp.eq.s32.totalorder %s16, 0
    %p132 = por %p130, %p131
    %p133 = scmp.le.s32.totalorder 1, %s10
    %p134 = scmp.lt.s32.totalorder %s10, 3
    %p135 = pnand %p133, %p134
    %p136 = pneg %p135
    // Predicated region
    $region9: #{_lambda_.3} parent=5 // pred_check
      _
    $region10: #{_lambda_.3} parent=5 // pred_check_branch
      %138 = sbr.rel (%p135) target = $region12
    $region11: #{_lambda_.3} parent=5 // pred_region
      %s139 = ssub.s32 %s10, 1
      // Predicated region
      $region13: #{_lambda_.3} parent=11 // pred_check
        %p140 = pneg %p57
      $region14: #{_lambda_.3} parent=11 // pred_check_branch
        %142 = sbr.rel (%p140) target = $region16
      $region15: #{_lambda_.3} parent=11 // pred_region
        _
      $region16: #{_lambda_.3} parent=11 // pred_fallthru
        _
      // Predicated region
      $region17: #{_lambda_.3} parent=11 // pred_check
        %p143 = pneg %p78
      $region18: #{_lambda_.3} parent=11 // pred_check_branch
        %145 = sbr.rel (%p143) target = $region20
      $region19: #{_lambda_.3} parent=11 // pred_region
        _
      $region20: #{_lambda_.3} parent=11 // pred_fallthru
        _
      // Predicated region
      $region21: #{_lambda_.3} parent=11 // pred_check
        %p146 = pneg %p99
      $region22: #{_lambda_.3} parent=11 // pred_check_branch
        %148 = sbr.rel (%p146) target = $region24
      $region23: #{_lambda_.3} parent=11 // pred_region
        _
      $region24: #{_lambda_.3} parent=11 // pred_fallthru
        _
    $region12: #{_lambda_.3} parent=5 // pred_fallthru
      _
    %p149 = scmp.lt.s32.totalorder %s10, 2
    // Predicated region
    $region25: #{_lambda_.3} parent=5 // pred_check
      %p150 = pneg %p149
    $region26: #{_lambda_.3} parent=5 // pred_check_branch
      %152 = sbr.rel (%p150) target = $region28
    $region27: #{_lambda_.3} parent=5 // pred_region
      // Predicated region
      $region29: #{_lambda_.3} parent=27 // pred_check
        %p153 = pneg %p30
      $region30: #{_lambda_.3} parent=27 // pred_check_branch
        %155 = sbr.rel (%p153) target = $region32
      $region31: #{_lambda_.3} parent=27 // pred_region
        %p156 = scmp.lt.s32.totalorder %s10, 1
        %s157 = scalar_select %p156, %s10, 1
        %s158 = smul.addr %s157, 12
        %s159 = smul.addr %s158, 4
        %s160 = scalar_lea.vmem %s0, %s159
      $region32: #{_lambda_.3} parent=27 // pred_fallthru
        _
    $region28: #{_lambda_.3} parent=5 // pred_fallthru
      _
    %p161 = scmp.le.s32.totalorder 1, %s10
    %p162 = scmp.lt.s32.totalorder %s10, 3
    %p163 = pnand %p161, %p162
    %p164 = pneg %p163
    // Predicated region
    $region33: #{_lambda_.3} parent=5 // pred_check
      _
    $region34: #{_lambda_.3} parent=5 // pred_check_branch
      %166 = sbr.rel (%p163) target = $region36
    $region35: #{_lambda_.3} parent=5 // pred_region
      %s167 = ssub.s32 %s10, 1
      %p168 = scmp.lt.s32.totalorder %s15, 1
      %s169 = scalar_select %p168, %s15, 1
      %s170 = smul.addr %s169, 12
      %s171 = smul.addr %s170, 4
      %s172 = scalar_lea.vmem %s0, %s171
      %p173 = pneg %p36
      %p174 = pneg %p33
      %p175 = pneg %p57
      %p176 = pneg %p54
      %p177 = pneg %p78
      %p178 = pneg %p75
      %p179 = pneg %p99
      %p180 = pneg %p96
      %p181 = pneg %p125
      %p182 = pneg %p122
      %p183 = scmp.lt.s32.totalorder %s15, 1
      %s184 = scalar_select %p183, %s15, 1
      %s185 = smul.addr %s184, 12
      %s186 = smul.addr %s185, 8
      %s187 = scalar_lea.vmem %s4, %s186
      %p188 = scmp.lt.s32.totalorder %s15, 1
      %s189 = scalar_select %p188, %s15, 1
      %s190 = smul.addr %s189, 12
      %s191 = smul.addr %s190, 4
      %s192 = scalar_lea.vmem %s0, %s191
      %p193 = scmp.lt.s32.totalorder %s15, 1
      %s194 = scalar_select %p193, %s15, 1
      %s195 = smul.addr %s194, 12
      %s196 = smul.addr %s195, 8
      %s197 = scalar_lea.vmem %s4, %s196
      %v199 = vld [vmem:[%s192] sm:$0xff]
      %v200 = vld [vmem:[%s192 + $0x8] sm:$0xf]
      %v201 = vld [vmem:[%s192 + $0xc] sm:$0xff]
      %v202 = vld [vmem:[%s192 + $0x14] sm:$0xf]
      %v203 = vld [vmem:[%s192 + $0x18] sm:$0xff]
      %v204 = vld [vmem:[%s192 + $0x20] sm:$0xf]
      %v205 = vld [vmem:[%s192 + $0x24] sm:$0xff]
      %v206 = vld [vmem:[%s192 + $0x2c] sm:$0xf]
      %v207 = vld [vmem:[%s1] sm:$0xf]
      %v208 = vld [vmem:[%s1 + $0x4] sm:$0xf]
      %v209 = vld [vmem:[%s1 + $0x8] sm:$0xf]
      %v210 = vld [vmem:[%s1 + $0xc] sm:$0xf]
      %s211 = scalar_lea.vmem %s1, 16
      %v212 = vld [vmem:[%s211] sm:$0xf]
      %v213 = vld [vmem:[%s211 + $0x4] sm:$0xf]
      %v214 = vld [vmem:[%s211 + $0x8] sm:$0xf]
      %v215 = vld [vmem:[%s211 + $0xc] sm:$0xf]
      %v220 = vunpack.c.l.b16 %v212
      %v221 = vunpack.c.l.b16 %v213
      %v222 = vunpack.c.l.b16 %v214
      %v223 = vunpack.c.l.b16 %v215
      %v224 = vpack.c.b16 %v221, %v220
      %v225 = vpack.c.b16 %v223, %v222
      %v234 = vunpack.c.l.b16 %v199
      %v235 = vunpack.c.h.b16 %v199
      %v236 = vunpack.c.l.b16 %v200
      %v237 = vunpack.c.l.b16 %v201
      %v238 = vunpack.c.h.b16 %v201
      %v239 = vunpack.c.l.b16 %v202
      %v240 = vunpack.c.l.b16 %v203
      %v241 = vunpack.c.h.b16 %v203
      %v242 = vunpack.c.l.b16 %v204
      %v243 = vunpack.c.l.b16 %v205
      %v244 = vunpack.c.h.b16 %v205
      %v245 = vunpack.c.l.b16 %v206
      %v246 = vpack.c.b16 %v237, %v234
      %v247 = vpack.c.b16 %v238, %v235
      %v248 = vpack.c.b16 %v239, %v236
      %v249 = vpack.c.b16 %v243, %v240
      %v250 = vpack.c.b16 %v244, %v241
      %v251 = vpack.c.b16 %v245, %v242
      %252 = vrot.lane.b32.xlu0 %v246, 127
      %v253 = vpop.permute.xlu0 %252
      %254 = vrot.lane.b32.xlu0 %v247, 127
      %v255 = vpop.permute.xlu0 %254
      %256 = vrot.lane.b32.xlu0 %v248, 127
      %v257 = vpop.permute.xlu0 %256
      %258 = vrot.lane.b32.xlu0 %v249, 127
      %v259 = vpop.permute.xlu0 %258
      %260 = vrot.lane.b32.xlu0 %v250, 127
      %v261 = vpop.permute.xlu0 %260
      %262 = vrot.lane.b32.xlu0 %v251, 127
      %v263 = vpop.permute.xlu0 %262
      %vm264 = vcmask 1039360
      %v265 = vsel %vm264, %v253, %v255
      %v266 = vsel %vm264, %v255, %v257
      %v267 = vsel %vm264, %v259, %v261
      %v268 = vsel %vm264, %v261, %v263
      %vm275 = vcmask 261120
      %v277 = vsel %vm275, %v224, 0
      %v280 = vsel %vm275, %v225, 0
      %282 = vmatprep.subr.bf16.mxu0 %v266
      %283 = vmatpush1.bf16.msra.mxu0 %v265
      %284 = vmatprep.subr.bf16.mxu0 %v268
      %285 = vmatpush1.bf16.msra.mxu0 %v267
      %286 = vmatprep.subr.bf16.mxu0 0
      %287 = vmatpush1.bf16.msra.mxu0 0
      %288 = vmatprep.subr.bf16.mxu0 0
      %289 = vmatpush1.bf16.msra.mxu0 0
      %290 = vmatprep.subr.bf16.mxu0 0
      %291 = vmatpush1.bf16.msra.mxu0 0
      %292 = vmatprep.subr.bf16.mxu0 0
      %293 = vmatpush1.bf16.msra.mxu0 0
      %294 = vmatprep.subr.bf16.mxu0 0
      %295 = vmatpush1.bf16.msra.mxu0 0
      %296 = vmatprep.subr.bf16.mxu0 0
      %297 = vmatpush1.bf16.msra.mxu0 0
      %298 = vmatprep.subr.bf16.mxu0 0
      %299 = vmatpush1.bf16.msra.mxu0 0
      %300 = vmatprep.subr.bf16.mxu0 0
      %301 = vmatpush1.bf16.msra.mxu0 0
      %302 = vmatprep.subr.bf16.mxu0 0
      %303 = vmatpush1.bf16.msra.mxu0 0
      %304 = vmatprep.subr.bf16.mxu0 0
      %305 = vmatpush1.bf16.msra.mxu0 0
      %306 = vmatprep.subr.bf16.mxu0 0
      %307 = vmatpush1.bf16.msra.mxu0 0
      %308 = vmatprep.subr.bf16.mxu0 0
      %309 = vmatpush1.bf16.msra.mxu0 0
      %310 = vmatprep.subr.bf16.mxu0 0
      %311 = vmatpush1.bf16.msra.mxu0 0
      %312 = vmatprep.subr.bf16.mxu0 0
      %313 = vmatpush1.bf16.msra.mxu0 0
      %314 = vmatprep.mubr.bf16.mxu0 0
      %315 = vmatmul.mubr.bf16.gmra.mrb[0].mxu0 %v277
      %v316 = vpop.f32.mrb[0].mxu0
      %v317 = vadd.f32 0.0, %v316
      %v318 = vpop.f32.mrb[0].mxu0
      %v319 = vadd.f32 0.0, %v318
      %v320 = vpop.f32.mrb[0].mxu0
      %v321 = vadd.f32 0.0, %v320
      %v322 = vpop.f32.mrb[0].mxu0
      %v323 = vadd.f32 0.0, %v322
      %324 = vmatprep.mubr.bf16.mxu0 0
      %325 = vmatmul.mubr.bf16.gmra.mrb[0].mxu0 %v280
      %v326 = vpop.f32.mrb[0].mxu0
      %v327 = vadd.f32 0.0, %v326
      %v328 = vpop.f32.mrb[0].mxu0
      %v329 = vadd.f32 0.0, %v328
      %v330 = vpop.f32.mrb[0].mxu0
      %v331 = vadd.f32 0.0, %v330
      %v332 = vpop.f32.mrb[0].mxu0
      %v333 = vadd.f32 0.0, %v332
      %334 = vdwg.mxu0
      %335 = vmatprep.subr.bf16.mxu0 0
      %336 = vmatpush1.bf16.msra.mxu0 %v257
      %337 = vmatprep.subr.bf16.mxu0 0
      %338 = vmatpush1.bf16.msra.mxu0 %v263
      %339 = vmatprep.subr.bf16.mxu0 0
      %340 = vmatpush1.bf16.msra.mxu0 0
      %341 = vmatprep.subr.bf16.mxu0 0
      %342 = vmatpush1.bf16.msra.mxu0 0
      %343 = vmatprep.subr.bf16.mxu0 0
      %344 = vmatpush1.bf16.msra.mxu0 0
      %345 = vmatprep.subr.bf16.mxu0 0
      %346 = vmatpush1.bf16.msra.mxu0 0
      %347 = vmatprep.subr.bf16.mxu0 0
      %348 = vmatpush1.bf16.msra.mxu0 0
      %349 = vmatprep.subr.bf16.mxu0 0
      %350 = vmatpush1.bf16.msra.mxu0 0
      %351 = vmatprep.subr.bf16.mxu0 0
      %352 = vmatpush1.bf16.msra.mxu0 0
      %353 = vmatprep.subr.bf16.mxu0 0
      %354 = vmatpush1.bf16.msra.mxu0 0
      %355 = vmatprep.subr.bf16.mxu0 0
      %356 = vmatpush1.bf16.msra.mxu0 0
      %357 = vmatprep.subr.bf16.mxu0 0
      %358 = vmatpush1.bf16.msra.mxu0 0
      %359 = vmatprep.subr.bf16.mxu0 0
      %360 = vmatpush1.bf16.msra.mxu0 0
      %361 = vmatprep.subr.bf16.mxu0 0
      %362 = vmatpush1.bf16.msra.mxu0 0
      %363 = vmatprep.subr.bf16.mxu0 0
      %364 = vmatpush1.bf16.msra.mxu0 0
      %365 = vmatprep.subr.bf16.mxu0 0
      %366 = vmatpush1.bf16.msra.mxu0 0
      %367 = vmatprep.mubr.bf16.mxu0 0
      %368 = vmatmul.mubr.bf16.gmra.mrb[0].mxu0 %v277
      %v369 = vpop.f32.mrb[0].mxu0
      %v370 = vadd.f32 0.0, %v369
      %v371 = vpop.f32.mrb[0].mxu0
      %v372 = vpop.f32.mrb[0].mxu0
      %v373 = vadd.f32 0.0, %v372
      %v374 = vpop.f32.mrb[0].mxu0
      %375 = vmatprep.mubr.bf16.mxu0 0
      %376 = vmatmul.mubr.bf16.gmra.mrb[0].mxu0 %v280
      %v377 = vpop.f32.mrb[0].mxu0
      %v378 = vadd.f32 0.0, %v377
      %v379 = vpop.f32.mrb[0].mxu0
      %v380 = vpop.f32.mrb[0].mxu0
      %v381 = vadd.f32 0.0, %v380
      %v382 = vpop.f32.mrb[0].mxu0
      %383 = vdwg.mxu0
      %v388 = vunpack.c.l.b16 %v207
      %v389 = vunpack.c.l.b16 %v208
      %v390 = vunpack.c.l.b16 %v209
      %v391 = vunpack.c.l.b16 %v210
      %v392 = vpack.c.b16 %v389, %v388
      %v393 = vpack.c.b16 %v391, %v390
      %v401 = vsel %vm275, %v392, 0
      %v404 = vsel %vm275, %v393, 0
      %406 = vmatprep.subr.bf16.mxu0 %v247
      %407 = vmatpush1.bf16.msra.mxu0 %v246
      %408 = vmatprep.subr.bf16.mxu0 %v250
      %409 = vmatpush1.bf16.msra.mxu0 %v249
      %410 = vmatprep.subr.bf16.mxu0 0
      %411 = vmatpush1.bf16.msra.mxu0 0
      %412 = vmatprep.subr.bf16.mxu0 0
      %413 = vmatpush1.bf16.msra.mxu0 0
      %414 = vmatprep.subr.bf16.mxu0 0
      %415 = vmatpush1.bf16.msra.mxu0 0
      %416 = vmatprep.subr.bf16.mxu0 0
      %417 = vmatpush1.bf16.msra.mxu0 0
      %418 = vmatprep.subr.bf16.mxu0 0
      %419 = vmatpush1.bf16.msra.mxu0 0
      %420 = vmatprep.subr.bf16.mxu0 0
      %421 = vmatpush1.bf16.msra.mxu0 0
      %422 = vmatprep.subr.bf16.mxu0 0
      %423 = vmatpush1.bf16.msra.mxu0 0
      %424 = vmatprep.subr.bf16.mxu0 0
      %425 = vmatpush1.bf16.msra.mxu0 0
      %426 = vmatprep.subr.bf16.mxu0 0
      %427 = vmatpush1.bf16.msra.mxu0 0
      %428 = vmatprep.subr.bf16.mxu0 0
      %429 = vmatpush1.bf16.msra.mxu0 0
      %430 = vmatprep.subr.bf16.mxu0 0
      %431 = vmatpush1.bf16.msra.mxu0 0
      %432 = vmatprep.subr.bf16.mxu0 0
      %433 = vmatpush1.bf16.msra.mxu0 0
      %434 = vmatprep.subr.bf16.mxu0 0
      %435 = vmatpush1.bf16.msra.mxu0 0
      %436 = vmatprep.subr.bf16.mxu0 0
      %437 = vmatpush1.bf16.msra.mxu0 0
      %438 = vmatprep.mubr.bf16.mxu0 0
      %439 = vmatmul.mubr.bf16.gmra.mrb[0].mxu0 %v401
      %v440 = vpop.f32.mrb[0].mxu0
      %v441 = vadd.f32 %v317, %v440
      %v442 = vpop.f32.mrb[0].mxu0
      %v443 = vadd.f32 %v319, %v442
      %v444 = vpop.f32.mrb[0].mxu0
      %v445 = vadd.f32 %v321, %v444
      %v446 = vpop.f32.mrb[0].mxu0
      %v447 = vadd.f32 %v323, %v446
      %448 = vmatprep.mubr.bf16.mxu0 0
      %449 = vmatmul.mubr.bf16.gmra.mrb[0].mxu0 %v404
      %v450 = vpop.f32.mrb[0].mxu0
      %v451 = vadd.f32 %v327, %v450
      %v452 = vpop.f32.mrb[0].mxu0
      %v453 = vadd.f32 %v329, %v452
      %v454 = vpop.f32.mrb[0].mxu0
      %v455 = vadd.f32 %v331, %v454
      %v456 = vpop.f32.mrb[0].mxu0
      %v457 = vadd.f32 %v333, %v456
      %458 = vdwg.mxu0
      %459 = vmatprep.subr.bf16.mxu0 0
      %460 = vmatpush1.bf16.msra.mxu0 %v248
      %461 = vmatprep.subr.bf16.mxu0 0
      %462 = vmatpush1.bf16.msra.mxu0 %v251
      %463 = vmatprep.subr.bf16.mxu0 0
      %464 = vmatpush1.bf16.msra.mxu0 0
      %465 = vmatprep.subr.bf16.mxu0 0
      %466 = vmatpush1.bf16.msra.mxu0 0
      %467 = vmatprep.subr.bf16.mxu0 0
      %468 = vmatpush1.bf16.msra.mxu0 0
      %469 = vmatprep.subr.bf16.mxu0 0
      %470 = vmatpush1.bf16.msra.mxu0 0
      %471 = vmatprep.subr.bf16.mxu0 0
      %472 = vmatpush1.bf16.msra.mxu0 0
      %473 = vmatprep.subr.bf16.mxu0 0
      %474 = vmatpush1.bf16.msra.mxu0 0
      %475 = vmatprep.subr.bf16.mxu0 0
      %476 = vmatpush1.bf16.msra.mxu0 0
      %477 = vmatprep.subr.bf16.mxu0 0
      %478 = vmatpush1.bf16.msra.mxu0 0
      %479 = vmatprep.subr.bf16.mxu0 0
      %480 = vmatpush1.bf16.msra.mxu0 0
      %481 = vmatprep.subr.bf16.mxu0 0
      %482 = vmatpush1.bf16.msra.mxu0 0
      %483 = vmatprep.subr.bf16.mxu0 0
      %484 = vmatpush1.bf16.msra.mxu0 0
      %485 = vmatprep.subr.bf16.mxu0 0
      %486 = vmatpush1.bf16.msra.mxu0 0
      %487 = vmatprep.subr.bf16.mxu0 0
      %488 = vmatpush1.bf16.msra.mxu0 0
      %489 = vmatprep.subr.bf16.mxu0 0
      %490 = vmatpush1.bf16.msra.mxu0 0
      %491 = vmatprep.mubr.bf16.mxu0 0
      %492 = vmatmul.mubr.bf16.gmra.mrb[0].mxu0 %v401
      %v493 = vpop.f32.mrb[0].mxu0
      %v494 = vadd.f32 %v370, %v493
      %v495 = vpop.f32.mrb[0].mxu0
      %v496 = vpop.f32.mrb[0].mxu0
      %v497 = vadd.f32 %v373, %v496
      %v498 = vpop.f32.mrb[0].mxu0
      %499 = vmatprep.mubr.bf16.mxu0 0
      %500 = vmatmul.mubr.bf16.gmra.mrb[0].mxu0 %v404
      %v501 = vpop.f32.mrb[0].mxu0
      %v502 = vadd.f32 %v378, %v501
      %v503 = vpop.f32.mrb[0].mxu0
      %v504 = vpop.f32.mrb[0].mxu0
      %v505 = vadd.f32 %v381, %v504
      %v506 = vpop.f32.mrb[0].mxu0
      %507 = vdwg.mxu0
      %s508 = scalar_lea.vmem %s1, 32
      %v509 = vld [vmem:[%s508] sm:$0xf]
      %v510 = vld [vmem:[%s508 + $0x4] sm:$0xf]
      %v511 = vld [vmem:[%s508 + $0x8] sm:$0xf]
      %v512 = vld [vmem:[%s508 + $0xc] sm:$0xf]
      %v517 = vunpack.c.l.b16 %v509
      %v518 = vunpack.c.l.b16 %v510
      %v519 = vunpack.c.l.b16 %v511
      %v520 = vunpack.c.l.b16 %v512
      %v521 = vpack.c.b16 %v518, %v517
      %v522 = vpack.c.b16 %v520, %v519
      %523 = vrot.lane.b32.xlu0 %v246, 126
      %v524 = vpop.permute.xlu0 %523
      %525 = vrot.lane.b32.xlu0 %v247, 126
      %v526 = vpop.permute.xlu0 %525
      %527 = vrot.lane.b32.xlu0 %v248, 126
      %v528 = vpop.permute.xlu0 %527
      %529 = vrot.lane.b32.xlu0 %v249, 126
      %v530 = vpop.permute.xlu0 %529
      %531 = vrot.lane.b32.xlu0 %v250, 126
      %v532 = vpop.permute.xlu0 %531
      %533 = vrot.lane.b32.xlu0 %v251, 126
      %v534 = vpop.permute.xlu0 %533
      %vm535 = vcmask 1031168
      %v536 = vsel %vm535, %v524, %v526
      %v537 = vsel %vm535, %v526, %v528
      %v538 = vsel %vm535, %v530, %v532
      %v539 = vsel %vm535, %v532, %v534
      %v547 = vsel %vm275, %v521, 0
      %v550 = vsel %vm275, %v522, 0
      %552 = vmatprep.subr.bf16.mxu0 %v537
      %553 = vmatpush1.bf16.msra.mxu0 %v536
      %554 = vmatprep.subr.bf16.mxu0 %v539
      %555 = vmatpush1.bf16.msra.mxu0 %v538
      %556 = vmatprep.subr.bf16.mxu0 0
      %557 = vmatpush1.bf16.msra.mxu0 0
      %558 = vmatprep.subr.bf16.mxu0 0
      %559 = vmatpush1.bf16.msra.mxu0 0
      %560 = vmatprep.subr.bf16.mxu0 0
      %561 = vmatpush1.bf16.msra.mxu0 0
      %562 = vmatprep.subr.bf16.mxu0 0
      %563 = vmatpush1.bf16.msra.mxu0 0
      %564 = vmatprep.subr.bf16.mxu0 0
      %565 = vmatpush1.bf16.msra.mxu0 0
      %566 = vmatprep.subr.bf16.mxu0 0
      %567 = vmatpush1.bf16.msra.mxu0 0
      %568 = vmatprep.subr.bf16.mxu0 0
      %569 = vmatpush1.bf16.msra.mxu0 0
      %570 = vmatprep.subr.bf16.mxu0 0
      %571 = vmatpush1.bf16.msra.mxu0 0
      %572 = vmatprep.subr.bf16.mxu0 0
      %573 = vmatpush1.bf16.msra.mxu0 0
      %574 = vmatprep.subr.bf16.mxu0 0
      %575 = vmatpush1.bf16.msra.mxu0 0
      %576 = vmatprep.subr.bf16.mxu0 0
      %577 = vmatpush1.bf16.msra.mxu0 0
      %578 = vmatprep.subr.bf16.mxu0 0
      %579 = vmatpush1.bf16.msra.mxu0 0
      %580 = vmatprep.subr.bf16.mxu0 0
      %581 = vmatpush1.bf16.msra.mxu0 0
      %582 = vmatprep.subr.bf16.mxu0 0
      %583 = vmatpush1.bf16.msra.mxu0 0
      %584 = vmatprep.mubr.bf16.mxu0 0
      %585 = vmatmul.mubr.bf16.gmra.mrb[0].mxu0 %v547
      %v586 = vpop.f32.mrb[0].mxu0
      %v587 = vadd.f32 0.0, %v586
      %v588 = vpop.f32.mrb[0].mxu0
      %v589 = vadd.f32 0.0, %v588
      %v590 = vpop.f32.mrb[0].mxu0
      %v591 = vadd.f32 0.0, %v590
      %v592 = vpop.f32.mrb[0].mxu0
      %v593 = vadd.f32 0.0, %v592
      %594 = vmatprep.mubr.bf16.mxu0 0
      %595 = vmatmul.mubr.bf16.gmra.mrb[0].mxu0 %v550
      %v596 = vpop.f32.mrb[0].mxu0
      %v597 = vadd.f32 0.0, %v596
      %v598 = vpop.f32.mrb[0].mxu0
      %v599 = vadd.f32 0.0, %v598
      %v600 = vpop.f32.mrb[0].mxu0
      %v601 = vadd.f32 0.0, %v600
      %v602 = vpop.f32.mrb[0].mxu0
      %v603 = vadd.f32 0.0, %v602
      %604 = vdwg.mxu0
      %605 = vmatprep.subr.bf16.mxu0 0
      %606 = vmatpush1.bf16.msra.mxu0 %v528
      %607 = vmatprep.subr.bf16.mxu0 0
      %608 = vmatpush1.bf16.msra.mxu0 %v534
      %609 = vmatprep.subr.bf16.mxu0 0
      %610 = vmatpush1.bf16.msra.mxu0 0
      %611 = vmatprep.subr.bf16.mxu0 0
      %612 = vmatpush1.bf16.msra.mxu0 0
      %613 = vmatprep.subr.bf16.mxu0 0
      %614 = vmatpush1.bf16.msra.mxu0 0
      %615 = vmatprep.subr.bf16.mxu0 0
      %616 = vmatpush1.bf16.msra.mxu0 0
      %617 = vmatprep.subr.bf16.mxu0 0
      %618 = vmatpush1.bf16.msra.mxu0 0
      %619 = vmatprep.subr.bf16.mxu0 0
      %620 = vmatpush1.bf16.msra.mxu0 0
      %621 = vmatprep.subr.bf16.mxu0 0
      %622 = vmatpush1.bf16.msra.mxu0 0
      %623 = vmatprep.subr.bf16.mxu0 0
      %624 = vmatpush1.bf16.msra.mxu0 0
      %625 = vmatprep.subr.bf16.mxu0 0
      %626 = vmatpush1.bf16.msra.mxu0 0
      %627 = vmatprep.subr.bf16.mxu0 0
      %628 = vmatpush1.bf16.msra.mxu0 0
      %629 = vmatprep.subr.bf16.mxu0 0
      %630 = vmatpush1.bf16.msra.mxu0 0
      %631 = vmatprep.subr.bf16.mxu0 0
      %632 = vmatpush1.bf16.msra.mxu0 0
      %633 = vmatprep.subr.bf16.mxu0 0
      %634 = vmatpush1.bf16.msra.mxu0 0
      %635 = vmatprep.subr.bf16.mxu0 0
      %636 = vmatpush1.bf16.msra.mxu0 0
      %637 = vmatprep.mubr.bf16.mxu0 0
      %638 = vmatmul.mubr.bf16.gmra.mrb[0].mxu0 %v547
      %v639 = vpop.f32.mrb[0].mxu0
      %v640 = vadd.f32 0.0, %v639
      %v641 = vpop.f32.mrb[0].mxu0
      %v642 = vpop.f32.mrb[0].mxu0
      %v643 = vadd.f32 0.0, %v642
      %v644 = vpop.f32.mrb[0].mxu0
      %645 = vmatprep.mubr.bf16.mxu0 0
      %646 = vmatmul.mubr.bf16.gmra.mrb[0].mxu0 %v550
      %v647 = vpop.f32.mrb[0].mxu0
      %v648 = vadd.f32 0.0, %v647
      %v649 = vpop.f32.mrb[0].mxu0
      %v650 = vpop.f32.mrb[0].mxu0
      %v651 = vadd.f32 0.0, %v650
      %v652 = vpop.f32.mrb[0].mxu0
      %653 = vdwg.mxu0
      %v654 = vadd.f32 %v441, %v587
      %v655 = vadd.f32 %v443, %v589
      %v656 = vadd.f32 %v494, %v640
      %v657 = vadd.f32 %v445, %v591
      %v658 = vadd.f32 %v447, %v593
      %v659 = vadd.f32 %v497, %v643
      %v660 = vadd.f32 %v451, %v597
      %v661 = vadd.f32 %v453, %v599
      %v662 = vadd.f32 %v502, %v648
      %v663 = vadd.f32 %v455, %v601
      %v664 = vadd.f32 %v457, %v603
      %v665 = vadd.f32 %v505, %v651
      %s666 = scalar_lea.vmem %s1, 48
      %v667 = vld [vmem:[%s666] sm:$0xf]
      %v668 = vld [vmem:[%s666 + $0x4] sm:$0xf]
      %v669 = vld [vmem:[%s666 + $0x8] sm:$0xf]
      %v670 = vld [vmem:[%s666 + $0xc] sm:$0xf]
      %v675 = vunpack.c.l.b16 %v667
      %v676 = vunpack.c.l.b16 %v668
      %v677 = vunpack.c.l.b16 %v669
      %v678 = vunpack.c.l.b16 %v670
      %v679 = vpack.c.b16 %v676, %v675
      %v680 = vpack.c.b16 %v678, %v677
      %681 = vrot.lane.b32.xlu0 %v246, 110
      %v682 = vpop.permute.xlu0 %681
      %683 = vrot.lane.b32.xlu0 %v247, 110
      %v684 = vpop.permute.xlu0 %683
      %685 = vrot.lane.b32.xlu0 %v248, 110
      %v686 = vpop.permute.xlu0 %685
      %687 = vrot.lane.b32.xlu0 %v249, 110
      %v688 = vpop.permute.xlu0 %687
      %689 = vrot.lane.b32.xlu0 %v250, 110
      %v690 = vpop.permute.xlu0 %689
      %691 = vrot.lane.b32.xlu0 %v251, 110
      %v692 = vpop.permute.xlu0 %691
      %vm693 = vcmask 900096
      %v694 = vsel %vm693, %v682, %v684
      %v695 = vsel %vm693, %v684, %v686
      %v696 = vsel %vm693, %v688, %v690
      %v697 = vsel %vm693, %v690, %v692
      %v705 = vsel %vm275, %v679, 0
      %v708 = vsel %vm275, %v680, 0
      %710 = vmatprep.subr.bf16.mxu0 %v695
      %711 = vmatpush1.bf16.msra.mxu0 %v694
      %712 = vmatprep.subr.bf16.mxu0 %v697
      %713 = vmatpush1.bf16.msra.mxu0 %v696
      %714 = vmatprep.subr.bf16.mxu0 0
      %715 = vmatpush1.bf16.msra.mxu0 0
      %716 = vmatprep.subr.bf16.mxu0 0
      %717 = vmatpush1.bf16.msra.mxu0 0
      %718 = vmatprep.subr.bf16.mxu0 0
      %719 = vmatpush1.bf16.msra.mxu0 0
      %720 = vmatprep.subr.bf16.mxu0 0
      %721 = vmatpush1.bf16.msra.mxu0 0
      %722 = vmatprep.subr.bf16.mxu0 0
      %723 = vmatpush1.bf16.msra.mxu0 0
      %724 = vmatprep.subr.bf16.mxu0 0
      %725 = vmatpush1.bf16.msra.mxu0 0
      %726 = vmatprep.subr.bf16.mxu0 0
      %727 = vmatpush1.bf16.msra.mxu0 0
      %728 = vmatprep.subr.bf16.mxu0 0
      %729 = vmatpush1.bf16.msra.mxu0 0
      %730 = vmatprep.subr.bf16.mxu0 0
      %731 = vmatpush1.bf16.msra.mxu0 0
      %732 = vmatprep.subr.bf16.mxu0 0
      %733 = vmatpush1.bf16.msra.mxu0 0
      %734 = vmatprep.subr.bf16.mxu0 0
      %735 = vmatpush1.bf16.msra.mxu0 0
      %736 = vmatprep.subr.bf16.mxu0 0
      %737 = vmatpush1.bf16.msra.mxu0 0
      %738 = vmatprep.subr.bf16.mxu0 0
      %739 = vmatpush1.bf16.msra.mxu0 0
      %740 = vmatprep.subr.bf16.mxu0 0
      %741 = vmatpush1.bf16.msra.mxu0 0
      %742 = vmatprep.mubr.bf16.mxu0 0
      %743 = vmatmul.mubr.bf16.gmra.mrb[0].mxu0 %v705
      %v744 = vpop.f32.mrb[0].mxu0
      %v745 = vadd.f32 0.0, %v744
      %v746 = vpop.f32.mrb[0].mxu0
      %v747 = vadd.f32 0.0, %v746
      %v748 = vpop.f32.mrb[0].mxu0
      %v749 = vadd.f32 0.0, %v748
      %v750 = vpop.f32.mrb[0].mxu0
      %v751 = vadd.f32 0.0, %v750
      %752 = vmatprep.mubr.bf16.mxu0 0
      %753 = vmatmul.mubr.bf16.gmra.mrb[0].mxu0 %v708
      %v754 = vpop.f32.mrb[0].mxu0
      %v755 = vadd.f32 0.0, %v754
      %v756 = vpop.f32.mrb[0].mxu0
      %v757 = vadd.f32 0.0, %v756
      %v758 = vpop.f32.mrb[0].mxu0
      %v759 = vadd.f32 0.0, %v758
      %v760 = vpop.f32.mrb[0].mxu0
      %v761 = vadd.f32 0.0, %v760
      %762 = vdwg.mxu0
      %763 = vmatprep.subr.bf16.mxu0 0
      %764 = vmatpush1.bf16.msra.mxu0 %v686
      %765 = vmatprep.subr.bf16.mxu0 0
      %766 = vmatpush1.bf16.msra.mxu0 %v692
      %767 = vmatprep.subr.bf16.mxu0 0
      %768 = vmatpush1.bf16.msra.mxu0 0
      %769 = vmatprep.subr.bf16.mxu0 0
      %770 = vmatpush1.bf16.msra.mxu0 0
      %771 = vmatprep.subr.bf16.mxu0 0
      %772 = vmatpush1.bf16.msra.mxu0 0
      %773 = vmatprep.subr.bf16.mxu0 0
      %774 = vmatpush1.bf16.msra.mxu0 0
      %775 = vmatprep.subr.bf16.mxu0 0
      %776 = vmatpush1.bf16.msra.mxu0 0
      %777 = vmatprep.subr.bf16.mxu0 0
      %778 = vmatpush1.bf16.msra.mxu0 0
      %779 = vmatprep.subr.bf16.mxu0 0
      %780 = vmatpush1.bf16.msra.mxu0 0
      %781 = vmatprep.subr.bf16.mxu0 0
      %782 = vmatpush1.bf16.msra.mxu0 0
      %783 = vmatprep.subr.bf16.mxu0 0
      %784 = vmatpush1.bf16.msra.mxu0 0
      %785 = vmatprep.subr.bf16.mxu0 0
      %786 = vmatpush1.bf16.msra.mxu0 0
      %787 = vmatprep.subr.bf16.mxu0 0
      %788 = vmatpush1.bf16.msra.mxu0 0
      %789 = vmatprep.subr.bf16.mxu0 0
      %790 = vmatpush1.bf16.msra.mxu0 0
      %791 = vmatprep.subr.bf16.mxu0 0
      %792 = vmatpush1.bf16.msra.mxu0 0
      %793 = vmatprep.subr.bf16.mxu0 0
      %794 = vmatpush1.bf16.msra.mxu0 0
      %795 = vmatprep.mubr.bf16.mxu0 0
      %796 = vmatmul.mubr.bf16.gmra.mrb[0].mxu0 %v705
      %v797 = vpop.f32.mrb[0].mxu0
      %v798 = vadd.f32 0.0, %v797
      %v799 = vpop.f32.mrb[0].mxu0
      %v800 = vpop.f32.mrb[0].mxu0
      %v801 = vadd.f32 0.0, %v800
      %v802 = vpop.f32.mrb[0].mxu0
      %803 = vmatprep.mubr.bf16.mxu0 0
      %804 = vmatmul.mubr.bf16.gmra.mrb[0].mxu0 %v708
      %v805 = vpop.f32.mrb[0].mxu0
      %v806 = vadd.f32 0.0, %v805
      %v807 = vpop.f32.mrb[0].mxu0
      %v808 = vpop.f32.mrb[0].mxu0
      %v809 = vadd.f32 0.0, %v808
      %v810 = vpop.f32.mrb[0].mxu0
      %811 = vdwg.mxu0
      %v812 = vadd.f32 %v654, %v745
      %v813 = vadd.f32 %v655, %v747
      %v814 = vadd.f32 %v656, %v798
      %v815 = vadd.f32 %v657, %v749
      %v816 = vadd.f32 %v658, %v751
      %v817 = vadd.f32 %v659, %v801
      %v818 = vadd.f32 %v660, %v755
      %v819 = vadd.f32 %v661, %v757
      %v820 = vadd.f32 %v662, %v806
      %v821 = vadd.f32 %v663, %v759
      %v822 = vadd.f32 %v664, %v761
      %v823 = vadd.f32 %v665, %v809
      %s824 = scalar_lea.vmem %s1, 64
      %v825 = vld [vmem:[%s824] sm:$0xf]
      %v826 = vld [vmem:[%s824 + $0x4] sm:$0xf]
      %v827 = vld [vmem:[%s824 + $0x8] sm:$0xf]
      %v828 = vld [vmem:[%s824 + $0xc] sm:$0xf]
      %v833 = vunpack.c.l.b16 %v825
      %v834 = vunpack.c.l.b16 %v826
      %v835 = vunpack.c.l.b16 %v827
      %v836 = vunpack.c.l.b16 %v828
      %v837 = vpack.c.b16 %v834, %v833
      %v838 = vpack.c.b16 %v836, %v835
      %839 = vrot.lane.b32.xlu0 %v246, 109
      %v840 = vpop.permute.xlu0 %839
      %841 = vrot.lane.b32.xlu0 %v247, 109
      %v842 = vpop.permute.xlu0 %841
      %843 = vrot.lane.b32.xlu0 %v248, 109
      %v844 = vpop.permute.xlu0 %843
      %845 = vrot.lane.b32.xlu0 %v249, 109
      %v846 = vpop.permute.xlu0 %845
      %847 = vrot.lane.b32.xlu0 %v250, 109
      %v848 = vpop.permute.xlu0 %847
      %849 = vrot.lane.b32.xlu0 %v251, 109
      %v850 = vpop.permute.xlu0 %849
      %vm851 = vcmask 891904
      %v852 = vsel %vm851, %v840, %v842
      %v853 = vsel %vm851, %v842, %v844
      %v854 = vsel %vm851, %v846, %v848
      %v855 = vsel %vm851, %v848, %v850
      %v863 = vsel %vm275, %v837, 0
      %v866 = vsel %vm275, %v838, 0
      %868 = vmatprep.subr.bf16.mxu0 %v853
      %869 = vmatpush1.bf16.msra.mxu0 %v852
      %870 = vmatprep.subr.bf16.mxu0 %v855
      %871 = vmatpush1.bf16.msra.mxu0 %v854
      %872 = vmatprep.subr.bf16.mxu0 0
      %873 = vmatpush1.bf16.msra.mxu0 0
      %874 = vmatprep.subr.bf16.mxu0 0
      %875 = vmatpush1.bf16.msra.mxu0 0
      %876 = vmatprep.subr.bf16.mxu0 0
      %877 = vmatpush1.bf16.msra.mxu0 0
      %878 = vmatprep.subr.bf16.mxu0 0
      %879 = vmatpush1.bf16.msra.mxu0 0
      %880 = vmatprep.subr.bf16.mxu0 0
      %881 = vmatpush1.bf16.msra.mxu0 0
      %882 = vmatprep.subr.bf16.mxu0 0
      %883 = vmatpush1.bf16.msra.mxu0 0
      %884 = vmatprep.subr.bf16.mxu0 0
      %885 = vmatpush1.bf16.msra.mxu0 0
      %886 = vmatprep.subr.bf16.mxu0 0
      %887 = vmatpush1.bf16.msra.mxu0 0
      %888 = vmatprep.subr.bf16.mxu0 0
      %889 = vmatpush1.bf16.msra.mxu0 0
      %890 = vmatprep.subr.bf16.mxu0 0
      %891 = vmatpush1.bf16.msra.mxu0 0
      %892 = vmatprep.subr.bf16.mxu0 0
      %893 = vmatpush1.bf16.msra.mxu0 0
      %894 = vmatprep.subr.bf16.mxu0 0
      %895 = vmatpush1.bf16.msra.mxu0 0
      %896 = vmatprep.subr.bf16.mxu0 0
      %897 = vmatpush1.bf16.msra.mxu0 0
      %898 = vmatprep.subr.bf16.mxu0 0
      %899 = vmatpush1.bf16.msra.mxu0 0
      %900 = vmatprep.mubr.bf16.mxu0 0
      %901 = vmatmul.mubr.bf16.gmra.mrb[0].mxu0 %v863
      %v902 = vpop.f32.mrb[0].mxu0
      %v903 = vadd.f32 0.0, %v902
      %v904 = vpop.f32.mrb[0].mxu0
      %v905 = vadd.f32 0.0, %v904
      %v906 = vpop.f32.mrb[0].mxu0
      %v907 = vadd.f32 0.0, %v906
      %v908 = vpop.f32.mrb[0].mxu0
      %v909 = vadd.f32 0.0, %v908
      %910 = vmatprep.mubr.bf16.mxu0 0
      %911 = vmatmul.mubr.bf16.gmra.mrb[0].mxu0 %v866
      %v912 = vpop.f32.mrb[0].mxu0
      %v913 = vadd.f32 0.0, %v912
      %v914 = vpop.f32.mrb[0].mxu0
      %v915 = vadd.f32 0.0, %v914
      %v916 = vpop.f32.mrb[0].mxu0
      %v917 = vadd.f32 0.0, %v916
      %v918 = vpop.f32.mrb[0].mxu0
      %v919 = vadd.f32 0.0, %v918
      %920 = vdwg.mxu0
      %921 = vmatprep.subr.bf16.mxu0 0
      %922 = vmatpush1.bf16.msra.mxu0 %v844
      %923 = vmatprep.subr.bf16.mxu0 0
      %924 = vmatpush1.bf16.msra.mxu0 %v850
      %925 = vmatprep.subr.bf16.mxu0 0
      %926 = vmatpush1.bf16.msra.mxu0 0
      %927 = vmatprep.subr.bf16.mxu0 0
      %928 = vmatpush1.bf16.msra.mxu0 0
      %929 = vmatprep.subr.bf16.mxu0 0
      %930 = vmatpush1.bf16.msra.mxu0 0
      %931 = vmatprep.subr.bf16.mxu0 0
      %932 = vmatpush1.bf16.msra.mxu0 0
      %933 = vmatprep.subr.bf16.mxu0 0
      %934 = vmatpush1.bf16.msra.mxu0 0
      %935 = vmatprep.subr.bf16.mxu0 0
      %936 = vmatpush1.bf16.msra.mxu0 0
      %937 = vmatprep.subr.bf16.mxu0 0
      %938 = vmatpush1.bf16.msra.mxu0 0
      %939 = vmatprep.subr.bf16.mxu0 0
      %940 = vmatpush1.bf16.msra.mxu0 0
      %941 = vmatprep.subr.bf16.mxu0 0
      %942 = vmatpush1.bf16.msra.mxu0 0
      %943 = vmatprep.subr.bf16.mxu0 0
      %944 = vmatpush1.bf16.msra.mxu0 0
      %945 = vmatprep.subr.bf16.mxu0 0
      %946 = vmatpush1.bf16.msra.mxu0 0
      %947 = vmatprep.subr.bf16.mxu0 0
      %948 = vmatpush1.bf16.msra.mxu0 0
      %949 = vmatprep.subr.bf16.mxu0 0
      %950 = vmatpush1.bf16.msra.mxu0 0
      %951 = vmatprep.subr.bf16.mxu0 0
      %952 = vmatpush1.bf16.msra.mxu0 0
      %953 = vmatprep.mubr.bf16.mxu0 0
      %954 = vmatmul.mubr.bf16.gmra.mrb[0].mxu0 %v863
      %v955 = vpop.f32.mrb[0].mxu0
      %v956 = vadd.f32 0.0, %v955
      %v957 = vpop.f32.mrb[0].mxu0
      %v958 = vpop.f32.mrb[0].mxu0
      %v959 = vadd.f32 0.0, %v958
      %v960 = vpop.f32.mrb[0].mxu0
      %961 = vmatprep.mubr.bf16.mxu0 0
      %962 = vmatmul.mubr.bf16.gmra.mrb[0].mxu0 %v866
      %v963 = vpop.f32.mrb[0].mxu0
      %v964 = vadd.f32 0.0, %v963
      %v965 = vpop.f32.mrb[0].mxu0
      %v966 = vpop.f32.mrb[0].mxu0
      %v967 = vadd.f32 0.0, %v966
      %v968 = vpop.f32.mrb[0].mxu0
      %969 = vdwg.mxu0
      %v970 = vadd.f32 %v812, %v903
      %v971 = vadd.f32 %v813, %v905
      %v972 = vadd.f32 %v814, %v956
      %v973 = vadd.f32 %v815, %v907
      %v974 = vadd.f32 %v816, %v909
      %v975 = vadd.f32 %v817, %v959
      %v976 = vadd.f32 %v818, %v913
      %v977 = vadd.f32 %v819, %v915
      %v978 = vadd.f32 %v820, %v964
      %v979 = vadd.f32 %v821, %v917
      %v980 = vadd.f32 %v822, %v919
      %v981 = vadd.f32 %v823, %v967
      %s982 = scalar_lea.vmem %s1, 80
      %v983 = vld [vmem:[%s982] sm:$0xf]
      %v984 = vld [vmem:[%s982 + $0x4] sm:$0xf]
      %v985 = vld [vmem:[%s982 + $0x8] sm:$0xf]
      %v986 = vld [vmem:[%s982 + $0xc] sm:$0xf]
      %v991 = vunpack.c.l.b16 %v983
      %v992 = vunpack.c.l.b16 %v984
      %v993 = vunpack.c.l.b16 %v985
      %v994 = vunpack.c.l.b16 %v986
      %v995 = vpack.c.b16 %v992, %v991
      %v996 = vpack.c.b16 %v994, %v993
      %997 = vrot.lane.b32.xlu0 %v246, 108
      %v998 = vpop.permute.xlu0 %997
      %999 = vrot.lane.b32.xlu0 %v247, 108
      %v1000 = vpop.permute.xlu0 %999
      %1001 = vrot.lane.b32.xlu0 %v248, 108
      %v1002 = vpop.permute.xlu0 %1001
      %1003 = vrot.lane.b32.xlu0 %v249, 108
      %v1004 = vpop.permute.xlu0 %1003
      %1005 = vrot.lane.b32.xlu0 %v250, 108
      %v1006 = vpop.permute.xlu0 %1005
      %1007 = vrot.lane.b32.xlu0 %v251, 108
      %v1008 = vpop.permute.xlu0 %1007
      %vm1009 = vcmask 883712
      %v1010 = vsel %vm1009, %v998, %v1000
      %v1011 = vsel %vm1009, %v1000, %v1002
      %v1012 = vsel %vm1009, %v1004, %v1006
      %v1013 = vsel %vm1009, %v1006, %v1008
      %v1021 = vsel %vm275, %v995, 0
      %v1024 = vsel %vm275, %v996, 0
      %1026 = vmatprep.subr.bf16.mxu0 %v1011
      %1027 = vmatpush1.bf16.msra.mxu0 %v1010
      %1028 = vmatprep.subr.bf16.mxu0 %v1013
      %1029 = vmatpush1.bf16.msra.mxu0 %v1012
      %1030 = vmatprep.subr.bf16.mxu0 0
      %1031 = vmatpush1.bf16.msra.mxu0 0
      %1032 = vmatprep.subr.bf16.mxu0 0
      %1033 = vmatpush1.bf16.msra.mxu0 0
      %1034 = vmatprep.subr.bf16.mxu0 0
      %1035 = vmatpush1.bf16.msra.mxu0 0
      %1036 = vmatprep.subr.bf16.mxu0 0
      %1037 = vmatpush1.bf16.msra.mxu0 0
      %1038 = vmatprep.subr.bf16.mxu0 0
      %1039 = vmatpush1.bf16.msra.mxu0 0
      %1040 = vmatprep.subr.bf16.mxu0 0
      %1041 = vmatpush1.bf16.msra.mxu0 0
      %1042 = vmatprep.subr.bf16.mxu0 0
      %1043 = vmatpush1.bf16.msra.mxu0 0
      %1044 = vmatprep.subr.bf16.mxu0 0
      %1045 = vmatpush1.bf16.msra.mxu0 0
      %1046 = vmatprep.subr.bf16.mxu0 0
      %1047 = vmatpush1.bf16.msra.mxu0 0
      %1048 = vmatprep.subr.bf16.mxu0 0
      %1049 = vmatpush1.bf16.msra.mxu0 0
      %1050 = vmatprep.subr.bf16.mxu0 0
      %1051 = vmatpush1.bf16.msra.mxu0 0
      %1052 = vmatprep.subr.bf16.mxu0 0
      %1053 = vmatpush1.bf16.msra.mxu0 0
      %1054 = vmatprep.subr.bf16.mxu0 0
      %1055 = vmatpush1.bf16.msra.mxu0 0
      %1056 = vmatprep.subr.bf16.mxu0 0
      %1057 = vmatpush1.bf16.msra.mxu0 0
      %1058 = vmatprep.mubr.bf16.mxu0 0
      %1059 = vmatmul.mubr.bf16.gmra.mrb[0].mxu0 %v1021
      %v1060 = vpop.f32.mrb[0].mxu0
      %v1061 = vadd.f32 0.0, %v1060
      %v1062 = vpop.f32.mrb[0].mxu0
      %v1063 = vadd.f32 0.0, %v1062
      %v1064 = vpop.f32.mrb[0].mxu0
      %v1065 = vadd.f32 0.0, %v1064
      %v1066 = vpop.f32.mrb[0].mxu0
      %v1067 = vadd.f32 0.0, %v1066
      %1068 = vmatprep.mubr.bf16.mxu0 0
      %1069 = vmatmul.mubr.bf16.gmra.mrb[0].mxu0 %v1024
      %v1070 = vpop.f32.mrb[0].mxu0
      %v1071 = vadd.f32 0.0, %v1070
      %v1072 = vpop.f32.mrb[0].mxu0
      %v1073 = vadd.f32 0.0, %v1072
      %v1074 = vpop.f32.mrb[0].mxu0
      %v1075 = vadd.f32 0.0, %v1074
      %v1076 = vpop.f32.mrb[0].mxu0
      %v1077 = vadd.f32 0.0, %v1076
      %1078 = vdwg.mxu0
      %1079 = vmatprep.subr.bf16.mxu0 0
      %1080 = vmatpush1.bf16.msra.mxu0 %v1002
      %1081 = vmatprep.subr.bf16.mxu0 0
      %1082 = vmatpush1.bf16.msra.mxu0 %v1008
      %1083 = vmatprep.subr.bf16.mxu0 0
      %1084 = vmatpush1.bf16.msra.mxu0 0
      %1085 = vmatprep.subr.bf16.mxu0 0
      %1086 = vmatpush1.bf16.msra.mxu0 0
      %1087 = vmatprep.subr.bf16.mxu0 0
      %1088 = vmatpush1.bf16.msra.mxu0 0
      %1089 = vmatprep.subr.bf16.mxu0 0
      %1090 = vmatpush1.bf16.msra.mxu0 0
      %1091 = vmatprep.subr.bf16.mxu0 0
      %1092 = vmatpush1.bf16.msra.mxu0 0
      %1093 = vmatprep.subr.bf16.mxu0 0
      %1094 = vmatpush1.bf16.msra.mxu0 0
      %1095 = vmatprep.subr.bf16.mxu0 0
      %1096 = vmatpush1.bf16.msra.mxu0 0
      %1097 = vmatprep.subr.bf16.mxu0 0
      %1098 = vmatpush1.bf16.msra.mxu0 0
      %1099 = vmatprep.subr.bf16.mxu0 0
      %1100 = vmatpush1.bf16.msra.mxu0 0
      %1101 = vmatprep.subr.bf16.mxu0 0
      %1102 = vmatpush1.bf16.msra.mxu0 0
      %1103 = vmatprep.subr.bf16.mxu0 0
      %1104 = vmatpush1.bf16.msra.mxu0 0
      %1105 = vmatprep.subr.bf16.mxu0 0
      %1106 = vmatpush1.bf16.msra.mxu0 0
      %1107 = vmatprep.subr.bf16.mxu0 0
      %1108 = vmatpush1.bf16.msra.mxu0 0
      %1109 = vmatprep.subr.bf16.mxu0 0
      %1110 = vmatpush1.bf16.msra.mxu0 0
      %1111 = vmatprep.mubr.bf16.mxu0 0
      %1112 = vmatmul.mubr.bf16.gmra.mrb[0].mxu0 %v1021
      %v1113 = vpop.f32.mrb[0].mxu0
      %v1114 = vadd.f32 0.0, %v1113
      %v1115 = vpop.f32.mrb[0].mxu0
      %v1116 = vpop.f32.mrb[0].mxu0
      %v1117 = vadd.f32 0.0, %v1116
      %v1118 = vpop.f32.mrb[0].mxu0
      %1119 = vmatprep.mubr.bf16.mxu0 0
      %1120 = vmatmul.mubr.bf16.gmra.mrb[0].mxu0 %v1024
      %v1121 = vpop.f32.mrb[0].mxu0
      %v1122 = vadd.f32 0.0, %v1121
      %v1123 = vpop.f32.mrb[0].mxu0
      %v1124 = vpop.f32.mrb[0].mxu0
      %v1125 = vadd.f32 0.0, %v1124
      %v1126 = vpop.f32.mrb[0].mxu0
      %1127 = vdwg.mxu0
      %v1128 = vadd.f32 %v970, %v1061
      %v1129 = vadd.f32 %v971, %v1063
      %v1130 = vadd.f32 %v972, %v1114
      %v1131 = vadd.f32 %v973, %v1065
      %v1132 = vadd.f32 %v974, %v1067
      %v1133 = vadd.f32 %v975, %v1117
      %v1134 = vadd.f32 %v976, %v1071
      %v1135 = vadd.f32 %v977, %v1073
      %v1136 = vadd.f32 %v978, %v1122
      %v1137 = vadd.f32 %v979, %v1075
      %v1138 = vadd.f32 %v980, %v1077
      %v1139 = vadd.f32 %v981, %v1125
      %s1140 = scalar_lea.vmem %s1, 96
      %v1141 = vld [vmem:[%s1140] sm:$0xf]
      %v1142 = vld [vmem:[%s1140 + $0x4] sm:$0xf]
      %v1143 = vld [vmem:[%s1140 + $0x8] sm:$0xf]
      %v1144 = vld [vmem:[%s1140 + $0xc] sm:$0xf]
      %v1149 = vunpack.c.l.b16 %v1141
      %v1150 = vunpack.c.l.b16 %v1142
      %v1151 = vunpack.c.l.b16 %v1143
      %v1152 = vunpack.c.l.b16 %v1144
      %v1153 = vpack.c.b16 %v1150, %v1149
      %v1154 = vpack.c.b16 %v1152, %v1151
      %1155 = vrot.lane.b32.xlu0 %v246, 92
      %v1156 = vpop.permute.xlu0 %1155
      %1157 = vrot.lane.b32.xlu0 %v247, 92
      %v1158 = vpop.permute.xlu0 %1157
      %1159 = vrot.lane.b32.xlu0 %v248, 92
      %v1160 = vpop.permute.xlu0 %1159
      %1161 = vrot.lane.b32.xlu0 %v249, 92
      %v1162 = vpop.permute.xlu0 %1161
      %1163 = vrot.lane.b32.xlu0 %v250, 92
      %v1164 = vpop.permute.xlu0 %1163
      %1165 = vrot.lane.b32.xlu0 %v251, 92
      %v1166 = vpop.permute.xlu0 %1165
      %vm1167 = vcmask 752640
      %v1168 = vsel %vm1167, %v1156, %v1158
      %v1169 = vsel %vm1167, %v1158, %v1160
      %v1170 = vsel %vm1167, %v1162, %v1164
      %v1171 = vsel %vm1167, %v1164, %v1166
      %v1179 = vsel %vm275, %v1153, 0
      %v1182 = vsel %vm275, %v1154, 0
      %1184 = vmatprep.subr.bf16.mxu0 %v1169
      %1185 = vmatpush1.bf16.msra.mxu0 %v1168
      %1186 = vmatprep.subr.bf16.mxu0 %v1171
      %1187 = vmatpush1.bf16.msra.mxu0 %v1170
      %1188 = vmatprep.subr.bf16.mxu0 0
      %1189 = vmatpush1.bf16.msra.mxu0 0
      %1190 = vmatprep.subr.bf16.mxu0 0
      %1191 = vmatpush1.bf16.msra.mxu0 0
      %1192 = vmatprep.subr.bf16.mxu0 0
      %1193 = vmatpush1.bf16.msra.mxu0 0
      %1194 = vmatprep.subr.bf16.mxu0 0
      %1195 = vmatpush1.bf16.msra.mxu0 0
      %1196 = vmatprep.subr.bf16.mxu0 0
      %1197 = vmatpush1.bf16.msra.mxu0 0
      %1198 = vmatprep.subr.bf16.mxu0 0
      %1199 = vmatpush1.bf16.msra.mxu0 0
      %1200 = vmatprep.subr.bf16.mxu0 0
      %1201 = vmatpush1.bf16.msra.mxu0 0
      %1202 = vmatprep.subr.bf16.mxu0 0
      %1203 = vmatpush1.bf16.msra.mxu0 0
      %1204 = vmatprep.subr.bf16.mxu0 0
      %1205 = vmatpush1.bf16.msra.mxu0 0
      %1206 = vmatprep.subr.bf16.mxu0 0
      %1207 = vmatpush1.bf16.msra.mxu0 0
      %1208 = vmatprep.subr.bf16.mxu0 0
      %1209 = vmatpush1.bf16.msra.mxu0 0
      %1210 = vmatprep.subr.bf16.mxu0 0
      %1211 = vmatpush1.bf16.msra.mxu0 0
      %1212 = vmatprep.subr.bf16.mxu0 0
      %1213 = vmatpush1.bf16.msra.mxu0 0
      %1214 = vmatprep.subr.bf16.mxu0 0
      %1215 = vmatpush1.bf16.msra.mxu0 0
      %1216 = vmatprep.mubr.bf16.mxu0 0
      %1217 = vmatmul.mubr.bf16.gmra.mrb[0].mxu0 %v1179
      %v1218 = vpop.f32.mrb[0].mxu0
      %v1219 = vadd.f32 0.0, %v1218
      %v1220 = vpop.f32.mrb[0].mxu0
      %v1221 = vadd.f32 0.0, %v1220
      %v1222 = vpop.f32.mrb[0].mxu0
      %v1223 = vadd.f32 0.0, %v1222
      %v1224 = vpop.f32.mrb[0].mxu0
      %v1225 = vadd.f32 0.0, %v1224
      %1226 = vmatprep.mubr.bf16.mxu0 0
      %1227 = vmatmul.mubr.bf16.gmra.mrb[0].mxu0 %v1182
      %v1228 = vpop.f32.mrb[0].mxu0
      %v1229 = vadd.f32 0.0, %v1228
      %v1230 = vpop.f32.mrb[0].mxu0
      %v1231 = vadd.f32 0.0, %v1230
      %v1232 = vpop.f32.mrb[0].mxu0
      %v1233 = vadd.f32 0.0, %v1232
      %v1234 = vpop.f32.mrb[0].mxu0
      %v1235 = vadd.f32 0.0, %v1234
      %1236 = vdwg.mxu0
      %1237 = vmatprep.subr.bf16.mxu0 0
      %1238 = vmatpush1.bf16.msra.mxu0 %v1160
      %1239 = vmatprep.subr.bf16.mxu0 0
      %1240 = vmatpush1.bf16.msra.mxu0 %v1166
      %1241 = vmatprep.subr.bf16.mxu0 0
      %1242 = vmatpush1.bf16.msra.mxu0 0
      %1243 = vmatprep.subr.bf16.mxu0 0
      %1244 = vmatpush1.bf16.msra.mxu0 0
      %1245 = vmatprep.subr.bf16.mxu0 0
      %1246 = vmatpush1.bf16.msra.mxu0 0
      %1247 = vmatprep.subr.bf16.mxu0 0
      %1248 = vmatpush1.bf16.msra.mxu0 0
      %1249 = vmatprep.subr.bf16.mxu0 0
      %1250 = vmatpush1.bf16.msra.mxu0 0
      %1251 = vmatprep.subr.bf16.mxu0 0
      %1252 = vmatpush1.bf16.msra.mxu0 0
      %1253 = vmatprep.subr.bf16.mxu0 0
      %1254 = vmatpush1.bf16.msra.mxu0 0
      %1255 = vmatprep.subr.bf16.mxu0 0
      %1256 = vmatpush1.bf16.msra.mxu0 0
      %1257 = vmatprep.subr.bf16.mxu0 0
      %1258 = vmatpush1.bf16.msra.mxu0 0
      %1259 = vmatprep.subr.bf16.mxu0 0
      %1260 = vmatpush1.bf16.msra.mxu0 0
      %1261 = vmatprep.subr.bf16.mxu0 0
      %1262 = vmatpush1.bf16.msra.mxu0 0
      %1263 = vmatprep.subr.bf16.mxu0 0
      %1264 = vmatpush1.bf16.msra.mxu0 0
      %1265 = vmatprep.subr.bf16.mxu0 0
      %1266 = vmatpush1.bf16.msra.mxu0 0
      %1267 = vmatprep.subr.bf16.mxu0 0
      %1268 = vmatpush1.bf16.msra.mxu0 0
      %1269 = vmatprep.mubr.bf16.mxu0 0
      %1270 = vmatmul.mubr.bf16.gmra.mrb[0].mxu0 %v1179
      %v1271 = vpop.f32.mrb[0].mxu0
      %v1272 = vadd.f32 0.0, %v1271
      %v1273 = vpop.f32.mrb[0].mxu0
      %v1274 = vpop.f32.mrb[0].mxu0
      %v1275 = vadd.f32 0.0, %v1274
      %v1276 = vpop.f32.mrb[0].mxu0
      %1277 = vmatprep.mubr.bf16.mxu0 0
      %1278 = vmatmul.mubr.bf16.gmra.mrb[0].mxu0 %v1182
      %v1279 = vpop.f32.mrb[0].mxu0
      %v1280 = vadd.f32 0.0, %v1279
      %v1281 = vpop.f32.mrb[0].mxu0
      %v1282 = vpop.f32.mrb[0].mxu0
      %v1283 = vadd.f32 0.0, %v1282
      %v1284 = vpop.f32.mrb[0].mxu0
      %1285 = vdwg.mxu0
      %v1286 = vadd.f32 %v1128, %v1219
      %v1287 = vadd.f32 %v1129, %v1221
      %v1288 = vadd.f32 %v1130, %v1272
      %v1289 = vadd.f32 %v1131, %v1223
      %v1290 = vadd.f32 %v1132, %v1225
      %v1291 = vadd.f32 %v1133, %v1275
      %v1292 = vadd.f32 %v1134, %v1229
      %v1293 = vadd.f32 %v1135, %v1231
      %v1294 = vadd.f32 %v1136, %v1280
      %v1295 = vadd.f32 %v1137, %v1233
      %v1296 = vadd.f32 %v1138, %v1235
      %v1297 = vadd.f32 %v1139, %v1283
      %s1298 = scalar_lea.vmem %s1, 112
      %v1299 = vld [vmem:[%s1298] sm:$0xf]
      %v1300 = vld [vmem:[%s1298 + $0x4] sm:$0xf]
      %v1301 = vld [vmem:[%s1298 + $0x8] sm:$0xf]
      %v1302 = vld [vmem:[%s1298 + $0xc] sm:$0xf]
      %v1307 = vunpack.c.l.b16 %v1299
      %v1308 = vunpack.c.l.b16 %v1300
      %v1309 = vunpack.c.l.b16 %v1301
      %v1310 = vunpack.c.l.b16 %v1302
      %v1311 = vpack.c.b16 %v1308, %v1307
      %v1312 = vpack.c.b16 %v1310, %v1309
      %1313 = vrot.lane.b32.xlu0 %v246, 91
      %v1314 = vpop.permute.xlu0 %1313
      %1315 = vrot.lane.b32.xlu0 %v247, 91
      %v1316 = vpop.permute.xlu0 %1315
      %1317 = vrot.lane.b32.xlu0 %v248, 91
      %v1318 = vpop.permute.xlu0 %1317
      %1319 = vrot.lane.b32.xlu0 %v249, 91
      %v1320 = vpop.permute.xlu0 %1319
      %1321 = vrot.lane.b32.xlu0 %v250, 91
      %v1322 = vpop.permute.xlu0 %1321
      %1323 = vrot.lane.b32.xlu0 %v251, 91
      %v1324 = vpop.permute.xlu0 %1323
      %vm1325 = vcmask 744448
      %v1326 = vsel %vm1325, %v1314, %v1316
      %v1327 = vsel %vm1325, %v1316, %v1318
      %v1328 = vsel %vm1325, %v1320, %v1322
      %v1329 = vsel %vm1325, %v1322, %v1324
      %v1337 = vsel %vm275, %v1311, 0
      %v1340 = vsel %vm275, %v1312, 0
      %1342 = vmatprep.subr.bf16.mxu0 %v1327
      %1343 = vmatpush1.bf16.msra.mxu0 %v1326
      %1344 = vmatprep.subr.bf16.mxu0 %v1329
      %1345 = vmatpush1.bf16.msra.mxu0 %v1328
      %1346 = vmatprep.subr.bf16.mxu0 0
      %1347 = vmatpush1.bf16.msra.mxu0 0
      %1348 = vmatprep.subr.bf16.mxu0 0
      %1349 = vmatpush1.bf16.msra.mxu0 0
      %1350 = vmatprep.subr.bf16.mxu0 0
      %1351 = vmatpush1.bf16.msra.mxu0 0
      %1352 = vmatprep.subr.bf16.mxu0 0
      %1353 = vmatpush1.bf16.msra.mxu0 0
      %1354 = vmatprep.subr.bf16.mxu0 0
      %1355 = vmatpush1.bf16.msra.mxu0 0
      %1356 = vmatprep.subr.bf16.mxu0 0
      %1357 = vmatpush1.bf16.msra.mxu0 0
      %1358 = vmatprep.subr.bf16.mxu0 0
      %1359 = vmatpush1.bf16.msra.mxu0 0
      %1360 = vmatprep.subr.bf16.mxu0 0
      %1361 = vmatpush1.bf16.msra.mxu0 0
      %1362 = vmatprep.subr.bf16.mxu0 0
      %1363 = vmatpush1.bf16.msra.mxu0 0
      %1364 = vmatprep.subr.bf16.mxu0 0
      %1365 = vmatpush1.bf16.msra.mxu0 0
      %1366 = vmatprep.subr.bf16.mxu0 0
      %1367 = vmatpush1.bf16.msra.mxu0 0
      %1368 = vmatprep.subr.bf16.mxu0 0
      %1369 = vmatpush1.bf16.msra.mxu0 0
      %1370 = vmatprep.subr.bf16.mxu0 0
      %1371 = vmatpush1.bf16.msra.mxu0 0
      %1372 = vmatprep.subr.bf16.mxu0 0
      %1373 = vmatpush1.bf16.msra.mxu0 0
      %1374 = vmatprep.mubr.bf16.mxu0 0
      %1375 = vmatmul.mubr.bf16.gmra.mrb[0].mxu0 %v1337
      %v1376 = vpop.f32.mrb[0].mxu0
      %v1377 = vadd.f32 0.0, %v1376
      %v1378 = vpop.f32.mrb[0].mxu0
      %v1379 = vadd.f32 0.0, %v1378
      %v1380 = vpop.f32.mrb[0].mxu0
      %v1381 = vadd.f32 0.0, %v1380
      %v1382 = vpop.f32.mrb[0].mxu0
      %v1383 = vadd.f32 0.0, %v1382
      %1384 = vmatprep.mubr.bf16.mxu0 0
      %1385 = vmatmul.mubr.bf16.gmra.mrb[0].mxu0 %v1340
      %v1386 = vpop.f32.mrb[0].mxu0
      %v1387 = vadd.f32 0.0, %v1386
      %v1388 = vpop.f32.mrb[0].mxu0
      %v1389 = vadd.f32 0.0, %v1388
      %v1390 = vpop.f32.mrb[0].mxu0
      %v1391 = vadd.f32 0.0, %v1390
      %v1392 = vpop.f32.mrb[0].mxu0
      %v1393 = vadd.f32 0.0, %v1392
      %1394 = vdwg.mxu0
      %1395 = vmatprep.subr.bf16.mxu0 0
      %1396 = vmatpush1.bf16.msra.mxu0 %v1318
      %1397 = vmatprep.subr.bf16.mxu0 0
      %1398 = vmatpush1.bf16.msra.mxu0 %v1324
      %1399 = vmatprep.subr.bf16.mxu0 0
      %1400 = vmatpush1.bf16.msra.mxu0 0
      %1401 = vmatprep.subr.bf16.mxu0 0
      %1402 = vmatpush1.bf16.msra.mxu0 0
      %1403 = vmatprep.subr.bf16.mxu0 0
      %1404 = vmatpush1.bf16.msra.mxu0 0
      %1405 = vmatprep.subr.bf16.mxu0 0
      %1406 = vmatpush1.bf16.msra.mxu0 0
      %1407 = vmatprep.subr.bf16.mxu0 0
      %1408 = vmatpush1.bf16.msra.mxu0 0
      %1409 = vmatprep.subr.bf16.mxu0 0
      %1410 = vmatpush1.bf16.msra.mxu0 0
      %1411 = vmatprep.subr.bf16.mxu0 0
      %1412 = vmatpush1.bf16.msra.mxu0 0
      %1413 = vmatprep.subr.bf16.mxu0 0
      %1414 = vmatpush1.bf16.msra.mxu0 0
      %1415 = vmatprep.subr.bf16.mxu0 0
      %1416 = vmatpush1.bf16.msra.mxu0 0
      %1417 = vmatprep.subr.bf16.mxu0 0
      %1418 = vmatpush1.bf16.msra.mxu0 0
      %1419 = vmatprep.subr.bf16.mxu0 0
      %1420 = vmatpush1.bf16.msra.mxu0 0
      %1421 = vmatprep.subr.bf16.mxu0 0
      %1422 = vmatpush1.bf16.msra.mxu0 0
      %1423 = vmatprep.subr.bf16.mxu0 0
      %1424 = vmatpush1.bf16.msra.mxu0 0
      %1425 = vmatprep.subr.bf16.mxu0 0
      %1426 = vmatpush1.bf16.msra.mxu0 0
      %1427 = vmatprep.mubr.bf16.mxu0 0
      %1428 = vmatmul.mubr.bf16.gmra.mrb[0].mxu0 %v1337
      %v1429 = vpop.f32.mrb[0].mxu0
      %v1430 = vadd.f32 0.0, %v1429
      %v1431 = vpop.f32.mrb[0].mxu0
      %v1432 = vpop.f32.mrb[0].mxu0
      %v1433 = vadd.f32 0.0, %v1432
      %v1434 = vpop.f32.mrb[0].mxu0
      %1435 = vmatprep.mubr.bf16.mxu0 0
      %1436 = vmatmul.mubr.bf16.gmra.mrb[0].mxu0 %v1340
      %v1437 = vpop.f32.mrb[0].mxu0
      %v1438 = vadd.f32 0.0, %v1437
      %v1439 = vpop.f32.mrb[0].mxu0
      %v1440 = vpop.f32.mrb[0].mxu0
      %v1441 = vadd.f32 0.0, %v1440
      %v1442 = vpop.f32.mrb[0].mxu0
      %1443 = vdwg.mxu0
      %v1444 = vadd.f32 %v1286, %v1377
      %v1445 = vadd.f32 %v1287, %v1379
      %v1446 = vadd.f32 %v1288, %v1430
      %v1447 = vadd.f32 %v1289, %v1381
      %v1448 = vadd.f32 %v1290, %v1383
      %v1449 = vadd.f32 %v1291, %v1433
      %v1450 = vadd.f32 %v1292, %v1387
      %v1451 = vadd.f32 %v1293, %v1389
      %v1452 = vadd.f32 %v1294, %v1438
      %v1453 = vadd.f32 %v1295, %v1391
      %v1454 = vadd.f32 %v1296, %v1393
      %v1455 = vadd.f32 %v1297, %v1441
      %s1456 = scalar_lea.vmem %s1, 128
      %v1457 = vld [vmem:[%s1456] sm:$0xf]
      %v1458 = vld [vmem:[%s1456 + $0x4] sm:$0xf]
      %v1459 = vld [vmem:[%s1456 + $0x8] sm:$0xf]
      %v1460 = vld [vmem:[%s1456 + $0xc] sm:$0xf]
      %v1465 = vunpack.c.l.b16 %v1457
      %v1466 = vunpack.c.l.b16 %v1458
      %v1467 = vunpack.c.l.b16 %v1459
      %v1468 = vunpack.c.l.b16 %v1460
      %v1469 = vpack.c.b16 %v1466, %v1465
      %v1470 = vpack.c.b16 %v1468, %v1467
      %1471 = vrot.lane.b32.xlu0 %v246, 90
      %v1472 = vpop.permute.xlu0 %1471
      %1473 = vrot.lane.b32.xlu0 %v247, 90
      %v1474 = vpop.permute.xlu0 %1473
      %1475 = vrot.lane.b32.xlu0 %v248, 90
      %v1476 = vpop.permute.xlu0 %1475
      %1477 = vrot.lane.b32.xlu0 %v249, 90
      %v1478 = vpop.permute.xlu0 %1477
      %1479 = vrot.lane.b32.xlu0 %v250, 90
      %v1480 = vpop.permute.xlu0 %1479
      %1481 = vrot.lane.b32.xlu0 %v251, 90
      %v1482 = vpop.permute.xlu0 %1481
      %vm1483 = vcmask 736256
      %v1484 = vsel %vm1483, %v1472, %v1474
      %v1485 = vsel %vm1483, %v1474, %v1476
      %v1486 = vsel %vm1483, %v1478, %v1480
      %v1487 = vsel %vm1483, %v1480, %v1482
      %v1495 = vsel %vm275, %v1469, 0
      %v1498 = vsel %vm275, %v1470, 0
      %1500 = vmatprep.subr.bf16.mxu0 %v1485
      %1501 = vmatpush1.bf16.msra.mxu0 %v1484
      %1502 = vmatprep.subr.bf16.mxu0 %v1487
      %1503 = vmatpush1.bf16.msra.mxu0 %v1486
      %1504 = vmatprep.subr.bf16.mxu0 0
      %1505 = vmatpush1.bf16.msra.mxu0 0
      %1506 = vmatprep.subr.bf16.mxu0 0
      %1507 = vmatpush1.bf16.msra.mxu0 0
      %1508 = vmatprep.subr.bf16.mxu0 0
      %1509 = vmatpush1.bf16.msra.mxu0 0
      %1510 = vmatprep.subr.bf16.mxu0 0
      %1511 = vmatpush1.bf16.msra.mxu0 0
      %1512 = vmatprep.subr.bf16.mxu0 0
      %1513 = vmatpush1.bf16.msra.mxu0 0
      %1514 = vmatprep.subr.bf16.mxu0 0
      %1515 = vmatpush1.bf16.msra.mxu0 0
      %1516 = vmatprep.subr.bf16.mxu0 0
      %1517 = vmatpush1.bf16.msra.mxu0 0
      %1518 = vmatprep.subr.bf16.mxu0 0
      %1519 = vmatpush1.bf16.msra.mxu0 0
      %1520 = vmatprep.subr.bf16.mxu0 0
      %1521 = vmatpush1.bf16.msra.mxu0 0
      %1522 = vmatprep.subr.bf16.mxu0 0
      %1523 = vmatpush1.bf16.msra.mxu0 0
      %1524 = vmatprep.subr.bf16.mxu0 0
      %1525 = vmatpush1.bf16.msra.mxu0 0
      %1526 = vmatprep.subr.bf16.mxu0 0
      %1527 = vmatpush1.bf16.msra.mxu0 0
      %1528 = vmatprep.subr.bf16.mxu0 0
      %1529 = vmatpush1.bf16.msra.mxu0 0
      %1530 = vmatprep.subr.bf16.mxu0 0
      %1531 = vmatpush1.bf16.msra.mxu0 0
      %1532 = vmatprep.mubr.bf16.mxu0 0
      %1533 = vmatmul.mubr.bf16.gmra.mrb[0].mxu0 %v1495
      %v1534 = vpop.f32.mrb[0].mxu0
      %v1535 = vadd.f32 0.0, %v1534
      %v1536 = vpop.f32.mrb[0].mxu0
      %v1537 = vadd.f32 0.0, %v1536
      %v1538 = vpop.f32.mrb[0].mxu0
      %v1539 = vadd.f32 0.0, %v1538
      %v1540 = vpop.f32.mrb[0].mxu0
      %v1541 = vadd.f32 0.0, %v1540
      %1542 = vmatprep.mubr.bf16.mxu0 0
      %1543 = vmatmul.mubr.bf16.gmra.mrb[0].mxu0 %v1498
      %v1544 = vpop.f32.mrb[0].mxu0
      %v1545 = vadd.f32 0.0, %v1544
      %v1546 = vpop.f32.mrb[0].mxu0
      %v1547 = vadd.f32 0.0, %v1546
      %v1548 = vpop.f32.mrb[0].mxu0
      %v1549 = vadd.f32 0.0, %v1548
      %v1550 = vpop.f32.mrb[0].mxu0
      %v1551 = vadd.f32 0.0, %v1550
      %1552 = vdwg.mxu0
      %1553 = vmatprep.subr.bf16.mxu0 0
      %1554 = vmatpush1.bf16.msra.mxu0 %v1476
      %1555 = vmatprep.subr.bf16.mxu0 0
      %1556 = vmatpush1.bf16.msra.mxu0 %v1482
      %1557 = vmatprep.subr.bf16.mxu0 0
      %1558 = vmatpush1.bf16.msra.mxu0 0
      %1559 = vmatprep.subr.bf16.mxu0 0
      %1560 = vmatpush1.bf16.msra.mxu0 0
      %1561 = vmatprep.subr.bf16.mxu0 0
      %1562 = vmatpush1.bf16.msra.mxu0 0
      %1563 = vmatprep.subr.bf16.mxu0 0
      %1564 = vmatpush1.bf16.msra.mxu0 0
      %1565 = vmatprep.subr.bf16.mxu0 0
      %1566 = vmatpush1.bf16.msra.mxu0 0
      %1567 = vmatprep.subr.bf16.mxu0 0
      %1568 = vmatpush1.bf16.msra.mxu0 0
      %1569 = vmatprep.subr.bf16.mxu0 0
      %1570 = vmatpush1.bf16.msra.mxu0 0
      %1571 = vmatprep.subr.bf16.mxu0 0
      %1572 = vmatpush1.bf16.msra.mxu0 0
      %1573 = vmatprep.subr.bf16.mxu0 0
      %1574 = vmatpush1.bf16.msra.mxu0 0
      %1575 = vmatprep.subr.bf16.mxu0 0
      %1576 = vmatpush1.bf16.msra.mxu0 0
      %1577 = vmatprep.subr.bf16.mxu0 0
      %1578 = vmatpush1.bf16.msra.mxu0 0
      %1579 = vmatprep.subr.bf16.mxu0 0
      %1580 = vmatpush1.bf16.msra.mxu0 0
      %1581 = vmatprep.subr.bf16.mxu0 0
      %1582 = vmatpush1.bf16.msra.mxu0 0
      %1583 = vmatprep.subr.bf16.mxu0 0
      %1584 = vmatpush1.bf16.msra.mxu0 0
      %1585 = vmatprep.mubr.bf16.mxu0 0
      %1586 = vmatmul.mubr.bf16.gmra.mrb[0].mxu0 %v1495
      %v1587 = vpop.f32.mrb[0].mxu0
      %v1588 = vadd.f32 0.0, %v1587
      %v1589 = vpop.f32.mrb[0].mxu0
      %v1590 = vpop.f32.mrb[0].mxu0
      %v1591 = vadd.f32 0.0, %v1590
      %v1592 = vpop.f32.mrb[0].mxu0
      %1593 = vmatprep.mubr.bf16.mxu0 0
      %1594 = vmatmul.mubr.bf16.gmra.mrb[0].mxu0 %v1498
      %v1595 = vpop.f32.mrb[0].mxu0
      %v1596 = vadd.f32 0.0, %v1595
      %v1597 = vpop.f32.mrb[0].mxu0
      %v1598 = vpop.f32.mrb[0].mxu0
      %v1599 = vadd.f32 0.0, %v1598
      %v1600 = vpop.f32.mrb[0].mxu0
      %1601 = vdwg.mxu0
      %v1602 = vadd.f32 %v1444, %v1535
      %v1603 = vadd.f32 %v1445, %v1537
      %v1604 = vadd.f32 %v1446, %v1588
      %v1605 = vadd.f32 %v1447, %v1539
      %v1606 = vadd.f32 %v1448, %v1541
      %v1607 = vadd.f32 %v1449, %v1591
      %v1608 = vadd.f32 %v1450, %v1545
      %v1609 = vadd.f32 %v1451, %v1547
      %v1610 = vadd.f32 %v1452, %v1596
      %v1611 = vadd.f32 %v1453, %v1549
      %v1612 = vadd.f32 %v1454, %v1551
      %v1613 = vadd.f32 %v1455, %v1599
      %v1614 = vld [vmem:[%s2] sm:$0xff]
      %v1615 = vld [vmem:[%s2 + $0x8] sm:$0xff]
      %v1616 = vld [vmem:[%s2 + $0x10] sm:$0xff]
      %v1617 = vld [vmem:[%s2 + $0x18] sm:$0xff]
      %1619 = vset.pattern.permute.xlu0 0
      %1620 = vperm.xlu0 %1619, %v1614
      %v1621 = vpop.permute.xlu0 %1620
      %1624 = vset.pattern.permute.xlu0 0
      %1625 = vperm.xlu0 %1624, %v1615
      %v1626 = vpop.permute.xlu0 %1625
      %1629 = vset.pattern.permute.xlu0 0
      %1630 = vperm.xlu0 %1629, %v1616
      %v1631 = vpop.permute.xlu0 %1630
      %1634 = vset.pattern.permute.xlu0 0
      %1635 = vperm.xlu0 %1634, %v1617
      %v1636 = vpop.permute.xlu0 %1635
      %v1638 = vmul.f32 %v1602, %v1621
      %v1639 = vmul.f32 %v1603, %v1621
      %v1640 = vmul.f32 %v1604, %v1621
      %v1641 = vmul.f32 %v1605, %v1626
      %v1642 = vmul.f32 %v1606, %v1626
      %v1643 = vmul.f32 %v1607, %v1626
      %v1644 = vmul.f32 %v1608, %v1631
      %v1645 = vmul.f32 %v1609, %v1631
      %v1646 = vmul.f32 %v1610, %v1631
      %v1647 = vmul.f32 %v1611, %v1636
      %v1648 = vmul.f32 %v1612, %v1636
      %v1649 = vmul.f32 %v1613, %v1636
      %v1650 = vld [vmem:[%s3] sm:$0xff]
      %v1651 = vld [vmem:[%s3 + $0x8] sm:$0xff]
      %v1652 = vld [vmem:[%s3 + $0x10] sm:$0xff]
      %v1653 = vld [vmem:[%s3 + $0x18] sm:$0xff]
      %1655 = vset.pattern.permute.xlu0 0
      %1656 = vperm.xlu0 %1655, %v1650
      %v1657 = vpop.permute.xlu0 %1656
      %1660 = vset.pattern.permute.xlu0 0
      %1661 = vperm.xlu0 %1660, %v1651
      %v1662 = vpop.permute.xlu0 %1661
      %1665 = vset.pattern.permute.xlu0 0
      %1666 = vperm.xlu0 %1665, %v1652
      %v1667 = vpop.permute.xlu0 %1666
      %1670 = vset.pattern.permute.xlu0 0
      %1671 = vperm.xlu0 %1670, %v1653
      %v1672 = vpop.permute.xlu0 %1671
      %v1674 = vadd.f32 %v1638, %v1657
      %v1675 = vadd.f32 %v1639, %v1657
      %v1676 = vadd.f32 %v1640, %v1657
      %v1677 = vadd.f32 %v1641, %v1662
      %v1678 = vadd.f32 %v1642, %v1662
      %v1679 = vadd.f32 %v1643, %v1662
      %v1680 = vadd.f32 %v1644, %v1667
      %v1681 = vadd.f32 %v1645, %v1667
      %v1682 = vadd.f32 %v1646, %v1667
      %v1683 = vadd.f32 %v1647, %v1672
      %v1684 = vadd.f32 %v1648, %v1672
      %v1685 = vadd.f32 %v1649, %v1672
      %v1686 = vmax.f32 %v1674, 0.0
      %v1687 = vmax.f32 %v1675, 0.0
      %v1688 = vmax.f32 %v1676, 0.0
      %v1689 = vmax.f32 %v1677, 0.0
      %v1690 = vmax.f32 %v1678, 0.0
      %v1691 = vmax.f32 %v1679, 0.0
      %v1692 = vmax.f32 %v1680, 0.0
      %v1693 = vmax.f32 %v1681, 0.0
      %v1694 = vmax.f32 %v1682, 0.0
      %v1695 = vmax.f32 %v1683, 0.0
      %v1696 = vmax.f32 %v1684, 0.0
      %v1697 = vmax.f32 %v1685, 0.0
      %1698 = vst [vmem:[%s197] sm:$0xff] %v1686
      %1699 = vst [vmem:[%s197 + $0x8] sm:$0xff] %v1687
      %1700 = vst.msk [vmem:[%s197 + $0x10] sm:$0xff] %vm275, %v1688
      %1701 = vst [vmem:[%s197 + $0x18] sm:$0xff] %v1689
      %1702 = vst [vmem:[%s197 + $0x20] sm:$0xff] %v1690
      %1703 = vst.msk [vmem:[%s197 + $0x28] sm:$0xff] %vm275, %v1691
      %1704 = vst [vmem:[%s197 + $0x30] sm:$0xff] %v1692
      %1705 = vst [vmem:[%s197 + $0x38] sm:$0xff] %v1693
      %1706 = vst.msk [vmem:[%s197 + $0x40] sm:$0xff] %vm275, %v1694
      %1707 = vst [vmem:[%s197 + $0x48] sm:$0xff] %v1695
      %1708 = vst [vmem:[%s197 + $0x50] sm:$0xff] %v1696
      %1709 = vst.msk [vmem:[%s197 + $0x58] sm:$0xff] %vm275, %v1697
      %p1710 = scmp.lt.s32.totalorder %s15, 1
      %s1711 = scalar_select %p1710, %s15, 1
      %s1712 = smul.addr %s1711, 12
      %s1713 = smul.addr %s1712, 8
      %s1714 = scalar_lea.vmem %s4, %s1713
      // Predicated region
      $region37: #{_lambda_.3} parent=35 // pred_check
        %p1715 = pneg %p122
      $region38: #{_lambda_.3} parent=35 // pred_check_branch
        %1717 = sbr.rel (%p1715) target = $region40
      $region39: #{_lambda_.3} parent=35 // pred_region
        _
      $region40: #{_lambda_.3} parent=35 // pred_fallthru
        _
    $region36: #{_lambda_.3} parent=5 // pred_fallthru
      _
    %p1718 = scmp.le.s32.totalorder 2, %s10
    // Predicated region
    $region41: #{_lambda_.3} parent=5 // pred_check
      %p1719 = pneg %p1718
    $region42: #{_lambda_.3} parent=5 // pred_check_branch
      %1721 = sbr.rel (%p1719) target = $region44
    $region43: #{_lambda_.3} parent=5 // pred_region
      %s1722 = ssub.s32 %s10, 2
      // Predicated region
      $region45: #{_lambda_.3} parent=43 // pred_check
        %p1723 = pneg %p128
      $region46: #{_lambda_.3} parent=43 // pred_check_branch
        %1725 = sbr.rel (%p1723) target = $region48
      $region47: #{_lambda_.3} parent=43 // pred_region
        %p1726 = scmp.lt.s32.totalorder %s16, 1
        %s1727 = scalar_select %p1726, %s16, 1
        %s1728 = smul.addr %s1727, 12
        %s1729 = smul.addr %s1728, 8
        %s1730 = scalar_lea.vmem %s4, %s1729
      $region48: #{_lambda_.3} parent=43 // pred_fallthru
        _
    $region44: #{_lambda_.3} parent=5 // pred_fallthru
      _
  $region6: #{_lambda_.3} parent=0 // loop_footer
    %s14 = sadd.s32 1, %s10
  $region7: #{_lambda_.3} parent=0 // loop_footer_branch
    %9 = sbr.rel target = $region3
  $region8: #{_lambda_.3} parent=0 // loop_exit
    _

</llo_original>
